<compile_context>
chip_gen: v6e
topology: v6e:2x2x1
jax: 0.10.0
libtpu: 0.0.40
codegen_flags: <defaults>
</compile_context>

<pallas_src>
import functools
import math

import jax
import jax.numpy as jnp
from jax.experimental import pallas as pl
from jax.experimental.pallas import tpu as pltpu

LANE = 128


def _round_up(n, m):
    return ((n + m - 1) // m) * m


def _pad2d(x, rows, cols):
    return jnp.pad(x, ((0, rows - x.shape[0]), (0, cols - x.shape[1])))


def _vmem_limit_bytes():
    """Generation-dependent scoped-VMEM budget (~3/4 of physical VMEM):
    ~96 MiB on v5e/v6e (128 MiB physical), ~48 MiB on v7x (64 MiB per TC)."""
    cap = 64 * 1024 * 1024
    try:
        cap = int(pltpu.get_tpu_info().vmem_capacity_bytes)
    except Exception:
        pass
    return int(min(cap * 3 // 4, 112 * 1024 * 1024))


VMEM_LIMIT = _vmem_limit_bytes()


def _divisor_tile(n, pref):
    """Largest multiple of 128 that divides n and is <= pref (n % 128 == 0)."""
    t = max(LANE, (min(pref, n) // LANE) * LANE)
    while n % t:
        t -= LANE
    return t


def _row_tile(n, pref):
    """Row tile for the aggregation grid: as large as possible, but keep >= 2
    parallel row tiles when possible so both v7x TensorCores get work."""
    t = _divisor_tile(n, pref)
    if n // t < 2 and n > LANE:
        t = _divisor_tile(n, n // 2)
    return t


# ----------------------------------------------------------------------------
# Pallas kernels
# ----------------------------------------------------------------------------

def _linear_relu_kernel(x_ref, w_ref, b_ref, o_ref):
    # out = relu(x @ W + b)          (row-tiled over nodes)
    y = jnp.dot(x_ref[...], w_ref[...], preferred_element_type=jnp.float32)
    o_ref[...] = jnp.maximum(y + b_ref[...], 0.0)


def _support_initial_kernel(x_ref, h0_ref, w1_ref, w2_ref, s_ref, init_ref, *,
                            alpha):
    # support = x + x @ W1           -> bf16 (feeds the A @ support MXU)
    # initial = alpha*h0 + h0 @ W2   -> f32 for the epilogue
    x = x_ref[...]
    h0 = h0_ref[...]
    support = x + jnp.dot(x, w1_ref[...], preferred_element_type=jnp.float32)
    initial = alpha * h0 + jnp.dot(h0, w2_ref[...],
                                   preferred_element_type=jnp.float32)
    s_ref[...] = support.astype(s_ref.dtype)
    init_ref[...] = initial


def _aggregate_kernel(a_ref, s_ref, init_ref, xres_ref, o_ref, *, bn_scale,
                      tk, resident):
    # conv = A @ support  (bf16 x bf16 -> f32), accumulated directly in the
    # (k-resident) output tile; fused epilogue
    #     relu((conv + initial) * bn_scale) + x_res
    # on the last reduction step.  When `resident`, s_ref holds the whole
    # (N, H) support in VMEM and we slice the current K tile from it.
    k = pl.program_id(1)
    if resident:
        s = s_ref[pl.ds(pl.multiple_of(k * tk, tk), tk), :]
    else:
        s = s_ref[...]
    part = jnp.dot(a_ref[...], s, preferred_element_type=jnp.float32)

    @pl.when(k == 0)
    def _():
        o_ref[...] = part

    @pl.when(k > 0)
    def _():
        o_ref[...] = o_ref[...] + part

    @pl.when(k == pl.num_programs(1) - 1)
    def _():
        out = (o_ref[...] + init_ref[...]) * bn_scale
        o_ref[...] = jnp.maximum(out, 0.0) + xres_ref[...]


def _linear_logsoftmax_kernel(x_ref, w_ref, b_ref, o_ref, *, c_valid):
    # y = x @ W + b ; log_softmax over the lane-padded class dim (padded
    # classes masked out of the softmax).
    y = jnp.dot(x_ref[...], w_ref[...], preferred_element_type=jnp.float32)
    y = y + b_ref[...]
    col = jax.lax.broadcasted_iota(jnp.int32, y.shape, 1)
    y = jnp.where(col < c_valid, y, -1e30)
    m = jnp.max(y, axis=1, keepdims=True)
    z = y - m
    lse = jnp.log(jnp.sum(jnp.exp(z), axis=1, keepdims=True))
    o_ref[...] = z - lse


def _fused_forward_kernel(x_ref, a_ref, w_in_ref, b_in_ref, w1_ref, w2_ref,
                          w_out_ref, b_out_ref, o_ref, h_ref, h0_ref, s_ref,
                          *, alpha, bn_scale, num_layers, c_valid):
    # Whole model in one kernel with A, h, h0, support resident in VMEM:
    # the N^2 A stream is read from HBM exactly once for all layers.
    h = jnp.dot(x_ref[...], w_in_ref[...], preferred_element_type=jnp.float32)
    h = jnp.maximum(h + b_in_ref[...], 0.0)
    h_ref[...] = h
    h0_ref[...] = h

    def layer(l, carry):
        h = h_ref[...]
        s_ref[...] = (h + jnp.dot(h, w1_ref[l],
                                  preferred_element_type=jnp.float32)
                      ).astype(s_ref.dtype)
        initial = alpha * h0_ref[...] + jnp.dot(
            h0_ref[...], w2_ref[l], preferred_element_type=jnp.float32)
        conv = jnp.dot(a_ref[...], s_ref[...],
                       preferred_element_type=jnp.float32)
        out = (conv + initial) * bn_scale
        h_ref[...] = jnp.maximum(out, 0.0) + h
        return carry

    if num_layers <= 4:           # small static depth: fully unrolled
        for l in range(num_layers):
            layer(l, 0)
    else:
        jax.lax.fori_loop(0, num_layers, layer, 0)

    y = jnp.dot(h_ref[...], w_out_ref[...], preferred_element_type=jnp.float32)
    y = y + b_out_ref[...]
    col = jax.lax.broadcasted_iota(jnp.int32, y.shape, 1)
    y = jnp.where(col < c_valid, y, -1e30)
    m = jnp.max(y, axis=1, keepdims=True)
    z = y - m
    lse = jnp.log(jnp.sum(jnp.exp(z), axis=1, keepdims=True))
    o_ref[...] = z - lse


# ----------------------------------------------------------------------------
# pallas_call wrappers
# ----------------------------------------------------------------------------

def linear_relu(x, w, b, *, tm_pref=512):
    n, cin = x.shape
    h = w.shape[1]
    tm = _divisor_tile(n, tm_pref)
    return pl.pallas_call(
        _linear_relu_kernel,
        out_shape=jax.ShapeDtypeStruct((n, h), jnp.float32),
        grid=(n // tm,),
        in_specs=[pl.BlockSpec((tm, cin), lambda i: (i, 0)),
                  pl.BlockSpec((cin, h), lambda i: (0, 0)),
                  pl.BlockSpec((1, h), lambda i: (0, 0))],
        out_specs=pl.BlockSpec((tm, h), lambda i: (i, 0)),
        compiler_params=pltpu.CompilerParams(
            dimension_semantics=("parallel",),
            vmem_limit_bytes=VMEM_LIMIT),
    )(x, w, b)


def support_initial(x, h0, w1, w2, *, alpha, tm_pref=512):
    n, h = x.shape
    tm = _divisor_tile(n, tm_pref)
    kernel = functools.partial(_support_initial_kernel, alpha=alpha)
    return pl.pallas_call(
        kernel,
        out_shape=(jax.ShapeDtypeStruct((n, h), jnp.bfloat16),   # support
                   jax.ShapeDtypeStruct((n, h), jnp.float32)),   # initial
        grid=(n // tm,),
        in_specs=[pl.BlockSpec((tm, h), lambda i: (i, 0)),
                  pl.BlockSpec((tm, h), lambda i: (i, 0)),
                  pl.BlockSpec((h, h), lambda i: (0, 0)),
                  pl.BlockSpec((h, h), lambda i: (0, 0))],
        out_specs=(pl.BlockSpec((tm, h), lambda i: (i, 0)),
                   pl.BlockSpec((tm, h), lambda i: (i, 0))),
        compiler_params=pltpu.CompilerParams(
            dimension_semantics=("parallel",),
            vmem_limit_bytes=VMEM_LIMIT),
    )(x, h0, w1, w2)


def aggregate_bn_relu_residual(a, support, initial, x_res, *, bn_scale,
                               tm_pref=512, tk_pref=512):
    n, h = initial.shape
    tm = _row_tile(n, tm_pref)
    tk = _divisor_tile(n, tk_pref)

    # Keep the whole (N, H) bf16 support VMEM-resident (fetched once) when it
    # fits the per-generation budget; otherwise stream it per K tile.
    budget = int(VMEM_LIMIT * 0.7)
    fixed = 2 * (tm * tk * 2)            # A tile, double-buffered bf16
    fixed += 2 * 2 * (tm * h * 4)        # initial + x_res tiles (f32)
    fixed += 2 * (tm * h * 4)            # output tile (f32)
    resident = fixed + 2 * (n * h * 2) <= budget
    if resident:
        s_spec = pl.BlockSpec((n, h), lambda i, k: (0, 0))
    else:
        s_spec = pl.BlockSpec((tk, h), lambda i, k: (k, 0))

    kernel = functools.partial(_aggregate_kernel, bn_scale=bn_scale, tk=tk,
                               resident=resident)
    return pl.pallas_call(
        kernel,
        out_shape=jax.ShapeDtypeStruct((n, h), jnp.float32),
        grid=(n // tm, n // tk),
        in_specs=[pl.BlockSpec((tm, tk), lambda i, k: (i, k)),   # A tile
                  s_spec,                                        # support
                  pl.BlockSpec((tm, h), lambda i, k: (i, 0)),    # initial
                  pl.BlockSpec((tm, h), lambda i, k: (i, 0))],   # residual x
        out_specs=pl.BlockSpec((tm, h), lambda i, k: (i, 0)),
        compiler_params=pltpu.CompilerParams(
            dimension_semantics=("parallel", "arbitrary"),
            vmem_limit_bytes=VMEM_LIMIT),
    )(a, support, initial, x_res)


def linear_logsoftmax(x, w, b, *, c_valid, tm_pref=512):
    n, h = x.shape
    c_p = w.shape[1]
    tm = _divisor_tile(n, tm_pref)
    kernel = functools.partial(_linear_logsoftmax_kernel, c_valid=c_valid)
    return pl.pallas_call(
        kernel,
        out_shape=jax.ShapeDtypeStruct((n, c_p), jnp.float32),
        grid=(n // tm,),
        in_specs=[pl.BlockSpec((tm, h), lambda i: (i, 0)),
                  pl.BlockSpec((h, c_p), lambda i: (0, 0)),
                  pl.BlockSpec((1, c_p), lambda i: (0, 0))],
        out_specs=pl.BlockSpec((tm, c_p), lambda i: (i, 0)),
        compiler_params=pltpu.CompilerParams(
            dimension_semantics=("parallel",),
            vmem_limit_bytes=VMEM_LIMIT),
    )(x, w, b)


def fused_forward(x_p, a_p, params_p, *, alpha, bn_scale, out_channels):
    n, cin = x_p.shape
    h = params_p["w_in"].shape[1]
    cout = params_p["w_out"].shape[1]
    num_layers = len(params_p["layers"])
    w1 = jnp.stack([l["w1"] for l in params_p["layers"]])   # (L, H, H)
    w2 = jnp.stack([l["w2"] for l in params_p["layers"]])
    kernel = functools.partial(_fused_forward_kernel, alpha=alpha,
                               bn_scale=bn_scale, num_layers=num_layers,
                               c_valid=out_channels)
    return pl.pallas_call(
        kernel,
        out_shape=jax.ShapeDtypeStruct((n, cout), jnp.float32),
        grid=(1,),
        in_specs=[pl.BlockSpec((n, cin), lambda i: (0, 0)),
                  pl.BlockSpec((n, n), lambda i: (0, 0)),
                  pl.BlockSpec((cin, h), lambda i: (0, 0)),
                  pl.BlockSpec((1, h), lambda i: (0, 0)),
                  pl.BlockSpec((num_layers, h, h), lambda i: (0, 0, 0)),
                  pl.BlockSpec((num_layers, h, h), lambda i: (0, 0, 0)),
                  pl.BlockSpec((h, cout), lambda i: (0, 0)),
                  pl.BlockSpec((1, cout), lambda i: (0, 0))],
        out_specs=pl.BlockSpec((n, cout), lambda i: (0, 0)),
        scratch_shapes=[pltpu.VMEM((n, h), jnp.float32),    # h
                        pltpu.VMEM((n, h), jnp.float32),    # h0
                        pltpu.VMEM((n, h), jnp.bfloat16)],  # support
        compiler_params=pltpu.CompilerParams(
            dimension_semantics=("arbitrary",),
            vmem_limit_bytes=VMEM_LIMIT),
    )(x_p, a_p, params_p["w_in"], params_p["b_in"], w1, w2,
      params_p["w_out"], params_p["b_out"])


def _fused_fits(n, cin, h, cout, num_layers):
    need = (n * n * 2                       # A (bf16)
            + n * cin * 4                   # x
            + n * h * (4 + 4 + 2)           # h, h0, support scratch
            + n * cout * 4                  # output
            + 2 * num_layers * h * h * 4    # stacked W1/W2
            + cin * h * 4 + h * cout * 4 + 2 * h * 4)
    return 2 * need <= int(VMEM_LIMIT * 0.8)


# ----------------------------------------------------------------------------
# Glue: gcn_norm -> dense normalized adjacency, parameters, full forward
# ----------------------------------------------------------------------------

def gcn_norm_dense(edge_index, num_nodes, dtype=jnp.float32):
    """Mirror of gcn_norm (edge_index path, add_self_loops=True,
    improved=False), materialized dense with A[col, row] = norm weight so
    that propagate(aggr='add') == A @ x."""
    row, col = edge_index[0], edge_index[1]
    ew = jnp.ones((row.shape[0],), dtype=dtype)

    loop = jnp.arange(num_nodes, dtype=row.dtype)        # add self loops
    row = jnp.concatenate([row, loop])
    col = jnp.concatenate([col, loop])
    ew = jnp.concatenate([ew, jnp.ones((num_nodes,), dtype=dtype)])

    deg = jnp.zeros((num_nodes,), dtype=dtype).at[col].add(ew)
    deg_inv_sqrt = jnp.where(deg > 0, 1.0 / jnp.sqrt(deg), 0.0)
    norm = deg_inv_sqrt[row] * ew * deg_inv_sqrt[col]

    a = jnp.zeros((num_nodes, num_nodes), dtype=dtype)
    a = a.at[col, row].add(norm)
    return a


def glorot(key, shape):
    limit = jnp.sqrt(6.0 / (shape[0] + shape[1]))
    return jax.random.uniform(key, shape, jnp.float32, -limit, limit)


def init_params(key, in_channels, hidden, out_channels, num_layers):
    keys = jax.random.split(key, 4 + 2 * num_layers)
    params = {
        "w_in": glorot(keys[0], (in_channels, hidden)),
        "b_in": jax.random.uniform(keys[1], (1, hidden), jnp.float32, -0.1, 0.1),
        "w_out": glorot(keys[2], (hidden, out_channels)),
        "b_out": jax.random.uniform(keys[3], (1, out_channels), jnp.float32,
                                    -0.1, 0.1),
        "layers": [],
    }
    for i in range(num_layers):
        params["layers"].append({
            "w1": glorot(keys[4 + 2 * i], (hidden, hidden)),
            "w2": glorot(keys[5 + 2 * i], (hidden, hidden)),
        })
    return params


def pad_params(params, cin_p, h_p, cout_p):
    return {
        "w_in": _pad2d(params["w_in"], cin_p, h_p),
        "b_in": _pad2d(params["b_in"], 1, h_p),
        "w_out": _pad2d(params["w_out"], h_p, cout_p),
        "b_out": _pad2d(params["b_out"], 1, cout_p),
        "layers": [{"w1": _pad2d(l["w1"], h_p, h_p),
                    "w2": _pad2d(l["w2"], h_p, h_p)} for l in params["layers"]],
    }


def gcnii_forward(params_p, x_p, a_p, *, alpha, num_nodes, out_channels,
                  bn_eps=1e-5, force_layered=False):
    """Inference forward on padded inputs; slices back to logical shape."""
    bn_scale = 1.0 / math.sqrt(1.0 + bn_eps)   # BN eval, default running stats
    n, cin = x_p.shape
    h_dim = params_p["w_in"].shape[1]
    cout = params_p["w_out"].shape[1]
    num_layers = len(params_p["layers"])

    if (not force_layered and num_layers > 0
            and _fused_fits(n, cin, h_dim, cout, num_layers)):
        # Whole-model fused kernel: A read from HBM once for all layers.
        y = fused_forward(x_p, a_p, params_p, alpha=alpha, bn_scale=bn_scale,
                          out_channels=out_channels)
    else:
        # Scalable per-layer path (large graphs).
        h = linear_relu(x_p, params_p["w_in"], params_p["b_in"])
        h0 = h
        # TODO(synk): for graphs too large for the fused kernel, further wins
        # are a leading layer grid axis over stacked (L,H,H) weights so A
        # stays resident across layers, and sparse (TM,TK) tile skipping via
        # PrefetchScalarGridSpec block metadata for very sparse adjacencies.
        for layer in params_p["layers"]:
            support, initial = support_initial(h, h0, layer["w1"],
                                               layer["w2"], alpha=alpha)
            h = aggregate_bn_relu_residual(a_p, support, initial, h,
                                           bn_scale=bn_scale)
        y = linear_logsoftmax(h, params_p["w_out"], params_p["b_out"],
                              c_valid=out_channels)
    return y[:num_nodes, :out_channels]


# ----------------------------------------------------------------------------
# Pure-JAX references
# ----------------------------------------------------------------------------

def reference_forward_f32(params_p, x_p, a_f32, *, alpha, num_nodes,
                          out_channels, bn_eps=1e-5):
    """Full-precision reference (f32 everywhere, HIGHEST matmul precision)."""
    mm = functools.partial(jnp.dot, precision=jax.lax.Precision.HIGHEST)
    bn_scale = 1.0 / math.sqrt(1.0 + bn_eps)
    h = jnp.maximum(mm(x_p, params_p["w_in"]) + params_p["b_in"], 0.0)
    h0 = h
    for layer in params_p["layers"]:
        support = h + mm(h, layer["w1"])
        initial = alpha * h0 + mm(h0, layer["w2"])
        out = (mm(a_f32, support) + initial) * bn_scale
        h = jnp.maximum(out, 0.0) + h
    y = (mm(h, params_p["w_out"]) + params_p["b_out"])
    y = y[:num_nodes, :out_channels]
    return jax.nn.log_softmax(y, axis=1)


def reference_forward_bf16(params_p, x_p, a_bf16, *, alpha, num_nodes,
                           out_channels, bn_eps=1e-5):
    """Reference with the same bf16 rounding of A / support as the kernels."""
    bn_scale = 1.0 / math.sqrt(1.0 + bn_eps)
    a = a_bf16.astype(jnp.float32)
    h = jnp.maximum(x_p @ params_p["w_in"] + params_p["b_in"], 0.0)
    h0 = h
    for layer in params_p["layers"]:
        support = (h + h @ layer["w1"]).astype(jnp.bfloat16).astype(jnp.float32)
        initial = alpha * h0 + h0 @ layer["w2"]
        out = (a @ support + initial) * bn_scale
        h = jnp.maximum(out, 0.0) + h
    y = (h @ params_p["w_out"] + params_p["b_out"])[:num_nodes, :out_channels]
    return jax.nn.log_softmax(y, axis=1)


# TODO(synk): training-mode dropout / batch-statistics BatchNorm are
# stochastic and batch-dependent; inference equivalents are used instead.


if __name__ == "__main__":
    key = jax.random.PRNGKey(0)
    k_feat, k_edge, k_param = jax.random.split(key, 3)

    num_nodes = 200
    in_channels = 64
    hidden_channels = 64
    out_channels = 16
    num_layers = 2
    alpha = 0.1

    n_p = _round_up(num_nodes, LANE)
    cin_p = _round_up(in_channels, LANE)
    h_p = _round_up(hidden_channels, LANE)
    cout_p = _round_up(out_channels, LANE)

    # Node features
    x = jax.random.normal(k_feat, (num_nodes, in_channels), jnp.float32)

    # Deterministic edge_index: ring graph (both directions) + extra edges
    src_ring = jnp.arange(num_nodes, dtype=jnp.int32)
    dst_ring = (src_ring + 1) % num_nodes
    extra_src = jax.random.randint(k_edge, (32,), 0, num_nodes, jnp.int32)
    extra_dst = (extra_src * 7 + 3) % num_nodes
    row = jnp.concatenate([src_ring, dst_ring, extra_src])
    col = jnp.concatenate([dst_ring, src_ring, extra_dst])
    edge_index = jnp.stack([row, col])

    a_f32 = gcn_norm_dense(edge_index, num_nodes)             # (N, N) f32
    a_f32_p = _pad2d(a_f32, n_p, n_p)
    a_bf16_p = a_f32_p.astype(jnp.bfloat16)                   # padded, bf16
    x_p = _pad2d(x, n_p, cin_p)

    params = init_params(k_param, in_channels, hidden_channels, out_channels,
                         num_layers)
    params_p = pad_params(params, cin_p, h_p, cout_p)

    # Fused whole-model kernel (graph fits VMEM at these shapes).
    out_fused = gcnii_forward(params_p, x_p, a_bf16_p, alpha=alpha,
                              num_nodes=num_nodes, out_channels=out_channels)
    # Scalable per-layer path (exercised explicitly for coverage).
    out_layered = gcnii_forward(params_p, x_p, a_bf16_p, alpha=alpha,
                                num_nodes=num_nodes, out_channels=out_channels,
                                force_layered=True)
    out_fused, out_layered = jax.block_until_ready((out_fused, out_layered))

    ref_bf16 = reference_forward_bf16(params_p, x_p, a_bf16_p, alpha=alpha,
                                      num_nodes=num_nodes,
                                      out_channels=out_channels)
    ref_f32 = reference_forward_f32(params_p, x_p, _pad2d(a_f32, n_p, n_p),
                                    alpha=alpha, num_nodes=num_nodes,
                                    out_channels=out_channels)

    assert out_fused.shape == (num_nodes, out_channels)
    assert bool(jnp.all(jnp.isfinite(out_fused)))
    assert bool(jnp.all(jnp.isfinite(out_layered)))
    # rows of log_softmax must exp-sum to 1
    assert bool(jnp.allclose(jnp.sum(jnp.exp(out_fused), axis=1), 1.0,
                             atol=1e-3))
    # the two kernel paths agree with each other
    assert float(jnp.max(jnp.abs(out_fused - out_layered))) < 1e-2
    # match the bf16-rounded jnp reference (same rounding points)
    assert float(jnp.max(jnp.abs(out_fused - ref_bf16))) < 5e-2
    assert float(jnp.max(jnp.abs(out_layered - ref_bf16))) < 5e-2
    # and stay close to the full-f32 reference (bf16 A/support rounding only)
    assert float(jnp.max(jnp.abs(out_fused - ref_f32))) < 1.5e-1
    print("KERNEL_OK")
</pallas_src>

<mosaic_0001>
module attributes {stable_mosaic.version = 11 : i64} {
  func.func @_fused_forward_kernel(%arg0: i32, %arg1: memref<256x128xf32, #tpu.memory_space<vmem>>, %arg2: memref<256x256xbf16, #tpu.memory_space<vmem>>, %arg3: memref<128x128xf32, #tpu.memory_space<vmem>>, %arg4: memref<1x128xf32, #tpu.memory_space<vmem>>, %arg5: memref<2x128x128xf32, #tpu.memory_space<vmem>>, %arg6: memref<2x128x128xf32, #tpu.memory_space<vmem>>, %arg7: memref<128x128xf32, #tpu.memory_space<vmem>>, %arg8: memref<1x128xf32, #tpu.memory_space<vmem>>, %arg9: memref<256x128xf32, #tpu.memory_space<vmem>>, %arg10: memref<256x128xf32, #tpu.memory_space<vmem>>, %arg11: memref<256x128xf32, #tpu.memory_space<vmem>>, %arg12: memref<256x128xbf16, #tpu.memory_space<vmem>>) attributes {dimension_semantics = [#tpu.dimension_semantics<arbitrary>], iteration_bounds = array<i64: 1>, scalar_prefetch = 0 : i64, scratch_operands = 3 : i64, tpu.core_type = #tpu.core_type<tc>, window_params = [{pipeline_mode = #tpu.pipeline_mode<synchronous>, transform_indices = @transform_0, window_bounds = array<i64: 256, 128>}, {pipeline_mode = #tpu.pipeline_mode<synchronous>, transform_indices = @transform_1, window_bounds = array<i64: 256, 256>}, {pipeline_mode = #tpu.pipeline_mode<synchronous>, transform_indices = @transform_2, window_bounds = array<i64: 128, 128>}, {pipeline_mode = #tpu.pipeline_mode<synchronous>, transform_indices = @transform_3, window_bounds = array<i64: 1, 128>}, {pipeline_mode = #tpu.pipeline_mode<synchronous>, transform_indices = @transform_4, window_bounds = array<i64: 2, 128, 128>}, {pipeline_mode = #tpu.pipeline_mode<synchronous>, transform_indices = @transform_5, window_bounds = array<i64: 2, 128, 128>}, {pipeline_mode = #tpu.pipeline_mode<synchronous>, transform_indices = @transform_6, window_bounds = array<i64: 128, 128>}, {pipeline_mode = #tpu.pipeline_mode<synchronous>, transform_indices = @transform_7, window_bounds = array<i64: 1, 128>}, {pipeline_mode = #tpu.pipeline_mode<synchronous>, transform_indices = @transform_8, window_bounds = array<i64: 256, 128>}]} {
    %c0 = arith.constant 0 : index
    %c0_0 = arith.constant 0 : index
    %0 = vector.load %arg1[%c0, %c0_0] : memref<256x128xf32, #tpu.memory_space<vmem>>, vector<256x128xf32>
    %c0_1 = arith.constant 0 : index
    %c0_2 = arith.constant 0 : index
    %1 = vector.load %arg3[%c0_1, %c0_2] : memref<128x128xf32, #tpu.memory_space<vmem>>, vector<128x128xf32>
    %cst = arith.constant dense<0.000000e+00> : vector<256x128xf32>
    %2 = tpu.matmul %0, %1, %cst {dimension_numbers = #tpu.dot_dimension_numbers<[1], [0], [0], [1], [0, 0, 1, 1], [], []>} : vector<256x128xf32>, vector<128x128xf32>, vector<256x128xf32> -> vector<256x128xf32>
    %c0_3 = arith.constant 0 : index
    %c0_4 = arith.constant 0 : index
    %3 = vector.load %arg4[%c0_3, %c0_4] : memref<1x128xf32, #tpu.memory_space<vmem>>, vector<1x128xf32>
    %4 = vector.broadcast %3 : vector<1x128xf32> to vector<256x128xf32>
    %5 = arith.addf %2, %4 : vector<256x128xf32>
    %cst_5 = arith.constant 0.000000e+00 : f32
    %6 = vector.broadcast %cst_5 : f32 to vector<256x128xf32>
    %7 = arith.maximumf %5, %6 : vector<256x128xf32>
    %c0_6 = arith.constant 0 : index
    %c0_7 = arith.constant 0 : index
    %8 = vector.load %arg10[%c0_6, %c0_7] : memref<256x128xf32, #tpu.memory_space<vmem>>, vector<256x128xf32>
    tpu.vector_store %arg10[%c0_6, %c0_7], %7 {strides = array<i32>} : memref<256x128xf32, #tpu.memory_space<vmem>>, vector<256x128xf32>,
    %c0_8 = arith.constant 0 : index
    %c0_9 = arith.constant 0 : index
    %9 = vector.load %arg11[%c0_8, %c0_9] : memref<256x128xf32, #tpu.memory_space<vmem>>, vector<256x128xf32>
    tpu.vector_store %arg11[%c0_8, %c0_9], %7 {strides = array<i32>} : memref<256x128xf32, #tpu.memory_space<vmem>>, vector<256x128xf32>,
    %c0_10 = arith.constant 0 : index
    %c0_11 = arith.constant 0 : index
    %10 = vector.load %arg10[%c0_10, %c0_11] : memref<256x128xf32, #tpu.memory_space<vmem>>, vector<256x128xf32>
    %c0_12 = arith.constant 0 : index
    %c0_13 = arith.constant 0 : index
    %c0_14 = arith.constant 0 : index
    %11 = vector.load %arg5[%c0_12, %c0_13, %c0_14] : memref<2x128x128xf32, #tpu.memory_space<vmem>>, vector<1x128x128xf32>
    %12 = vector.shape_cast %11 : vector<1x128x128xf32> to vector<128x128xf32>
    %cst_15 = arith.constant dense<0.000000e+00> : vector<256x128xf32>
    %13 = tpu.matmul %10, %12, %cst_15 {dimension_numbers = #tpu.dot_dimension_numbers<[1], [0], [0], [1], [0, 0, 1, 1], [], []>} : vector<256x128xf32>, vector<128x128xf32>, vector<256x128xf32> -> vector<256x128xf32>
    %14 = arith.addf %10, %13 : vector<256x128xf32>
    %15 = arith.truncf %14 : vector<256x128xf32> to vector<256x128xbf16>
    %c0_16 = arith.constant 0 : index
    %c0_17 = arith.constant 0 : index
    %16 = vector.load %arg12[%c0_16, %c0_17] : memref<256x128xbf16, #tpu.memory_space<vmem>>, vector<256x128xbf16>
    tpu.vector_store %arg12[%c0_16, %c0_17], %15 {strides = array<i32>} : memref<256x128xbf16, #tpu.memory_space<vmem>>, vector<256x128xbf16>,
    %c0_18 = arith.constant 0 : index
    %c0_19 = arith.constant 0 : index
    %17 = vector.load %arg11[%c0_18, %c0_19] : memref<256x128xf32, #tpu.memory_space<vmem>>, vector<256x128xf32>
    %cst_20 = arith.constant 1.000000e-01 : f32
    %18 = vector.broadcast %cst_20 : f32 to vector<256x128xf32>
    %19 = arith.mulf %18, %17 : vector<256x128xf32>
    %c0_21 = arith.constant 0 : index
    %c0_22 = arith.constant 0 : index
    %20 = vector.load %arg11[%c0_21, %c0_22] : memref<256x128xf32, #tpu.memory_space<vmem>>, vector<256x128xf32>
    %c0_23 = arith.constant 0 : index
    %c0_24 = arith.constant 0 : index
    %c0_25 = arith.constant 0 : index
    %21 = vector.load %arg6[%c0_23, %c0_24, %c0_25] : memref<2x128x128xf32, #tpu.memory_space<vmem>>, vector<1x128x128xf32>
    %22 = vector.shape_cast %21 : vector<1x128x128xf32> to vector<128x128xf32>
    %cst_26 = arith.constant dense<0.000000e+00> : vector<256x128xf32>
    %23 = tpu.matmul %20, %22, %cst_26 {dimension_numbers = #tpu.dot_dimension_numbers<[1], [0], [0], [1], [0, 0, 1, 1], [], []>} : vector<256x128xf32>, vector<128x128xf32>, vector<256x128xf32> -> vector<256x128xf32>
    %24 = arith.addf %19, %23 : vector<256x128xf32>
    %c0_27 = arith.constant 0 : index
    %c0_28 = arith.constant 0 : index
    %25 = vector.load %arg2[%c0_27, %c0_28] : memref<256x256xbf16, #tpu.memory_space<vmem>>, vector<256x256xbf16>
    %c0_29 = arith.constant 0 : index
    %c0_30 = arith.constant 0 : index
    %26 = vector.load %arg12[%c0_29, %c0_30] : memref<256x128xbf16, #tpu.memory_space<vmem>>, vector<256x128xbf16>
    %cst_31 = arith.constant dense<0.000000e+00> : vector<256x128xf32>
    %27 = tpu.matmul %25, %26, %cst_31 {dimension_numbers = #tpu.dot_dimension_numbers<[1], [0], [0], [1], [0, 0, 1, 1], [], []>} : vector<256x256xbf16>, vector<256x128xbf16>, vector<256x128xf32> -> vector<256x128xf32>
    %28 = arith.addf %27, %24 : vector<256x128xf32>
    %cst_32 = arith.constant 0.999994993 : f32
    %29 = vector.broadcast %cst_32 : f32 to vector<256x128xf32>
    %30 = arith.mulf %28, %29 : vector<256x128xf32>
    %cst_33 = arith.constant 0.000000e+00 : f32
    %31 = vector.broadcast %cst_33 : f32 to vector<256x128xf32>
    %32 = arith.maximumf %30, %31 : vector<256x128xf32>
    %33 = arith.addf %32, %10 : vector<256x128xf32>
    %c0_34 = arith.constant 0 : index
    %c0_35 = arith.constant 0 : index
    %34 = vector.load %arg10[%c0_34, %c0_35] : memref<256x128xf32, #tpu.memory_space<vmem>>, vector<256x128xf32>
    tpu.vector_store %arg10[%c0_34, %c0_35], %33 {strides = array<i32>} : memref<256x128xf32, #tpu.memory_space<vmem>>, vector<256x128xf32>,
    %c0_36 = arith.constant 0 : index
    %c0_37 = arith.constant 0 : index
    %35 = vector.load %arg10[%c0_36, %c0_37] : memref<256x128xf32, #tpu.memory_space<vmem>>, vector<256x128xf32>
    %c1 = arith.constant 1 : index
    %c0_38 = arith.constant 0 : index
    %c0_39 = arith.constant 0 : index
    %36 = vector.load %arg5[%c1, %c0_38, %c0_39] : memref<2x128x128xf32, #tpu.memory_space<vmem>>, vector<1x128x128xf32>
    %37 = vector.shape_cast %36 : vector<1x128x128xf32> to vector<128x128xf32>
    %cst_40 = arith.constant dense<0.000000e+00> : vector<256x128xf32>
    %38 = tpu.matmul %35, %37, %cst_40 {dimension_numbers = #tpu.dot_dimension_numbers<[1], [0], [0], [1], [0, 0, 1, 1], [], []>} : vector<256x128xf32>, vector<128x128xf32>, vector<256x128xf32> -> vector<256x128xf32>
    %39 = arith.addf %35, %38 : vector<256x128xf32>
    %40 = arith.truncf %39 : vector<256x128xf32> to vector<256x128xbf16>
    %c0_41 = arith.constant 0 : index
    %c0_42 = arith.constant 0 : index
    %41 = vector.load %arg12[%c0_41, %c0_42] : memref<256x128xbf16, #tpu.memory_space<vmem>>, vector<256x128xbf16>
    tpu.vector_store %arg12[%c0_41, %c0_42], %40 {strides = array<i32>} : memref<256x128xbf16, #tpu.memory_space<vmem>>, vector<256x128xbf16>,
    %c0_43 = arith.constant 0 : index
    %c0_44 = arith.constant 0 : index
    %42 = vector.load %arg11[%c0_43, %c0_44] : memref<256x128xf32, #tpu.memory_space<vmem>>, vector<256x128xf32>
    %cst_45 = arith.constant 1.000000e-01 : f32
    %43 = vector.broadcast %cst_45 : f32 to vector<256x128xf32>
    %44 = arith.mulf %43, %42 : vector<256x128xf32>
    %c0_46 = arith.constant 0 : index
    %c0_47 = arith.constant 0 : index
    %45 = vector.load %arg11[%c0_46, %c0_47] : memref<256x128xf32, #tpu.memory_space<vmem>>, vector<256x128xf32>
    %c1_48 = arith.constant 1 : index
    %c0_49 = arith.constant 0 : index
    %c0_50 = arith.constant 0 : index
    %46 = vector.load %arg6[%c1_48, %c0_49, %c0_50] : memref<2x128x128xf32, #tpu.memory_space<vmem>>, vector<1x128x128xf32>
    %47 = vector.shape_cast %46 : vector<1x128x128xf32> to vector<128x128xf32>
    %cst_51 = arith.constant dense<0.000000e+00> : vector<256x128xf32>
    %48 = tpu.matmul %45, %47, %cst_51 {dimension_numbers = #tpu.dot_dimension_numbers<[1], [0], [0], [1], [0, 0, 1, 1], [], []>} : vector<256x128xf32>, vector<128x128xf32>, vector<256x128xf32> -> vector<256x128xf32>
    %49 = arith.addf %44, %48 : vector<256x128xf32>
    %c0_52 = arith.constant 0 : index
    %c0_53 = arith.constant 0 : index
    %50 = vector.load %arg2[%c0_52, %c0_53] : memref<256x256xbf16, #tpu.memory_space<vmem>>, vector<256x256xbf16>
    %c0_54 = arith.constant 0 : index
    %c0_55 = arith.constant 0 : index
    %51 = vector.load %arg12[%c0_54, %c0_55] : memref<256x128xbf16, #tpu.memory_space<vmem>>, vector<256x128xbf16>
    %cst_56 = arith.constant dense<0.000000e+00> : vector<256x128xf32>
    %52 = tpu.matmul %50, %51, %cst_56 {dimension_numbers = #tpu.dot_dimension_numbers<[1], [0], [0], [1], [0, 0, 1, 1], [], []>} : vector<256x256xbf16>, vector<256x128xbf16>, vector<256x128xf32> -> vector<256x128xf32>
    %53 = arith.addf %52, %49 : vector<256x128xf32>
    %cst_57 = arith.constant 0.999994993 : f32
    %54 = vector.broadcast %cst_57 : f32 to vector<256x128xf32>
    %55 = arith.mulf %53, %54 : vector<256x128xf32>
    %cst_58 = arith.constant 0.000000e+00 : f32
    %56 = vector.broadcast %cst_58 : f32 to vector<256x128xf32>
    %57 = arith.maximumf %55, %56 : vector<256x128xf32>
    %58 = arith.addf %57, %35 : vector<256x128xf32>
    %c0_59 = arith.constant 0 : index
    %c0_60 = arith.constant 0 : index
    %59 = vector.load %arg10[%c0_59, %c0_60] : memref<256x128xf32, #tpu.memory_space<vmem>>, vector<256x128xf32>
    tpu.vector_store %arg10[%c0_59, %c0_60], %58 {strides = array<i32>} : memref<256x128xf32, #tpu.memory_space<vmem>>, vector<256x128xf32>,
    %c0_61 = arith.constant 0 : index
    %c0_62 = arith.constant 0 : index
    %60 = vector.load %arg10[%c0_61, %c0_62] : memref<256x128xf32, #tpu.memory_space<vmem>>, vector<256x128xf32>
    %c0_63 = arith.constant 0 : index
    %c0_64 = arith.constant 0 : index
    %61 = vector.load %arg7[%c0_63, %c0_64] : memref<128x128xf32, #tpu.memory_space<vmem>>, vector<128x128xf32>
    %cst_65 = arith.constant dense<0.000000e+00> : vector<256x128xf32>
    %62 = tpu.matmul %60, %61, %cst_65 {dimension_numbers = #tpu.dot_dimension_numbers<[1], [0], [0], [1], [0, 0, 1, 1], [], []>} : vector<256x128xf32>, vector<128x128xf32>, vector<256x128xf32> -> vector<256x128xf32>
    %c0_66 = arith.constant 0 : index
    %c0_67 = arith.constant 0 : index
    %63 = vector.load %arg8[%c0_66, %c0_67] : memref<1x128xf32, #tpu.memory_space<vmem>>, vector<1x128xf32>
    %64 = vector.broadcast %63 : vector<1x128xf32> to vector<256x128xf32>
    %65 = arith.addf %62, %64 : vector<256x128xf32>
    %66 = tpu.iota {dimensions = array<i32: 1>} : vector<256x128xi32>
    %c16_i32 = arith.constant 16 : i32
    %67 = vector.broadcast %c16_i32 : i32 to vector<256x128xi32>
    %68 = arith.cmpi slt, %66, %67 : vector<256x128xi32>
    %cst_68 = arith.constant -1.000000e+30 : f32
    %69 = vector.broadcast %cst_68 : f32 to vector<256x128xf32>
    %70 = arith.select %68, %65, %69 : vector<256x128xi1>, vector<256x128xf32>
    %cst_69 = arith.constant dense<0xFF800000> : vector<256xf32>
    %71 = vector.multi_reduction <maximumf>, %70, %cst_69 [1] : vector<256x128xf32> to vector<256xf32>
    %72 = vector.shape_cast %71 : vector<256xf32> to vector<256x1xf32>
    %73 = vector.broadcast %72 : vector<256x1xf32> to vector<256x128xf32>
    %74 = arith.subf %70, %73 : vector<256x128xf32>
    %75 = math.exp %74 : vector<256x128xf32>
    %cst_70 = arith.constant dense<0.000000e+00> : vector<256xf32>
    %76 = vector.multi_reduction <add>, %75, %cst_70 [1] : vector<256x128xf32> to vector<256xf32>
    %77 = vector.shape_cast %76 : vector<256xf32> to vector<256x1xf32>
    %78 = math.log %77 : vector<256x1xf32>
    %79 = vector.broadcast %78 : vector<256x1xf32> to vector<256x128xf32>
    %80 = arith.subf %74, %79 : vector<256x128xf32>
    %c0_71 = arith.constant 0 : index
    %c0_72 = arith.constant 0 : index
    %81 = vector.load %arg9[%c0_71, %c0_72] : memref<256x128xf32, #tpu.memory_space<vmem>>, vector<256x128xf32>
    tpu.vector_store %arg9[%c0_71, %c0_72], %80 {strides = array<i32>} : memref<256x128xf32, #tpu.memory_space<vmem>>, vector<256x128xf32>,
    return
  }
  func.func @transform_0(%arg0: i32) -> (i32, i32) {
    %c0_i32 = arith.constant 0 : i32
    %c0_i32_0 = arith.constant 0 : i32
    %c0_i32_1 = arith.constant 0 : i32
    return %c0_i32, %c0_i32_0 : i32, i32
  }
  func.func @transform_1(%arg0: i32) -> (i32, i32) {
    %c0_i32 = arith.constant 0 : i32
    %c0_i32_0 = arith.constant 0 : i32
    %c0_i32_1 = arith.constant 0 : i32
    return %c0_i32, %c0_i32_0 : i32, i32
  }
  func.func @transform_2(%arg0: i32) -> (i32, i32) {
    %c0_i32 = arith.constant 0 : i32
    %c0_i32_0 = arith.constant 0 : i32
    %c0_i32_1 = arith.constant 0 : i32
    return %c0_i32, %c0_i32_0 : i32, i32
  }
  func.func @transform_3(%arg0: i32) -> (i32, i32) {
    %c0_i32 = arith.constant 0 : i32
    %c0_i32_0 = arith.constant 0 : i32
    %c0_i32_1 = arith.constant 0 : i32
    return %c0_i32, %c0_i32_0 : i32, i32
  }
  func.func @transform_4(%arg0: i32) -> (i32, i32, i32) {
    %c0_i32 = arith.constant 0 : i32
    %c0_i32_0 = arith.constant 0 : i32
    %c0_i32_1 = arith.constant 0 : i32
    %c0_i32_2 = arith.constant 0 : i32
    return %c0_i32, %c0_i32_0, %c0_i32_1 : i32, i32, i32
  }
  func.func @transform_5(%arg0: i32) -> (i32, i32, i32) {
    %c0_i32 = arith.constant 0 : i32
    %c0_i32_0 = arith.constant 0 : i32
    %c0_i32_1 = arith.constant 0 : i32
    %c0_i32_2 = arith.constant 0 : i32
    return %c0_i32, %c0_i32_0, %c0_i32_1 : i32, i32, i32
  }
  func.func @transform_6(%arg0: i32) -> (i32, i32) {
    %c0_i32 = arith.constant 0 : i32
    %c0_i32_0 = arith.constant 0 : i32
    %c0_i32_1 = arith.constant 0 : i32
    return %c0_i32, %c0_i32_0 : i32, i32
  }
  func.func @transform_7(%arg0: i32) -> (i32, i32) {
    %c0_i32 = arith.constant 0 : i32
    %c0_i32_0 = arith.constant 0 : i32
    %c0_i32_1 = arith.constant 0 : i32
    return %c0_i32, %c0_i32_0 : i32, i32
  }
  func.func @transform_8(%arg0: i32) -> (i32, i32) {
    %c0_i32 = arith.constant 0 : i32
    %c0_i32_0 = arith.constant 0 : i32
    %c0_i32_1 = arith.constant 0 : i32
    return %c0_i32, %c0_i32_0 : i32, i32
  }
}

</mosaic_0001>

<llo_original>
// kernel: tpu_custom_call.1
$region0: #{tpu_custom_call.1}
  #allocation0 [shape = 'u32[]', space=smem, size = 0x4, offset = 0x4, fixed_abs, tag = 'smem constant byte address 0x4 - core index']
  #allocation1 [shape = 'u32[144,128]{1,0:T(1,128)}', space=vmem, size = 0x12000, scoped, tag = 'internal scratch']
  #allocation2 [shape = 'f32[256,128]{1,0:T(8,128)}', space=vmem, size = 0x20000, scoped, tag = 'scratch operand']
  #allocation3 [shape = 'f32[256,128]{1,0:T(8,128)}', space=vmem, size = 0x20000, scoped, tag = 'scratch operand']
  #allocation4 [shape = 'bf16[256,128]{1,0:T(8,128)(2,1)}', space=vmem, size = 0x10000, scoped, tag = 'scratch operand']
  %s0 = inlined_call_operand.hbm [shape: f32[256,128], index: 0, kind: input, shape index: {}]
  %s1 = inlined_call_operand.hbm [shape: bf16[256,256], index: 1, kind: input, shape index: {}]
  %s2 = inlined_call_operand.hbm [shape: f32[128,128], index: 2, kind: input, shape index: {}]
  %s3 = inlined_call_operand.vmem [shape: f32[1,128], index: 3, kind: input, shape index: {}]
  %s4 = inlined_call_operand.hbm [shape: f32[2,128,128], index: 4, kind: input, shape index: {}]
  %s5 = inlined_call_operand.hbm [shape: f32[2,128,128], index: 5, kind: input, shape index: {}]
  %s6 = inlined_call_operand.hbm [shape: f32[128,128], index: 6, kind: input, shape index: {}]
  %s7 = inlined_call_operand.vmem [shape: f32[1,128], index: 7, kind: input, shape index: {}]
  %s8 = inlined_call_operand.hbm [shape: f32[256,128], index: 8, kind: output, shape index: {}]
  %s9 = sld [smem:[#allocation0]]
  $region66: #{tpu_custom_call.1} parent=0
    _
  %s11 = ssub.s32 1, %s9
  %s12 = scalar_select 0, %s11, %s9
  $region1: #{tpu_custom_call.1} parent=0
    #allocation5 [shape = 'u8[131072]{0}', space=vmem, size = 0x20000, scoped, tag = 'input window, operand 0, single buffered']
    #allocation6 [shape = 's32[1]{0}', space=sflag, size = 0x4, scoped, tag = 'scoped memory for tpu_custom_call.1']
    #allocation7 [shape = 's32[1]{0}', space=sflag, size = 0x4, scoped, tag = 'scoped memory for tpu_custom_call.1']
    #allocation8 [shape = 'u8[131072]{0}', space=vmem, size = 0x20000, scoped, tag = 'input window, operand 1, single buffered']
    #allocation9 [shape = 's32[1]{0}', space=sflag, size = 0x4, scoped, tag = 'scoped memory for tpu_custom_call.1']
    #allocation10 [shape = 'u8[65536]{0}', space=vmem, size = 0x10000, scoped, tag = 'input window, operand 2, single buffered']
    #allocation11 [shape = 'u8[131072]{0}', space=vmem, size = 0x20000, scoped, tag = 'input window, operand 4, single buffered']
    #allocation12 [shape = 's32[1]{0}', space=sflag, size = 0x4, scoped, tag = 'scoped memory for tpu_custom_call.1']
    #allocation13 [shape = 'u8[131072]{0}', space=vmem, size = 0x20000, scoped, tag = 'input window, operand 5, single buffered']
    #allocation14 [shape = 'u8[65536]{0}', space=vmem, size = 0x10000, scoped, tag = 'input window, operand 6, single buffered']
    #allocation15 [shape = 's32[1]{0}', space=sflag, size = 0x4, scoped, tag = 'scoped memory for tpu_custom_call.1']
    #allocation16 [shape = 'u8[131072]{0}', space=vmem, size = 0x20000, scoped, tag = 'output window, operand 0, single buffered']
    %13 = vsyncpa [#allocation6], 0
    %14 = vsyncpa [#allocation9], 0
    %15 = vsyncpa [#allocation12], 0
    %16 = vsyncpa [#allocation15], 0
    %17 = vsyncpa [#allocation7], 0
    // Predicated region
    $region2: #{tpu_custom_call.1} parent=1 // pred_check
      _
    $region3: #{tpu_custom_call.1} parent=1 // pred_check_branch
      %19 = sbr.rel (0) target = $region5
    $region4: #{tpu_custom_call.1} parent=1 // pred_region
      %s21 = ssub.s32 4096, 4096
      %22 = vsyncadd [#allocation6], %s21
      %s23 = sshll.u32 [#allocation5], 4
      %s24 = int_to_ptr.vmem [resolvable:$true] %s23
      %29 = dma.hbm_to_vmem [thread:$0]  %s0, 4096, %s24, [#allocation6], 128, 128, 8
    $region5: #{tpu_custom_call.1} parent=1 // pred_fallthru
      _
    // Predicated region
    $region6: #{tpu_custom_call.1} parent=1 // pred_check
      _
    $region7: #{tpu_custom_call.1} parent=1 // pred_check_branch
      %31 = sbr.rel (0) target = $region9
    $region8: #{tpu_custom_call.1} parent=1 // pred_region
      %s33 = ssub.s32 4096, 4096
      %34 = vsyncadd [#allocation9], %s33
      %s35 = sshll.u32 [#allocation8], 4
      %s36 = int_to_ptr.vmem [resolvable:$true] %s35
      %41 = dma.hbm_to_vmem [thread:$0]  %s1, 4096, %s36, [#allocation9], 128, 128, 8
    $region9: #{tpu_custom_call.1} parent=1 // pred_fallthru
      _
    // Predicated region
    $region10: #{tpu_custom_call.1} parent=1 // pred_check
      _
    $region11: #{tpu_custom_call.1} parent=1 // pred_check_branch
      %43 = sbr.rel (0) target = $region13
    $region12: #{tpu_custom_call.1} parent=1 // pred_region
      %s45 = ssub.s32 2048, 2048
      %46 = vsyncadd [#allocation9], %s45
      %s47 = sshll.u32 [#allocation10], 4
      %s48 = int_to_ptr.vmem [resolvable:$true] %s47
      %53 = dma.hbm_to_vmem [thread:$0]  %s2, 2048, %s48, [#allocation9], 128, 128, 8
    $region13: #{tpu_custom_call.1} parent=1 // pred_fallthru
      _
    // Predicated region
    $region14: #{tpu_custom_call.1} parent=1 // pred_check
      _
    $region15: #{tpu_custom_call.1} parent=1 // pred_check_branch
      %55 = sbr.rel (0) target = $region17
    $region16: #{tpu_custom_call.1} parent=1 // pred_region
      _
    $region17: #{tpu_custom_call.1} parent=1 // pred_fallthru
      _
    // Predicated region
    $region18: #{tpu_custom_call.1} parent=1 // pred_check
      _
    $region19: #{tpu_custom_call.1} parent=1 // pred_check_branch
      %57 = sbr.rel (0) target = $region21
    $region20: #{tpu_custom_call.1} parent=1 // pred_region
      %s59 = ssub.s32 4096, 4096
      %60 = vsyncadd [#allocation12], %s59
      %s61 = sshll.u32 [#allocation11], 4
      %s62 = int_to_ptr.vmem [resolvable:$true] %s61
      %67 = dma.hbm_to_vmem [thread:$0]  %s4, 4096, %s62, [#allocation12], 128, 128, 8
    $region21: #{tpu_custom_call.1} parent=1 // pred_fallthru
      _
    // Predicated region
    $region22: #{tpu_custom_call.1} parent=1 // pred_check
      _
    $region23: #{tpu_custom_call.1} parent=1 // pred_check_branch
      %69 = sbr.rel (0) target = $region25
    $region24: #{tpu_custom_call.1} parent=1 // pred_region
      %s71 = ssub.s32 4096, 4096
      %72 = vsyncadd [#allocation12], %s71
      %s73 = sshll.u32 [#allocation13], 4
      %s74 = int_to_ptr.vmem [resolvable:$true] %s73
      %79 = dma.hbm_to_vmem [thread:$0]  %s5, 4096, %s74, [#allocation12], 128, 128, 8
    $region25: #{tpu_custom_call.1} parent=1 // pred_fallthru
      _
    // Predicated region
    $region26: #{tpu_custom_call.1} parent=1 // pred_check
      _
    $region27: #{tpu_custom_call.1} parent=1 // pred_check_branch
      %81 = sbr.rel (0) target = $region29
    $region28: #{tpu_custom_call.1} parent=1 // pred_region
      %s83 = ssub.s32 2048, 2048
      %84 = vsyncadd [#allocation15], %s83
      %s85 = sshll.u32 [#allocation14], 4
      %s86 = int_to_ptr.vmem [resolvable:$true] %s85
      %91 = dma.hbm_to_vmem [thread:$0]  %s6, 2048, %s86, [#allocation15], 128, 128, 8
    $region29: #{tpu_custom_call.1} parent=1 // pred_fallthru
      _
    // Predicated region
    $region30: #{tpu_custom_call.1} parent=1 // pred_check
      _
    $region31: #{tpu_custom_call.1} parent=1 // pred_check_branch
      %93 = sbr.rel (0) target = $region33
    $region32: #{tpu_custom_call.1} parent=1 // pred_region
      _
    $region33: #{tpu_custom_call.1} parent=1 // pred_fallthru
      _
    // Predicated region
    $region34: #{tpu_custom_call.1} parent=1 // pred_check
      _
    $region35: #{tpu_custom_call.1} parent=1 // pred_check_branch
      %95 = sbr.rel (0) target = $region37
    $region36: #{tpu_custom_call.1} parent=1 // pred_region
      %96 = dma.done [#allocation6], 4096
    $region37: #{tpu_custom_call.1} parent=1 // pred_fallthru
      _
    // Predicated region
    $region38: #{tpu_custom_call.1} parent=1 // pred_check
      _
    $region39: #{tpu_custom_call.1} parent=1 // pred_check_branch
      %98 = sbr.rel (0) target = $region41
    $region40: #{tpu_custom_call.1} parent=1 // pred_region
      %99 = dma.done [#allocation9], 4096
    $region41: #{tpu_custom_call.1} parent=1 // pred_fallthru
      _
    // Predicated region
    $region42: #{tpu_custom_call.1} parent=1 // pred_check
      _
    $region43: #{tpu_custom_call.1} parent=1 // pred_check_branch
      %101 = sbr.rel (0) target = $region45
    $region44: #{tpu_custom_call.1} parent=1 // pred_region
      %102 = dma.done [#allocation9], 2048
    $region45: #{tpu_custom_call.1} parent=1 // pred_fallthru
      _
    // Predicated region
    $region46: #{tpu_custom_call.1} parent=1 // pred_check
      _
    $region47: #{tpu_custom_call.1} parent=1 // pred_check_branch
      %104 = sbr.rel (0) target = $region49
    $region48: #{tpu_custom_call.1} parent=1 // pred_region
      %105 = dma.done [#allocation12], 4096
    $region49: #{tpu_custom_call.1} parent=1 // pred_fallthru
      _
    // Predicated region
    $region50: #{tpu_custom_call.1} parent=1 // pred_check
      _
    $region51: #{tpu_custom_call.1} parent=1 // pred_check_branch
      %107 = sbr.rel (0) target = $region53
    $region52: #{tpu_custom_call.1} parent=1 // pred_region
      %108 = dma.done [#allocation12], 4096
    $region53: #{tpu_custom_call.1} parent=1 // pred_fallthru
      _
    // Predicated region
    $region54: #{tpu_custom_call.1} parent=1 // pred_check
      _
    $region55: #{tpu_custom_call.1} parent=1 // pred_check_branch
      %110 = sbr.rel (0) target = $region57
    $region56: #{tpu_custom_call.1} parent=1 // pred_region
      %111 = dma.done [#allocation15], 2048
    $region57: #{tpu_custom_call.1} parent=1 // pred_fallthru
      _
    %v113 = vld [vmem:[#allocation5] sm:$0xff]
    %v114 = vld [vmem:[#allocation5 + $0x8] sm:$0xff]
    %v115 = vld [vmem:[#allocation5 + $0x10] sm:$0xff]
    %v116 = vld [vmem:[#allocation5 + $0x18] sm:$0xff]
    %v117 = vld [vmem:[#allocation5 + $0x20] sm:$0xff]
    %v118 = vld [vmem:[#allocation5 + $0x28] sm:$0xff]
    %v119 = vld [vmem:[#allocation5 + $0x30] sm:$0xff]
    %v120 = vld [vmem:[#allocation5 + $0x38] sm:$0xff]
    %v121 = vld [vmem:[#allocation5 + $0x40] sm:$0xff]
    %v122 = vld [vmem:[#allocation5 + $0x48] sm:$0xff]
    %v123 = vld [vmem:[#allocation5 + $0x50] sm:$0xff]
    %v124 = vld [vmem:[#allocation5 + $0x58] sm:$0xff]
    %v125 = vld [vmem:[#allocation5 + $0x60] sm:$0xff]
    %v126 = vld [vmem:[#allocation5 + $0x68] sm:$0xff]
    %v127 = vld [vmem:[#allocation5 + $0x70] sm:$0xff]
    %v128 = vld [vmem:[#allocation5 + $0x78] sm:$0xff]
    %v129 = vld [vmem:[#allocation5 + $0x80] sm:$0xff]
    %v130 = vld [vmem:[#allocation5 + $0x88] sm:$0xff]
    %v131 = vld [vmem:[#allocation5 + $0x90] sm:$0xff]
    %v132 = vld [vmem:[#allocation5 + $0x98] sm:$0xff]
    %v133 = vld [vmem:[#allocation5 + $0xa0] sm:$0xff]
    %v134 = vld [vmem:[#allocation5 + $0xa8] sm:$0xff]
    %v135 = vld [vmem:[#allocation5 + $0xb0] sm:$0xff]
    %v136 = vld [vmem:[#allocation5 + $0xb8] sm:$0xff]
    %v137 = vld [vmem:[#allocation5 + $0xc0] sm:$0xff]
    %v138 = vld [vmem:[#allocation5 + $0xc8] sm:$0xff]
    %v139 = vld [vmem:[#allocation5 + $0xd0] sm:$0xff]
    %v140 = vld [vmem:[#allocation5 + $0xd8] sm:$0xff]
    %v141 = vld [vmem:[#allocation5 + $0xe0] sm:$0xff]
    %v142 = vld [vmem:[#allocation5 + $0xe8] sm:$0xff]
    %v143 = vld [vmem:[#allocation5 + $0xf0] sm:$0xff]
    %v144 = vld [vmem:[#allocation5 + $0xf8] sm:$0xff]
    %v145 = vld [vmem:[#allocation10] sm:$0xff]
    %v146 = vld [vmem:[#allocation10 + $0x8] sm:$0xff]
    %v147 = vld [vmem:[#allocation10 + $0x10] sm:$0xff]
    %v148 = vld [vmem:[#allocation10 + $0x18] sm:$0xff]
    %v149 = vld [vmem:[#allocation10 + $0x20] sm:$0xff]
    %v150 = vld [vmem:[#allocation10 + $0x28] sm:$0xff]
    %v151 = vld [vmem:[#allocation10 + $0x30] sm:$0xff]
    %v152 = vld [vmem:[#allocation10 + $0x38] sm:$0xff]
    %v153 = vld [vmem:[#allocation10 + $0x40] sm:$0xff]
    %v154 = vld [vmem:[#allocation10 + $0x48] sm:$0xff]
    %v155 = vld [vmem:[#allocation10 + $0x50] sm:$0xff]
    %v156 = vld [vmem:[#allocation10 + $0x58] sm:$0xff]
    %v157 = vld [vmem:[#allocation10 + $0x60] sm:$0xff]
    %v158 = vld [vmem:[#allocation10 + $0x68] sm:$0xff]
    %v159 = vld [vmem:[#allocation10 + $0x70] sm:$0xff]
    %v160 = vld [vmem:[#allocation10 + $0x78] sm:$0xff]
    %v161 = vld [vmem:[%s3] sm:$0x1]
    %v163 = vlaneseq
    %v164 = vshrl.u32 %v163, 7
    %v165 = vsub.s32 0, %v164
    %v166 = vrot.slane %v161, %v165
    %168 = vmatprep.subr.mxu0 0.0
    %169 = vmatpush1.msra.mxu0 %v160
    %170 = vmatprep.subr.mxu0 0.0
    %171 = vmatpush1.msra.mxu0 %v159
    %172 = vmatprep.subr.mxu0 0.0
    %173 = vmatpush1.msra.mxu0 %v158
    %174 = vmatprep.subr.mxu0 0.0
    %175 = vmatpush1.msra.mxu0 %v157
    %176 = vmatprep.subr.mxu0 0.0
    %177 = vmatpush1.msra.mxu0 %v156
    %178 = vmatprep.subr.mxu0 0.0
    %179 = vmatpush1.msra.mxu0 %v155
    %180 = vmatprep.subr.mxu0 0.0
    %181 = vmatpush1.msra.mxu0 %v154
    %182 = vmatprep.subr.mxu0 0.0
    %183 = vmatpush1.msra.mxu0 %v153
    %184 = vmatprep.subr.mxu0 0.0
    %185 = vmatpush1.msra.mxu0 %v152
    %186 = vmatprep.subr.mxu0 0.0
    %187 = vmatpush1.msra.mxu0 %v151
    %188 = vmatprep.subr.mxu0 0.0
    %189 = vmatpush1.msra.mxu0 %v150
    %190 = vmatprep.subr.mxu0 0.0
    %191 = vmatpush1.msra.mxu0 %v149
    %192 = vmatprep.subr.mxu0 0.0
    %193 = vmatpush1.msra.mxu0 %v148
    %194 = vmatprep.subr.mxu0 0.0
    %195 = vmatpush1.msra.mxu0 %v147
    %196 = vmatprep.subr.mxu0 0.0
    %197 = vmatpush1.msra.mxu0 %v146
    %198 = vmatprep.subr.mxu0 0.0
    %199 = vmatpush1.msra.mxu0 %v145
    %200 = vmatprep.subr.mxu0 0.0
    %201 = vmatpush2.msra.mxu0 0.0
    %202 = vmatprep.subr.mxu0 0.0
    %203 = vmatpush2.msra.mxu0 0.0
    %204 = vmatprep.subr.mxu0 0.0
    %205 = vmatpush2.msra.mxu0 0.0
    %206 = vmatprep.subr.mxu0 0.0
    %207 = vmatpush2.msra.mxu0 0.0
    %208 = vmatprep.subr.mxu0 0.0
    %209 = vmatpush2.msra.mxu0 0.0
    %210 = vmatprep.subr.mxu0 0.0
    %211 = vmatpush2.msra.mxu0 0.0
    %212 = vmatprep.subr.mxu0 0.0
    %213 = vmatpush2.msra.mxu0 0.0
    %214 = vmatprep.subr.mxu0 0.0
    %215 = vmatpush2.msra.mxu0 0.0
    %216 = vmatprep.subr.mxu0 0.0
    %217 = vmatpush2.msra.mxu0 0.0
    %218 = vmatprep.subr.mxu0 0.0
    %219 = vmatpush2.msra.mxu0 0.0
    %220 = vmatprep.subr.mxu0 0.0
    %221 = vmatpush2.msra.mxu0 0.0
    %222 = vmatprep.subr.mxu0 0.0
    %223 = vmatpush2.msra.mxu0 0.0
    %224 = vmatprep.subr.mxu0 0.0
    %225 = vmatpush2.msra.mxu0 0.0
    %226 = vmatprep.subr.mxu0 0.0
    %227 = vmatpush2.msra.mxu0 0.0
    %228 = vmatprep.subr.mxu0 0.0
    %229 = vmatpush2.msra.mxu0 0.0
    %230 = vmatprep.subr.mxu0 0.0
    %231 = vmatpush2.msra.mxu0 0.0
    %232 = vmatprep.mubr.f32.mxu0 0.0
    %233 = vmatmul.mubr.f32.gmra.mxu0 %v113
    %v234 = vpop.f32.mrf.mxu0
    %v235 = vadd.f32 %v166, %v234
    %v236 = vpop.f32.mrf.mxu0
    %237 = vmatprep.mubr.f32.mxu0 0.0
    %238 = vmatmul.mubr.f32.gmra.mxu0 %v114
    %v239 = vpop.f32.mrf.mxu0
    %v240 = vadd.f32 %v166, %v239
    %v241 = vpop.f32.mrf.mxu0
    %242 = vmatprep.mubr.f32.mxu0 0.0
    %243 = vmatmul.mubr.f32.gmra.mxu0 %v115
    %v244 = vpop.f32.mrf.mxu0
    %v245 = vadd.f32 %v166, %v244
    %v246 = vpop.f32.mrf.mxu0
    %247 = vmatprep.mubr.f32.mxu0 0.0
    %248 = vmatmul.mubr.f32.gmra.mxu0 %v116
    %v249 = vpop.f32.mrf.mxu0
    %v250 = vadd.f32 %v166, %v249
    %v251 = vpop.f32.mrf.mxu0
    %252 = vmatprep.mubr.f32.mxu0 0.0
    %253 = vmatmul.mubr.f32.gmra.mxu0 %v117
    %v254 = vpop.f32.mrf.mxu0
    %v255 = vadd.f32 %v166, %v254
    %v256 = vpop.f32.mrf.mxu0
    %257 = vmatprep.mubr.f32.mxu0 0.0
    %258 = vmatmul.mubr.f32.gmra.mxu0 %v118
    %v259 = vpop.f32.mrf.mxu0
    %v260 = vadd.f32 %v166, %v259
    %v261 = vpop.f32.mrf.mxu0
    %262 = vmatprep.mubr.f32.mxu0 0.0
    %263 = vmatmul.mubr.f32.gmra.mxu0 %v119
    %v264 = vpop.f32.mrf.mxu0
    %v265 = vadd.f32 %v166, %v264
    %v266 = vpop.f32.mrf.mxu0
    %267 = vmatprep.mubr.f32.mxu0 0.0
    %268 = vmatmul.mubr.f32.gmra.mxu0 %v120
    %v269 = vpop.f32.mrf.mxu0
    %v270 = vadd.f32 %v166, %v269
    %v271 = vpop.f32.mrf.mxu0
    %272 = vmatprep.mubr.f32.mxu0 0.0
    %273 = vmatmul.mubr.f32.gmra.mxu0 %v121
    %v274 = vpop.f32.mrf.mxu0
    %v275 = vadd.f32 %v166, %v274
    %v276 = vpop.f32.mrf.mxu0
    %277 = vmatprep.mubr.f32.mxu0 0.0
    %278 = vmatmul.mubr.f32.gmra.mxu0 %v122
    %v279 = vpop.f32.mrf.mxu0
    %v280 = vadd.f32 %v166, %v279
    %v281 = vpop.f32.mrf.mxu0
    %282 = vmatprep.mubr.f32.mxu0 0.0
    %283 = vmatmul.mubr.f32.gmra.mxu0 %v123
    %v284 = vpop.f32.mrf.mxu0
    %v285 = vadd.f32 %v166, %v284
    %v286 = vpop.f32.mrf.mxu0
    %287 = vmatprep.mubr.f32.mxu0 0.0
    %288 = vmatmul.mubr.f32.gmra.mxu0 %v124
    %v289 = vpop.f32.mrf.mxu0
    %v290 = vadd.f32 %v166, %v289
    %v291 = vpop.f32.mrf.mxu0
    %292 = vmatprep.mubr.f32.mxu0 0.0
    %293 = vmatmul.mubr.f32.gmra.mxu0 %v125
    %v294 = vpop.f32.mrf.mxu0
    %v295 = vadd.f32 %v166, %v294
    %v296 = vpop.f32.mrf.mxu0
    %297 = vmatprep.mubr.f32.mxu0 0.0
    %298 = vmatmul.mubr.f32.gmra.mxu0 %v126
    %v299 = vpop.f32.mrf.mxu0
    %v300 = vadd.f32 %v166, %v299
    %v301 = vpop.f32.mrf.mxu0
    %302 = vmatprep.mubr.f32.mxu0 0.0
    %303 = vmatmul.mubr.f32.gmra.mxu0 %v127
    %v304 = vpop.f32.mrf.mxu0
    %v305 = vadd.f32 %v166, %v304
    %v306 = vpop.f32.mrf.mxu0
    %307 = vmatprep.mubr.f32.mxu0 0.0
    %308 = vmatmul.mubr.f32.gmra.mxu0 %v128
    %v309 = vpop.f32.mrf.mxu0
    %v310 = vadd.f32 %v166, %v309
    %v311 = vpop.f32.mrf.mxu0
    %312 = vmatprep.mubr.f32.mxu0 0.0
    %313 = vmatmul.mubr.f32.gmra.mxu0 %v129
    %v314 = vpop.f32.mrf.mxu0
    %v315 = vadd.f32 %v166, %v314
    %v316 = vpop.f32.mrf.mxu0
    %317 = vmatprep.mubr.f32.mxu0 0.0
    %318 = vmatmul.mubr.f32.gmra.mxu0 %v130
    %v319 = vpop.f32.mrf.mxu0
    %v320 = vadd.f32 %v166, %v319
    %v321 = vpop.f32.mrf.mxu0
    %322 = vmatprep.mubr.f32.mxu0 0.0
    %323 = vmatmul.mubr.f32.gmra.mxu0 %v131
    %v324 = vpop.f32.mrf.mxu0
    %v325 = vadd.f32 %v166, %v324
    %v326 = vpop.f32.mrf.mxu0
    %327 = vmatprep.mubr.f32.mxu0 0.0
    %328 = vmatmul.mubr.f32.gmra.mxu0 %v132
    %v329 = vpop.f32.mrf.mxu0
    %v330 = vadd.f32 %v166, %v329
    %v331 = vpop.f32.mrf.mxu0
    %332 = vmatprep.mubr.f32.mxu0 0.0
    %333 = vmatmul.mubr.f32.gmra.mxu0 %v133
    %v334 = vpop.f32.mrf.mxu0
    %v335 = vadd.f32 %v166, %v334
    %v336 = vpop.f32.mrf.mxu0
    %337 = vmatprep.mubr.f32.mxu0 0.0
    %338 = vmatmul.mubr.f32.gmra.mxu0 %v134
    %v339 = vpop.f32.mrf.mxu0
    %v340 = vadd.f32 %v166, %v339
    %v341 = vpop.f32.mrf.mxu0
    %342 = vmatprep.mubr.f32.mxu0 0.0
    %343 = vmatmul.mubr.f32.gmra.mxu0 %v135
    %v344 = vpop.f32.mrf.mxu0
    %v345 = vadd.f32 %v166, %v344
    %v346 = vpop.f32.mrf.mxu0
    %347 = vmatprep.mubr.f32.mxu0 0.0
    %348 = vmatmul.mubr.f32.gmra.mxu0 %v136
    %v349 = vpop.f32.mrf.mxu0
    %v350 = vadd.f32 %v166, %v349
    %v351 = vpop.f32.mrf.mxu0
    %352 = vmatprep.mubr.f32.mxu0 0.0
    %353 = vmatmul.mubr.f32.gmra.mxu0 %v137
    %v354 = vpop.f32.mrf.mxu0
    %v355 = vadd.f32 %v166, %v354
    %v356 = vpop.f32.mrf.mxu0
    %357 = vmatprep.mubr.f32.mxu0 0.0
    %358 = vmatmul.mubr.f32.gmra.mxu0 %v138
    %v359 = vpop.f32.mrf.mxu0
    %v360 = vadd.f32 %v166, %v359
    %v361 = vpop.f32.mrf.mxu0
    %362 = vmatprep.mubr.f32.mxu0 0.0
    %363 = vmatmul.mubr.f32.gmra.mxu0 %v139
    %v364 = vpop.f32.mrf.mxu0
    %v365 = vadd.f32 %v166, %v364
    %v366 = vpop.f32.mrf.mxu0
    %367 = vmatprep.mubr.f32.mxu0 0.0
    %368 = vmatmul.mubr.f32.gmra.mxu0 %v140
    %v369 = vpop.f32.mrf.mxu0
    %v370 = vadd.f32 %v166, %v369
    %v371 = vpop.f32.mrf.mxu0
    %372 = vmatprep.mubr.f32.mxu0 0.0
    %373 = vmatmul.mubr.f32.gmra.mxu0 %v141
    %v374 = vpop.f32.mrf.mxu0
    %v375 = vadd.f32 %v166, %v374
    %v376 = vpop.f32.mrf.mxu0
    %377 = vmatprep.mubr.f32.mxu0 0.0
    %378 = vmatmul.mubr.f32.gmra.mxu0 %v142
    %v379 = vpop.f32.mrf.mxu0
    %v380 = vadd.f32 %v166, %v379
    %v381 = vpop.f32.mrf.mxu0
    %382 = vmatprep.mubr.f32.mxu0 0.0
    %383 = vmatmul.mubr.f32.gmra.mxu0 %v143
    %v384 = vpop.f32.mrf.mxu0
    %v385 = vadd.f32 %v166, %v384
    %v386 = vpop.f32.mrf.mxu0
    %387 = vmatprep.mubr.f32.mxu0 0.0
    %388 = vmatmul.mubr.f32.gmra.mxu0 %v144
    %v389 = vpop.f32.mrf.mxu0
    %v390 = vadd.f32 %v166, %v389
    %v391 = vpop.f32.mrf.mxu0
    %392 = vdwg.mxu0
    %v393 = vmax.f32 %v235, 0.0
    %v394 = vmax.f32 %v240, 0.0
    %v395 = vmax.f32 %v245, 0.0
    %v396 = vmax.f32 %v250, 0.0
    %v397 = vmax.f32 %v255, 0.0
    %v398 = vmax.f32 %v260, 0.0
    %v399 = vmax.f32 %v265, 0.0
    %v400 = vmax.f32 %v270, 0.0
    %v401 = vmax.f32 %v275, 0.0
    %v402 = vmax.f32 %v280, 0.0
    %v403 = vmax.f32 %v285, 0.0
    %v404 = vmax.f32 %v290, 0.0
    %v405 = vmax.f32 %v295, 0.0
    %v406 = vmax.f32 %v300, 0.0
    %v407 = vmax.f32 %v305, 0.0
    %v408 = vmax.f32 %v310, 0.0
    %v409 = vmax.f32 %v315, 0.0
    %v410 = vmax.f32 %v320, 0.0
    %v411 = vmax.f32 %v325, 0.0
    %v412 = vmax.f32 %v330, 0.0
    %v413 = vmax.f32 %v335, 0.0
    %v414 = vmax.f32 %v340, 0.0
    %v415 = vmax.f32 %v345, 0.0
    %v416 = vmax.f32 %v350, 0.0
    %v417 = vmax.f32 %v355, 0.0
    %v418 = vmax.f32 %v360, 0.0
    %v419 = vmax.f32 %v365, 0.0
    %v420 = vmax.f32 %v370, 0.0
    %v421 = vmax.f32 %v375, 0.0
    %v422 = vmax.f32 %v380, 0.0
    %v423 = vmax.f32 %v385, 0.0
    %v424 = vmax.f32 %v390, 0.0
    %425 = vst [vmem:[#allocation2] sm:$0xff] %v393
    %426 = vst [vmem:[#allocation2 + $0x8] sm:$0xff] %v394
    %427 = vst [vmem:[#allocation2 + $0x10] sm:$0xff] %v395
    %428 = vst [vmem:[#allocation2 + $0x18] sm:$0xff] %v396
    %429 = vst [vmem:[#allocation2 + $0x20] sm:$0xff] %v397
    %430 = vst [vmem:[#allocation2 + $0x28] sm:$0xff] %v398
    %431 = vst [vmem:[#allocation2 + $0x30] sm:$0xff] %v399
    %432 = vst [vmem:[#allocation2 + $0x38] sm:$0xff] %v400
    %433 = vst [vmem:[#allocation2 + $0x40] sm:$0xff] %v401
    %434 = vst [vmem:[#allocation2 + $0x48] sm:$0xff] %v402
    %435 = vst [vmem:[#allocation2 + $0x50] sm:$0xff] %v403
    %436 = vst [vmem:[#allocation2 + $0x58] sm:$0xff] %v404
    %437 = vst [vmem:[#allocation2 + $0x60] sm:$0xff] %v405
    %438 = vst [vmem:[#allocation2 + $0x68] sm:$0xff] %v406
    %439 = vst [vmem:[#allocation2 + $0x70] sm:$0xff] %v407
    %440 = vst [vmem:[#allocation2 + $0x78] sm:$0xff] %v408
    %441 = vst [vmem:[#allocation2 + $0x80] sm:$0xff] %v409
    %442 = vst [vmem:[#allocation2 + $0x88] sm:$0xff] %v410
    %443 = vst [vmem:[#allocation2 + $0x90] sm:$0xff] %v411
    %444 = vst [vmem:[#allocation2 + $0x98] sm:$0xff] %v412
    %445 = vst [vmem:[#allocation2 + $0xa0] sm:$0xff] %v413
    %446 = vst [vmem:[#allocation2 + $0xa8] sm:$0xff] %v414
    %447 = vst [vmem:[#allocation2 + $0xb0] sm:$0xff] %v415
    %448 = vst [vmem:[#allocation2 + $0xb8] sm:$0xff] %v416
    %449 = vst [vmem:[#allocation2 + $0xc0] sm:$0xff] %v417
    %450 = vst [vmem:[#allocation2 + $0xc8] sm:$0xff] %v418
    %451 = vst [vmem:[#allocation2 + $0xd0] sm:$0xff] %v419
    %452 = vst [vmem:[#allocation2 + $0xd8] sm:$0xff] %v420
    %453 = vst [vmem:[#allocation2 + $0xe0] sm:$0xff] %v421
    %454 = vst [vmem:[#allocation2 + $0xe8] sm:$0xff] %v422
    %455 = vst [vmem:[#allocation2 + $0xf0] sm:$0xff] %v423
    %456 = vst [vmem:[#allocation2 + $0xf8] sm:$0xff] %v424
    %457 = vst [vmem:[#allocation3] sm:$0xff] %v393
    %458 = vst [vmem:[#allocation3 + $0x8] sm:$0xff] %v394
    %459 = vst [vmem:[#allocation3 + $0x10] sm:$0xff] %v395
    %460 = vst [vmem:[#allocation3 + $0x18] sm:$0xff] %v396
    %461 = vst [vmem:[#allocation3 + $0x20] sm:$0xff] %v397
    %462 = vst [vmem:[#allocation3 + $0x28] sm:$0xff] %v398
    %463 = vst [vmem:[#allocation3 + $0x30] sm:$0xff] %v399
    %464 = vst [vmem:[#allocation3 + $0x38] sm:$0xff] %v400
    %465 = vst [vmem:[#allocation3 + $0x40] sm:$0xff] %v401
    %466 = vst [vmem:[#allocation3 + $0x48] sm:$0xff] %v402
    %467 = vst [vmem:[#allocation3 + $0x50] sm:$0xff] %v403
    %468 = vst [vmem:[#allocation3 + $0x58] sm:$0xff] %v404
    %469 = vst [vmem:[#allocation3 + $0x60] sm:$0xff] %v405
    %470 = vst [vmem:[#allocation3 + $0x68] sm:$0xff] %v406
    %471 = vst [vmem:[#allocation3 + $0x70] sm:$0xff] %v407
    %472 = vst [vmem:[#allocation3 + $0x78] sm:$0xff] %v408
    %473 = vst [vmem:[#allocation3 + $0x80] sm:$0xff] %v409
    %474 = vst [vmem:[#allocation3 + $0x88] sm:$0xff] %v410
    %475 = vst [vmem:[#allocation3 + $0x90] sm:$0xff] %v411
    %476 = vst [vmem:[#allocation3 + $0x98] sm:$0xff] %v412
    %477 = vst [vmem:[#allocation3 + $0xa0] sm:$0xff] %v413
    %478 = vst [vmem:[#allocation3 + $0xa8] sm:$0xff] %v414
    %479 = vst [vmem:[#allocation3 + $0xb0] sm:$0xff] %v415
    %480 = vst [vmem:[#allocation3 + $0xb8] sm:$0xff] %v416
    %481 = vst [vmem:[#allocation3 + $0xc0] sm:$0xff] %v417
    %482 = vst [vmem:[#allocation3 + $0xc8] sm:$0xff] %v418
    %483 = vst [vmem:[#allocation3 + $0xd0] sm:$0xff] %v419
    %484 = vst [vmem:[#allocation3 + $0xd8] sm:$0xff] %v420
    %485 = vst [vmem:[#allocation3 + $0xe0] sm:$0xff] %v421
    %486 = vst [vmem:[#allocation3 + $0xe8] sm:$0xff] %v422
    %487 = vst [vmem:[#allocation3 + $0xf0] sm:$0xff] %v423
    %488 = vst [vmem:[#allocation3 + $0xf8] sm:$0xff] %v424
    %v489 = vld [vmem:[#allocation2] sm:$0xff]
    %v490 = vld [vmem:[#allocation2 + $0x8] sm:$0xff]
    %v491 = vld [vmem:[#allocation2 + $0x10] sm:$0xff]
    %v492 = vld [vmem:[#allocation2 + $0x18] sm:$0xff]
    %v493 = vld [vmem:[#allocation2 + $0x20] sm:$0xff]
    %v494 = vld [vmem:[#allocation2 + $0x28] sm:$0xff]
    %v495 = vld [vmem:[#allocation2 + $0x30] sm:$0xff]
    %v496 = vld [vmem:[#allocation2 + $0x38] sm:$0xff]
    %v497 = vld [vmem:[#allocation2 + $0x40] sm:$0xff]
    %v498 = vld [vmem:[#allocation2 + $0x48] sm:$0xff]
    %v499 = vld [vmem:[#allocation2 + $0x50] sm:$0xff]
    %v500 = vld [vmem:[#allocation2 + $0x58] sm:$0xff]
    %v501 = vld [vmem:[#allocation2 + $0x60] sm:$0xff]
    %v502 = vld [vmem:[#allocation2 + $0x68] sm:$0xff]
    %v503 = vld [vmem:[#allocation2 + $0x70] sm:$0xff]
    %v504 = vld [vmem:[#allocation2 + $0x78] sm:$0xff]
    %v505 = vld [vmem:[#allocation2 + $0x80] sm:$0xff]
    %v506 = vld [vmem:[#allocation2 + $0x88] sm:$0xff]
    %v507 = vld [vmem:[#allocation2 + $0x90] sm:$0xff]
    %v508 = vld [vmem:[#allocation2 + $0x98] sm:$0xff]
    %v509 = vld [vmem:[#allocation2 + $0xa0] sm:$0xff]
    %v510 = vld [vmem:[#allocation2 + $0xa8] sm:$0xff]
    %v511 = vld [vmem:[#allocation2 + $0xb0] sm:$0xff]
    %v512 = vld [vmem:[#allocation2 + $0xb8] sm:$0xff]
    %v513 = vld [vmem:[#allocation2 + $0xc0] sm:$0xff]
    %v514 = vld [vmem:[#allocation2 + $0xc8] sm:$0xff]
    %v515 = vld [vmem:[#allocation2 + $0xd0] sm:$0xff]
    %v516 = vld [vmem:[#allocation2 + $0xd8] sm:$0xff]
    %v517 = vld [vmem:[#allocation2 + $0xe0] sm:$0xff]
    %v518 = vld [vmem:[#allocation2 + $0xe8] sm:$0xff]
    %v519 = vld [vmem:[#allocation2 + $0xf0] sm:$0xff]
    %v520 = vld [vmem:[#allocation2 + $0xf8] sm:$0xff]
    %v521 = vld [vmem:[#allocation11] sm:$0xff]
    %v522 = vld [vmem:[#allocation11 + $0x8] sm:$0xff]
    %v523 = vld [vmem:[#allocation11 + $0x10] sm:$0xff]
    %v524 = vld [vmem:[#allocation11 + $0x18] sm:$0xff]
    %v525 = vld [vmem:[#allocation11 + $0x20] sm:$0xff]
    %v526 = vld [vmem:[#allocation11 + $0x28] sm:$0xff]
    %v527 = vld [vmem:[#allocation11 + $0x30] sm:$0xff]
    %v528 = vld [vmem:[#allocation11 + $0x38] sm:$0xff]
    %v529 = vld [vmem:[#allocation11 + $0x40] sm:$0xff]
    %v530 = vld [vmem:[#allocation11 + $0x48] sm:$0xff]
    %v531 = vld [vmem:[#allocation11 + $0x50] sm:$0xff]
    %v532 = vld [vmem:[#allocation11 + $0x58] sm:$0xff]
    %v533 = vld [vmem:[#allocation11 + $0x60] sm:$0xff]
    %v534 = vld [vmem:[#allocation11 + $0x68] sm:$0xff]
    %v535 = vld [vmem:[#allocation11 + $0x70] sm:$0xff]
    %v536 = vld [vmem:[#allocation11 + $0x78] sm:$0xff]
    %537 = vmatprep.subr.mxu0 0.0
    %538 = vmatpush1.msra.mxu0 %v536
    %539 = vmatprep.subr.mxu0 0.0
    %540 = vmatpush1.msra.mxu0 %v535
    %541 = vmatprep.subr.mxu0 0.0
    %542 = vmatpush1.msra.mxu0 %v534
    %543 = vmatprep.subr.mxu0 0.0
    %544 = vmatpush1.msra.mxu0 %v533
    %545 = vmatprep.subr.mxu0 0.0
    %546 = vmatpush1.msra.mxu0 %v532
    %547 = vmatprep.subr.mxu0 0.0
    %548 = vmatpush1.msra.mxu0 %v531
    %549 = vmatprep.subr.mxu0 0.0
    %550 = vmatpush1.msra.mxu0 %v530
    %551 = vmatprep.subr.mxu0 0.0
    %552 = vmatpush1.msra.mxu0 %v529
    %553 = vmatprep.subr.mxu0 0.0
    %554 = vmatpush1.msra.mxu0 %v528
    %555 = vmatprep.subr.mxu0 0.0
    %556 = vmatpush1.msra.mxu0 %v527
    %557 = vmatprep.subr.mxu0 0.0
    %558 = vmatpush1.msra.mxu0 %v526
    %559 = vmatprep.subr.mxu0 0.0
    %560 = vmatpush1.msra.mxu0 %v525
    %561 = vmatprep.subr.mxu0 0.0
    %562 = vmatpush1.msra.mxu0 %v524
    %563 = vmatprep.subr.mxu0 0.0
    %564 = vmatpush1.msra.mxu0 %v523
    %565 = vmatprep.subr.mxu0 0.0
    %566 = vmatpush1.msra.mxu0 %v522
    %567 = vmatprep.subr.mxu0 0.0
    %568 = vmatpush1.msra.mxu0 %v521
    %569 = vmatprep.subr.mxu0 0.0
    %570 = vmatpush2.msra.mxu0 0.0
    %571 = vmatprep.subr.mxu0 0.0
    %572 = vmatpush2.msra.mxu0 0.0
    %573 = vmatprep.subr.mxu0 0.0
    %574 = vmatpush2.msra.mxu0 0.0
    %575 = vmatprep.subr.mxu0 0.0
    %576 = vmatpush2.msra.mxu0 0.0
    %577 = vmatprep.subr.mxu0 0.0
    %578 = vmatpush2.msra.mxu0 0.0
    %579 = vmatprep.subr.mxu0 0.0
    %580 = vmatpush2.msra.mxu0 0.0
    %581 = vmatprep.subr.mxu0 0.0
    %582 = vmatpush2.msra.mxu0 0.0
    %583 = vmatprep.subr.mxu0 0.0
    %584 = vmatpush2.msra.mxu0 0.0
    %585 = vmatprep.subr.mxu0 0.0
    %586 = vmatpush2.msra.mxu0 0.0
    %587 = vmatprep.subr.mxu0 0.0
    %588 = vmatpush2.msra.mxu0 0.0
    %589 = vmatprep.subr.mxu0 0.0
    %590 = vmatpush2.msra.mxu0 0.0
    %591 = vmatprep.subr.mxu0 0.0
    %592 = vmatpush2.msra.mxu0 0.0
    %593 = vmatprep.subr.mxu0 0.0
    %594 = vmatpush2.msra.mxu0 0.0
    %595 = vmatprep.subr.mxu0 0.0
    %596 = vmatpush2.msra.mxu0 0.0
    %597 = vmatprep.subr.mxu0 0.0
    %598 = vmatpush2.msra.mxu0 0.0
    %599 = vmatprep.subr.mxu0 0.0
    %600 = vmatpush2.msra.mxu0 0.0
    %601 = vmatprep.mubr.f32.mxu0 0.0
    %602 = vmatmul.mubr.f32.gmra.mxu0 %v489
    %v603 = vpop.f32.mrf.mxu0
    %v604 = vadd.f32 0.0, %v603
    %v605 = vpop.f32.mrf.mxu0
    %606 = vmatprep.mubr.f32.mxu0 0.0
    %607 = vmatmul.mubr.f32.gmra.mxu0 %v490
    %v608 = vpop.f32.mrf.mxu0
    %v609 = vadd.f32 0.0, %v608
    %v610 = vpop.f32.mrf.mxu0
    %611 = vmatprep.mubr.f32.mxu0 0.0
    %612 = vmatmul.mubr.f32.gmra.mxu0 %v491
    %v613 = vpop.f32.mrf.mxu0
    %v614 = vadd.f32 0.0, %v613
    %v615 = vpop.f32.mrf.mxu0
    %616 = vmatprep.mubr.f32.mxu0 0.0
    %617 = vmatmul.mubr.f32.gmra.mxu0 %v492
    %v618 = vpop.f32.mrf.mxu0
    %v619 = vadd.f32 0.0, %v618
    %v620 = vpop.f32.mrf.mxu0
    %621 = vmatprep.mubr.f32.mxu0 0.0
    %622 = vmatmul.mubr.f32.gmra.mxu0 %v493
    %v623 = vpop.f32.mrf.mxu0
    %v624 = vadd.f32 0.0, %v623
    %v625 = vpop.f32.mrf.mxu0
    %626 = vmatprep.mubr.f32.mxu0 0.0
    %627 = vmatmul.mubr.f32.gmra.mxu0 %v494
    %v628 = vpop.f32.mrf.mxu0
    %v629 = vadd.f32 0.0, %v628
    %v630 = vpop.f32.mrf.mxu0
    %631 = vmatprep.mubr.f32.mxu0 0.0
    %632 = vmatmul.mubr.f32.gmra.mxu0 %v495
    %v633 = vpop.f32.mrf.mxu0
    %v634 = vadd.f32 0.0, %v633
    %v635 = vpop.f32.mrf.mxu0
    %636 = vmatprep.mubr.f32.mxu0 0.0
    %637 = vmatmul.mubr.f32.gmra.mxu0 %v496
    %v638 = vpop.f32.mrf.mxu0
    %v639 = vadd.f32 0.0, %v638
    %v640 = vpop.f32.mrf.mxu0
    %641 = vmatprep.mubr.f32.mxu0 0.0
    %642 = vmatmul.mubr.f32.gmra.mxu0 %v497
    %v643 = vpop.f32.mrf.mxu0
    %v644 = vadd.f32 0.0, %v643
    %v645 = vpop.f32.mrf.mxu0
    %646 = vmatprep.mubr.f32.mxu0 0.0
    %647 = vmatmul.mubr.f32.gmra.mxu0 %v498
    %v648 = vpop.f32.mrf.mxu0
    %v649 = vadd.f32 0.0, %v648
    %v650 = vpop.f32.mrf.mxu0
    %651 = vmatprep.mubr.f32.mxu0 0.0
    %652 = vmatmul.mubr.f32.gmra.mxu0 %v499
    %v653 = vpop.f32.mrf.mxu0
    %v654 = vadd.f32 0.0, %v653
    %v655 = vpop.f32.mrf.mxu0
    %656 = vmatprep.mubr.f32.mxu0 0.0
    %657 = vmatmul.mubr.f32.gmra.mxu0 %v500
    %v658 = vpop.f32.mrf.mxu0
    %v659 = vadd.f32 0.0, %v658
    %v660 = vpop.f32.mrf.mxu0
    %661 = vmatprep.mubr.f32.mxu0 0.0
    %662 = vmatmul.mubr.f32.gmra.mxu0 %v501
    %v663 = vpop.f32.mrf.mxu0
    %v664 = vadd.f32 0.0, %v663
    %v665 = vpop.f32.mrf.mxu0
    %666 = vmatprep.mubr.f32.mxu0 0.0
    %667 = vmatmul.mubr.f32.gmra.mxu0 %v502
    %v668 = vpop.f32.mrf.mxu0
    %v669 = vadd.f32 0.0, %v668
    %v670 = vpop.f32.mrf.mxu0
    %671 = vmatprep.mubr.f32.mxu0 0.0
    %672 = vmatmul.mubr.f32.gmra.mxu0 %v503
    %v673 = vpop.f32.mrf.mxu0
    %v674 = vadd.f32 0.0, %v673
    %v675 = vpop.f32.mrf.mxu0
    %676 = vmatprep.mubr.f32.mxu0 0.0
    %677 = vmatmul.mubr.f32.gmra.mxu0 %v504
    %v678 = vpop.f32.mrf.mxu0
    %v679 = vadd.f32 0.0, %v678
    %v680 = vpop.f32.mrf.mxu0
    %681 = vmatprep.mubr.f32.mxu0 0.0
    %682 = vmatmul.mubr.f32.gmra.mxu0 %v505
    %v683 = vpop.f32.mrf.mxu0
    %v684 = vadd.f32 0.0, %v683
    %v685 = vpop.f32.mrf.mxu0
    %686 = vmatprep.mubr.f32.mxu0 0.0
    %687 = vmatmul.mubr.f32.gmra.mxu0 %v506
    %v688 = vpop.f32.mrf.mxu0
    %v689 = vadd.f32 0.0, %v688
    %v690 = vpop.f32.mrf.mxu0
    %691 = vmatprep.mubr.f32.mxu0 0.0
    %692 = vmatmul.mubr.f32.gmra.mxu0 %v507
    %v693 = vpop.f32.mrf.mxu0
    %v694 = vadd.f32 0.0, %v693
    %v695 = vpop.f32.mrf.mxu0
    %696 = vmatprep.mubr.f32.mxu0 0.0
    %697 = vmatmul.mubr.f32.gmra.mxu0 %v508
    %v698 = vpop.f32.mrf.mxu0
    %v699 = vadd.f32 0.0, %v698
    %v700 = vpop.f32.mrf.mxu0
    %701 = vmatprep.mubr.f32.mxu0 0.0
    %702 = vmatmul.mubr.f32.gmra.mxu0 %v509
    %v703 = vpop.f32.mrf.mxu0
    %v704 = vadd.f32 0.0, %v703
    %v705 = vpop.f32.mrf.mxu0
    %706 = vmatprep.mubr.f32.mxu0 0.0
    %707 = vmatmul.mubr.f32.gmra.mxu0 %v510
    %v708 = vpop.f32.mrf.mxu0
    %v709 = vadd.f32 0.0, %v708
    %v710 = vpop.f32.mrf.mxu0
    %711 = vmatprep.mubr.f32.mxu0 0.0
    %712 = vmatmul.mubr.f32.gmra.mxu0 %v511
    %v713 = vpop.f32.mrf.mxu0
    %v714 = vadd.f32 0.0, %v713
    %v715 = vpop.f32.mrf.mxu0
    %716 = vmatprep.mubr.f32.mxu0 0.0
    %717 = vmatmul.mubr.f32.gmra.mxu0 %v512
    %v718 = vpop.f32.mrf.mxu0
    %v719 = vadd.f32 0.0, %v718
    %v720 = vpop.f32.mrf.mxu0
    %721 = vmatprep.mubr.f32.mxu0 0.0
    %722 = vmatmul.mubr.f32.gmra.mxu0 %v513
    %v723 = vpop.f32.mrf.mxu0
    %v724 = vadd.f32 0.0, %v723
    %v725 = vpop.f32.mrf.mxu0
    %726 = vmatprep.mubr.f32.mxu0 0.0
    %727 = vmatmul.mubr.f32.gmra.mxu0 %v514
    %v728 = vpop.f32.mrf.mxu0
    %v729 = vadd.f32 0.0, %v728
    %v730 = vpop.f32.mrf.mxu0
    %731 = vmatprep.mubr.f32.mxu0 0.0
    %732 = vmatmul.mubr.f32.gmra.mxu0 %v515
    %v733 = vpop.f32.mrf.mxu0
    %v734 = vadd.f32 0.0, %v733
    %v735 = vpop.f32.mrf.mxu0
    %736 = vmatprep.mubr.f32.mxu0 0.0
    %737 = vmatmul.mubr.f32.gmra.mxu0 %v516
    %v738 = vpop.f32.mrf.mxu0
    %v739 = vadd.f32 0.0, %v738
    %v740 = vpop.f32.mrf.mxu0
    %741 = vmatprep.mubr.f32.mxu0 0.0
    %742 = vmatmul.mubr.f32.gmra.mxu0 %v517
    %v743 = vpop.f32.mrf.mxu0
    %v744 = vadd.f32 0.0, %v743
    %v745 = vpop.f32.mrf.mxu0
    %746 = vmatprep.mubr.f32.mxu0 0.0
    %747 = vmatmul.mubr.f32.gmra.mxu0 %v518
    %v748 = vpop.f32.mrf.mxu0
    %v749 = vadd.f32 0.0, %v748
    %v750 = vpop.f32.mrf.mxu0
    %751 = vmatprep.mubr.f32.mxu0 0.0
    %752 = vmatmul.mubr.f32.gmra.mxu0 %v519
    %v753 = vpop.f32.mrf.mxu0
    %v754 = vadd.f32 0.0, %v753
    %v755 = vpop.f32.mrf.mxu0
    %756 = vmatprep.mubr.f32.mxu0 0.0
    %757 = vmatmul.mubr.f32.gmra.mxu0 %v520
    %v758 = vpop.f32.mrf.mxu0
    %v759 = vadd.f32 0.0, %v758
    %v760 = vpop.f32.mrf.mxu0
    %761 = vdwg.mxu0
    %v762 = vadd.f32 %v489, %v604
    %v763 = vadd.f32 %v490, %v609
    %v764 = vadd.f32 %v491, %v614
    %v765 = vadd.f32 %v492, %v619
    %v766 = vadd.f32 %v493, %v624
    %v767 = vadd.f32 %v494, %v629
    %v768 = vadd.f32 %v495, %v634
    %v769 = vadd.f32 %v496, %v639
    %v770 = vadd.f32 %v497, %v644
    %v771 = vadd.f32 %v498, %v649
    %v772 = vadd.f32 %v499, %v654
    %v773 = vadd.f32 %v500, %v659
    %v774 = vadd.f32 %v501, %v664
    %v775 = vadd.f32 %v502, %v669
    %v776 = vadd.f32 %v503, %v674
    %v777 = vadd.f32 %v504, %v679
    %v778 = vadd.f32 %v505, %v684
    %v779 = vadd.f32 %v506, %v689
    %v780 = vadd.f32 %v507, %v694
    %v781 = vadd.f32 %v508, %v699
    %v782 = vadd.f32 %v509, %v704
    %v783 = vadd.f32 %v510, %v709
    %v784 = vadd.f32 %v511, %v714
    %v785 = vadd.f32 %v512, %v719
    %v786 = vadd.f32 %v513, %v724
    %v787 = vadd.f32 %v514, %v729
    %v788 = vadd.f32 %v515, %v734
    %v789 = vadd.f32 %v516, %v739
    %v790 = vadd.f32 %v517, %v744
    %v791 = vadd.f32 %v518, %v749
    %v792 = vadd.f32 %v519, %v754
    %v793 = vadd.f32 %v520, %v759
    %v794 = vpack.c.bf16 %v763, %v762
    %v795 = vpack.c.bf16 %v765, %v764
    %v796 = vpack.c.bf16 %v767, %v766
    %v797 = vpack.c.bf16 %v769, %v768
    %v798 = vpack.c.bf16 %v771, %v770
    %v799 = vpack.c.bf16 %v773, %v772
    %v800 = vpack.c.bf16 %v775, %v774
    %v801 = vpack.c.bf16 %v777, %v776
    %v802 = vpack.c.bf16 %v779, %v778
    %v803 = vpack.c.bf16 %v781, %v780
    %v804 = vpack.c.bf16 %v783, %v782
    %v805 = vpack.c.bf16 %v785, %v784
    %v806 = vpack.c.bf16 %v787, %v786
    %v807 = vpack.c.bf16 %v789, %v788
    %v808 = vpack.c.bf16 %v791, %v790
    %v809 = vpack.c.bf16 %v793, %v792
    %v826 = vunpack.c.l.b16 %v794
    %v827 = vunpack.c.h.b16 %v794
    %v828 = vunpack.c.l.b16 %v795
    %v829 = vunpack.c.h.b16 %v795
    %v830 = vunpack.c.l.b16 %v796
    %v831 = vunpack.c.h.b16 %v796
    %v832 = vunpack.c.l.b16 %v797
    %v833 = vunpack.c.h.b16 %v797
    %v834 = vunpack.c.l.b16 %v798
    %v835 = vunpack.c.h.b16 %v798
    %v836 = vunpack.c.l.b16 %v799
    %v837 = vunpack.c.h.b16 %v799
    %v838 = vunpack.c.l.b16 %v800
    %v839 = vunpack.c.h.b16 %v800
    %v840 = vunpack.c.l.b16 %v801
    %v841 = vunpack.c.h.b16 %v801
    %v842 = vunpack.c.l.b16 %v802
    %v843 = vunpack.c.h.b16 %v802
    %v844 = vunpack.c.l.b16 %v803
    %v845 = vunpack.c.h.b16 %v803
    %v846 = vunpack.c.l.b16 %v804
    %v847 = vunpack.c.h.b16 %v804
    %v848 = vunpack.c.l.b16 %v805
    %v849 = vunpack.c.h.b16 %v805
    %v850 = vunpack.c.l.b16 %v806
    %v851 = vunpack.c.h.b16 %v806
    %v852 = vunpack.c.l.b16 %v807
    %v853 = vunpack.c.h.b16 %v807
    %v854 = vunpack.c.l.b16 %v808
    %v855 = vunpack.c.h.b16 %v808
    %v856 = vunpack.c.l.b16 %v809
    %v857 = vunpack.c.h.b16 %v809
    %v858 = vpack.c.b16 %v826, %v826
    %v859 = vpack.c.b16 %v827, %v827
    %v860 = vpack.c.b16 %v828, %v828
    %v861 = vpack.c.b16 %v829, %v829
    %v862 = vpack.c.b16 %v830, %v830
    %v863 = vpack.c.b16 %v831, %v831
    %v864 = vpack.c.b16 %v832, %v832
    %v865 = vpack.c.b16 %v833, %v833
    %v866 = vpack.c.b16 %v834, %v834
    %v867 = vpack.c.b16 %v835, %v835
    %v868 = vpack.c.b16 %v836, %v836
    %v869 = vpack.c.b16 %v837, %v837
    %v870 = vpack.c.b16 %v838, %v838
    %v871 = vpack.c.b16 %v839, %v839
    %v872 = vpack.c.b16 %v840, %v840
    %v873 = vpack.c.b16 %v841, %v841
    %v874 = vpack.c.b16 %v842, %v842
    %v875 = vpack.c.b16 %v843, %v843
    %v876 = vpack.c.b16 %v844, %v844
    %v877 = vpack.c.b16 %v845, %v845
    %v878 = vpack.c.b16 %v846, %v846
    %v879 = vpack.c.b16 %v847, %v847
    %v880 = vpack.c.b16 %v848, %v848
    %v881 = vpack.c.b16 %v849, %v849
    %v882 = vpack.c.b16 %v850, %v850
    %v883 = vpack.c.b16 %v851, %v851
    %v884 = vpack.c.b16 %v852, %v852
    %v885 = vpack.c.b16 %v853, %v853
    %v886 = vpack.c.b16 %v854, %v854
    %v887 = vpack.c.b16 %v855, %v855
    %v888 = vpack.c.b16 %v856, %v856
    %v889 = vpack.c.b16 %v857, %v857
    %922 = vst [vmem:[#allocation4] sm:$0xf] %v858
    %923 = vst [vmem:[#allocation4 + $0x4] sm:$0xf] %v859
    %924 = vst [vmem:[#allocation4 + $0x8] sm:$0xf] %v860
    %925 = vst [vmem:[#allocation4 + $0xc] sm:$0xf] %v861
    %926 = vst [vmem:[#allocation4 + $0x10] sm:$0xf] %v862
    %927 = vst [vmem:[#allocation4 + $0x14] sm:$0xf] %v863
    %928 = vst [vmem:[#allocation4 + $0x18] sm:$0xf] %v864
    %929 = vst [vmem:[#allocation4 + $0x1c] sm:$0xf] %v865
    %930 = vst [vmem:[#allocation4 + $0x20] sm:$0xf] %v866
    %931 = vst [vmem:[#allocation4 + $0x24] sm:$0xf] %v867
    %932 = vst [vmem:[#allocation4 + $0x28] sm:$0xf] %v868
    %933 = vst [vmem:[#allocation4 + $0x2c] sm:$0xf] %v869
    %934 = vst [vmem:[#allocation4 + $0x30] sm:$0xf] %v870
    %935 = vst [vmem:[#allocation4 + $0x34] sm:$0xf] %v871
    %936 = vst [vmem:[#allocation4 + $0x38] sm:$0xf] %v872
    %937 = vst [vmem:[#allocation4 + $0x3c] sm:$0xf] %v873
    %938 = vst [vmem:[#allocation4 + $0x40] sm:$0xf] %v874
    %939 = vst [vmem:[#allocation4 + $0x44] sm:$0xf] %v875
    %940 = vst [vmem:[#allocation4 + $0x48] sm:$0xf] %v876
    %941 = vst [vmem:[#allocation4 + $0x4c] sm:$0xf] %v877
    %942 = vst [vmem:[#allocation4 + $0x50] sm:$0xf] %v878
    %943 = vst [vmem:[#allocation4 + $0x54] sm:$0xf] %v879
    %944 = vst [vmem:[#allocation4 + $0x58] sm:$0xf] %v880
    %945 = vst [vmem:[#allocation4 + $0x5c] sm:$0xf] %v881
    %946 = vst [vmem:[#allocation4 + $0x60] sm:$0xf] %v882
    %947 = vst [vmem:[#allocation4 + $0x64] sm:$0xf] %v883
    %948 = vst [vmem:[#allocation4 + $0x68] sm:$0xf] %v884
    %949 = vst [vmem:[#allocation4 + $0x6c] sm:$0xf] %v885
    %950 = vst [vmem:[#allocation4 + $0x70] sm:$0xf] %v886
    %951 = vst [vmem:[#allocation4 + $0x74] sm:$0xf] %v887
    %952 = vst [vmem:[#allocation4 + $0x78] sm:$0xf] %v888
    %953 = vst [vmem:[#allocation4 + $0x7c] sm:$0xf] %v889
    %v954 = vld [vmem:[#allocation3] sm:$0xff]
    %v955 = vld [vmem:[#allocation3 + $0x8] sm:$0xff]
    %v956 = vld [vmem:[#allocation3 + $0x10] sm:$0xff]
    %v957 = vld [vmem:[#allocation3 + $0x18] sm:$0xff]
    %v958 = vld [vmem:[#allocation3 + $0x20] sm:$0xff]
    %v959 = vld [vmem:[#allocation3 + $0x28] sm:$0xff]
    %v960 = vld [vmem:[#allocation3 + $0x30] sm:$0xff]
    %v961 = vld [vmem:[#allocation3 + $0x38] sm:$0xff]
    %v962 = vld [vmem:[#allocation3 + $0x40] sm:$0xff]
    %v963 = vld [vmem:[#allocation3 + $0x48] sm:$0xff]
    %v964 = vld [vmem:[#allocation3 + $0x50] sm:$0xff]
    %v965 = vld [vmem:[#allocation3 + $0x58] sm:$0xff]
    %v966 = vld [vmem:[#allocation3 + $0x60] sm:$0xff]
    %v967 = vld [vmem:[#allocation3 + $0x68] sm:$0xff]
    %v968 = vld [vmem:[#allocation3 + $0x70] sm:$0xff]
    %v969 = vld [vmem:[#allocation3 + $0x78] sm:$0xff]
    %v970 = vld [vmem:[#allocation3 + $0x80] sm:$0xff]
    %v971 = vld [vmem:[#allocation3 + $0x88] sm:$0xff]
    %v972 = vld [vmem:[#allocation3 + $0x90] sm:$0xff]
    %v973 = vld [vmem:[#allocation3 + $0x98] sm:$0xff]
    %v974 = vld [vmem:[#allocation3 + $0xa0] sm:$0xff]
    %v975 = vld [vmem:[#allocation3 + $0xa8] sm:$0xff]
    %v976 = vld [vmem:[#allocation3 + $0xb0] sm:$0xff]
    %v977 = vld [vmem:[#allocation3 + $0xb8] sm:$0xff]
    %v978 = vld [vmem:[#allocation3 + $0xc0] sm:$0xff]
    %v979 = vld [vmem:[#allocation3 + $0xc8] sm:$0xff]
    %v980 = vld [vmem:[#allocation3 + $0xd0] sm:$0xff]
    %v981 = vld [vmem:[#allocation3 + $0xd8] sm:$0xff]
    %v982 = vld [vmem:[#allocation3 + $0xe0] sm:$0xff]
    %v983 = vld [vmem:[#allocation3 + $0xe8] sm:$0xff]
    %v984 = vld [vmem:[#allocation3 + $0xf0] sm:$0xff]
    %v985 = vld [vmem:[#allocation3 + $0xf8] sm:$0xff]
    %v986 = vmul.f32 %v954, 0.1
    %v987 = vmul.f32 %v955, 0.1
    %v988 = vmul.f32 %v956, 0.1
    %v989 = vmul.f32 %v957, 0.1
    %v990 = vmul.f32 %v958, 0.1
    %v991 = vmul.f32 %v959, 0.1
    %v992 = vmul.f32 %v960, 0.1
    %v993 = vmul.f32 %v961, 0.1
    %v994 = vmul.f32 %v962, 0.1
    %v995 = vmul.f32 %v963, 0.1
    %v996 = vmul.f32 %v964, 0.1
    %v997 = vmul.f32 %v965, 0.1
    %v998 = vmul.f32 %v966, 0.1
    %v999 = vmul.f32 %v967, 0.1
    %v1000 = vmul.f32 %v968, 0.1
    %v1001 = vmul.f32 %v969, 0.1
    %v1002 = vmul.f32 %v970, 0.1
    %v1003 = vmul.f32 %v971, 0.1
    %v1004 = vmul.f32 %v972, 0.1
    %v1005 = vmul.f32 %v973, 0.1
    %v1006 = vmul.f32 %v974, 0.1
    %v1007 = vmul.f32 %v975, 0.1
    %v1008 = vmul.f32 %v976, 0.1
    %v1009 = vmul.f32 %v977, 0.1
    %v1010 = vmul.f32 %v978, 0.1
    %v1011 = vmul.f32 %v979, 0.1
    %v1012 = vmul.f32 %v980, 0.1
    %v1013 = vmul.f32 %v981, 0.1
    %v1014 = vmul.f32 %v982, 0.1
    %v1015 = vmul.f32 %v983, 0.1
    %v1016 = vmul.f32 %v984, 0.1
    %v1017 = vmul.f32 %v985, 0.1
    %v1018 = vld [vmem:[#allocation13] sm:$0xff]
    %v1019 = vld [vmem:[#allocation13 + $0x8] sm:$0xff]
    %v1020 = vld [vmem:[#allocation13 + $0x10] sm:$0xff]
    %v1021 = vld [vmem:[#allocation13 + $0x18] sm:$0xff]
    %v1022 = vld [vmem:[#allocation13 + $0x20] sm:$0xff]
    %v1023 = vld [vmem:[#allocation13 + $0x28] sm:$0xff]
    %v1024 = vld [vmem:[#allocation13 + $0x30] sm:$0xff]
    %v1025 = vld [vmem:[#allocation13 + $0x38] sm:$0xff]
    %v1026 = vld [vmem:[#allocation13 + $0x40] sm:$0xff]
    %v1027 = vld [vmem:[#allocation13 + $0x48] sm:$0xff]
    %v1028 = vld [vmem:[#allocation13 + $0x50] sm:$0xff]
    %v1029 = vld [vmem:[#allocation13 + $0x58] sm:$0xff]
    %v1030 = vld [vmem:[#allocation13 + $0x60] sm:$0xff]
    %v1031 = vld [vmem:[#allocation13 + $0x68] sm:$0xff]
    %v1032 = vld [vmem:[#allocation13 + $0x70] sm:$0xff]
    %v1033 = vld [vmem:[#allocation13 + $0x78] sm:$0xff]
    %1034 = vmatprep.subr.mxu0 0.0
    %1035 = vmatpush1.msra.mxu0 %v1033
    %1036 = vmatprep.subr.mxu0 0.0
    %1037 = vmatpush1.msra.mxu0 %v1032
    %1038 = vmatprep.subr.mxu0 0.0
    %1039 = vmatpush1.msra.mxu0 %v1031
    %1040 = vmatprep.subr.mxu0 0.0
    %1041 = vmatpush1.msra.mxu0 %v1030
    %1042 = vmatprep.subr.mxu0 0.0
    %1043 = vmatpush1.msra.mxu0 %v1029
    %1044 = vmatprep.subr.mxu0 0.0
    %1045 = vmatpush1.msra.mxu0 %v1028
    %1046 = vmatprep.subr.mxu0 0.0
    %1047 = vmatpush1.msra.mxu0 %v1027
    %1048 = vmatprep.subr.mxu0 0.0
    %1049 = vmatpush1.msra.mxu0 %v1026
    %1050 = vmatprep.subr.mxu0 0.0
    %1051 = vmatpush1.msra.mxu0 %v1025
    %1052 = vmatprep.subr.mxu0 0.0
    %1053 = vmatpush1.msra.mxu0 %v1024
    %1054 = vmatprep.subr.mxu0 0.0
    %1055 = vmatpush1.msra.mxu0 %v1023
    %1056 = vmatprep.subr.mxu0 0.0
    %1057 = vmatpush1.msra.mxu0 %v1022
    %1058 = vmatprep.subr.mxu0 0.0
    %1059 = vmatpush1.msra.mxu0 %v1021
    %1060 = vmatprep.subr.mxu0 0.0
    %1061 = vmatpush1.msra.mxu0 %v1020
    %1062 = vmatprep.subr.mxu0 0.0
    %1063 = vmatpush1.msra.mxu0 %v1019
    %1064 = vmatprep.subr.mxu0 0.0
    %1065 = vmatpush1.msra.mxu0 %v1018
    %1066 = vmatprep.subr.mxu0 0.0
    %1067 = vmatpush2.msra.mxu0 0.0
    %1068 = vmatprep.subr.mxu0 0.0
    %1069 = vmatpush2.msra.mxu0 0.0
    %1070 = vmatprep.subr.mxu0 0.0
    %1071 = vmatpush2.msra.mxu0 0.0
    %1072 = vmatprep.subr.mxu0 0.0
    %1073 = vmatpush2.msra.mxu0 0.0
    %1074 = vmatprep.subr.mxu0 0.0
    %1075 = vmatpush2.msra.mxu0 0.0
    %1076 = vmatprep.subr.mxu0 0.0
    %1077 = vmatpush2.msra.mxu0 0.0
    %1078 = vmatprep.subr.mxu0 0.0
    %1079 = vmatpush2.msra.mxu0 0.0
    %1080 = vmatprep.subr.mxu0 0.0
    %1081 = vmatpush2.msra.mxu0 0.0
    %1082 = vmatprep.subr.mxu0 0.0
    %1083 = vmatpush2.msra.mxu0 0.0
    %1084 = vmatprep.subr.mxu0 0.0
    %1085 = vmatpush2.msra.mxu0 0.0
    %1086 = vmatprep.subr.mxu0 0.0
    %1087 = vmatpush2.msra.mxu0 0.0
    %1088 = vmatprep.subr.mxu0 0.0
    %1089 = vmatpush2.msra.mxu0 0.0
    %1090 = vmatprep.subr.mxu0 0.0
    %1091 = vmatpush2.msra.mxu0 0.0
    %1092 = vmatprep.subr.mxu0 0.0
    %1093 = vmatpush2.msra.mxu0 0.0
    %1094 = vmatprep.subr.mxu0 0.0
    %1095 = vmatpush2.msra.mxu0 0.0
    %1096 = vmatprep.subr.mxu0 0.0
    %1097 = vmatpush2.msra.mxu0 0.0
    %1098 = vmatprep.mubr.f32.mxu0 0.0
    %1099 = vmatmul.mubr.f32.gmra.mxu0 %v954
    %v1100 = vpop.f32.mrf.mxu0
    %v1101 = vadd.f32 0.0, %v1100
    %v1102 = vpop.f32.mrf.mxu0
    %1103 = vmatprep.mubr.f32.mxu0 0.0
    %1104 = vmatmul.mubr.f32.gmra.mxu0 %v955
    %v1105 = vpop.f32.mrf.mxu0
    %v1106 = vadd.f32 0.0, %v1105
    %v1107 = vpop.f32.mrf.mxu0
    %1108 = vmatprep.mubr.f32.mxu0 0.0
    %1109 = vmatmul.mubr.f32.gmra.mxu0 %v956
    %v1110 = vpop.f32.mrf.mxu0
    %v1111 = vadd.f32 0.0, %v1110
    %v1112 = vpop.f32.mrf.mxu0
    %1113 = vmatprep.mubr.f32.mxu0 0.0
    %1114 = vmatmul.mubr.f32.gmra.mxu0 %v957
    %v1115 = vpop.f32.mrf.mxu0
    %v1116 = vadd.f32 0.0, %v1115
    %v1117 = vpop.f32.mrf.mxu0
    %1118 = vmatprep.mubr.f32.mxu0 0.0
    %1119 = vmatmul.mubr.f32.gmra.mxu0 %v958
    %v1120 = vpop.f32.mrf.mxu0
    %v1121 = vadd.f32 0.0, %v1120
    %v1122 = vpop.f32.mrf.mxu0
    %1123 = vmatprep.mubr.f32.mxu0 0.0
    %1124 = vmatmul.mubr.f32.gmra.mxu0 %v959
    %v1125 = vpop.f32.mrf.mxu0
    %v1126 = vadd.f32 0.0, %v1125
    %v1127 = vpop.f32.mrf.mxu0
    %1128 = vmatprep.mubr.f32.mxu0 0.0
    %1129 = vmatmul.mubr.f32.gmra.mxu0 %v960
    %v1130 = vpop.f32.mrf.mxu0
    %v1131 = vadd.f32 0.0, %v1130
    %v1132 = vpop.f32.mrf.mxu0
    %1133 = vmatprep.mubr.f32.mxu0 0.0
    %1134 = vmatmul.mubr.f32.gmra.mxu0 %v961
    %v1135 = vpop.f32.mrf.mxu0
    %v1136 = vadd.f32 0.0, %v1135
    %v1137 = vpop.f32.mrf.mxu0
    %1138 = vmatprep.mubr.f32.mxu0 0.0
    %1139 = vmatmul.mubr.f32.gmra.mxu0 %v962
    %v1140 = vpop.f32.mrf.mxu0
    %v1141 = vadd.f32 0.0, %v1140
    %v1142 = vpop.f32.mrf.mxu0
    %1143 = vmatprep.mubr.f32.mxu0 0.0
    %1144 = vmatmul.mubr.f32.gmra.mxu0 %v963
    %v1145 = vpop.f32.mrf.mxu0
    %v1146 = vadd.f32 0.0, %v1145
    %v1147 = vpop.f32.mrf.mxu0
    %1148 = vmatprep.mubr.f32.mxu0 0.0
    %1149 = vmatmul.mubr.f32.gmra.mxu0 %v964
    %v1150 = vpop.f32.mrf.mxu0
    %v1151 = vadd.f32 0.0, %v1150
    %v1152 = vpop.f32.mrf.mxu0
    %1153 = vmatprep.mubr.f32.mxu0 0.0
    %1154 = vmatmul.mubr.f32.gmra.mxu0 %v965
    %v1155 = vpop.f32.mrf.mxu0
    %v1156 = vadd.f32 0.0, %v1155
    %v1157 = vpop.f32.mrf.mxu0
    %1158 = vmatprep.mubr.f32.mxu0 0.0
    %1159 = vmatmul.mubr.f32.gmra.mxu0 %v966
    %v1160 = vpop.f32.mrf.mxu0
    %v1161 = vadd.f32 0.0, %v1160
    %v1162 = vpop.f32.mrf.mxu0
    %1163 = vmatprep.mubr.f32.mxu0 0.0
    %1164 = vmatmul.mubr.f32.gmra.mxu0 %v967
    %v1165 = vpop.f32.mrf.mxu0
    %v1166 = vadd.f32 0.0, %v1165
    %v1167 = vpop.f32.mrf.mxu0
    %1168 = vmatprep.mubr.f32.mxu0 0.0
    %1169 = vmatmul.mubr.f32.gmra.mxu0 %v968
    %v1170 = vpop.f32.mrf.mxu0
    %v1171 = vadd.f32 0.0, %v1170
    %v1172 = vpop.f32.mrf.mxu0
    %1173 = vmatprep.mubr.f32.mxu0 0.0
    %1174 = vmatmul.mubr.f32.gmra.mxu0 %v969
    %v1175 = vpop.f32.mrf.mxu0
    %v1176 = vadd.f32 0.0, %v1175
    %v1177 = vpop.f32.mrf.mxu0
    %1178 = vmatprep.mubr.f32.mxu0 0.0
    %1179 = vmatmul.mubr.f32.gmra.mxu0 %v970
    %v1180 = vpop.f32.mrf.mxu0
    %v1181 = vadd.f32 0.0, %v1180
    %v1182 = vpop.f32.mrf.mxu0
    %1183 = vmatprep.mubr.f32.mxu0 0.0
    %1184 = vmatmul.mubr.f32.gmra.mxu0 %v971
    %v1185 = vpop.f32.mrf.mxu0
    %v1186 = vadd.f32 0.0, %v1185
    %v1187 = vpop.f32.mrf.mxu0
    %1188 = vmatprep.mubr.f32.mxu0 0.0
    %1189 = vmatmul.mubr.f32.gmra.mxu0 %v972
    %v1190 = vpop.f32.mrf.mxu0
    %v1191 = vadd.f32 0.0, %v1190
    %v1192 = vpop.f32.mrf.mxu0
    %1193 = vmatprep.mubr.f32.mxu0 0.0
    %1194 = vmatmul.mubr.f32.gmra.mxu0 %v973
    %v1195 = vpop.f32.mrf.mxu0
    %v1196 = vadd.f32 0.0, %v1195
    %v1197 = vpop.f32.mrf.mxu0
    %1198 = vmatprep.mubr.f32.mxu0 0.0
    %1199 = vmatmul.mubr.f32.gmra.mxu0 %v974
    %v1200 = vpop.f32.mrf.mxu0
    %v1201 = vadd.f32 0.0, %v1200
    %v1202 = vpop.f32.mrf.mxu0
    %1203 = vmatprep.mubr.f32.mxu0 0.0
    %1204 = vmatmul.mubr.f32.gmra.mxu0 %v975
    %v1205 = vpop.f32.mrf.mxu0
    %v1206 = vadd.f32 0.0, %v1205
    %v1207 = vpop.f32.mrf.mxu0
    %1208 = vmatprep.mubr.f32.mxu0 0.0
    %1209 = vmatmul.mubr.f32.gmra.mxu0 %v976
    %v1210 = vpop.f32.mrf.mxu0
    %v1211 = vadd.f32 0.0, %v1210
    %v1212 = vpop.f32.mrf.mxu0
    %1213 = vmatprep.mubr.f32.mxu0 0.0
    %1214 = vmatmul.mubr.f32.gmra.mxu0 %v977
    %v1215 = vpop.f32.mrf.mxu0
    %v1216 = vadd.f32 0.0, %v1215
    %v1217 = vpop.f32.mrf.mxu0
    %1218 = vmatprep.mubr.f32.mxu0 0.0
    %1219 = vmatmul.mubr.f32.gmra.mxu0 %v978
    %v1220 = vpop.f32.mrf.mxu0
    %v1221 = vadd.f32 0.0, %v1220
    %v1222 = vpop.f32.mrf.mxu0
    %1223 = vmatprep.mubr.f32.mxu0 0.0
    %1224 = vmatmul.mubr.f32.gmra.mxu0 %v979
    %v1225 = vpop.f32.mrf.mxu0
    %v1226 = vadd.f32 0.0, %v1225
    %v1227 = vpop.f32.mrf.mxu0
    %1228 = vmatprep.mubr.f32.mxu0 0.0
    %1229 = vmatmul.mubr.f32.gmra.mxu0 %v980
    %v1230 = vpop.f32.mrf.mxu0
    %v1231 = vadd.f32 0.0, %v1230
    %v1232 = vpop.f32.mrf.mxu0
    %1233 = vmatprep.mubr.f32.mxu0 0.0
    %1234 = vmatmul.mubr.f32.gmra.mxu0 %v981
    %v1235 = vpop.f32.mrf.mxu0
    %v1236 = vadd.f32 0.0, %v1235
    %v1237 = vpop.f32.mrf.mxu0
    %1238 = vmatprep.mubr.f32.mxu0 0.0
    %1239 = vmatmul.mubr.f32.gmra.mxu0 %v982
    %v1240 = vpop.f32.mrf.mxu0
    %v1241 = vadd.f32 0.0, %v1240
    %v1242 = vpop.f32.mrf.mxu0
    %1243 = vmatprep.mubr.f32.mxu0 0.0
    %1244 = vmatmul.mubr.f32.gmra.mxu0 %v983
    %v1245 = vpop.f32.mrf.mxu0
    %v1246 = vadd.f32 0.0, %v1245
    %v1247 = vpop.f32.mrf.mxu0
    %1248 = vmatprep.mubr.f32.mxu0 0.0
    %1249 = vmatmul.mubr.f32.gmra.mxu0 %v984
    %v1250 = vpop.f32.mrf.mxu0
    %v1251 = vadd.f32 0.0, %v1250
    %v1252 = vpop.f32.mrf.mxu0
    %1253 = vmatprep.mubr.f32.mxu0 0.0
    %1254 = vmatmul.mubr.f32.gmra.mxu0 %v985
    %v1255 = vpop.f32.mrf.mxu0
    %v1256 = vadd.f32 0.0, %v1255
    %v1257 = vpop.f32.mrf.mxu0
    %1258 = vdwg.mxu0
    %v1259 = vadd.f32 %v986, %v1101
    %v1260 = vadd.f32 %v987, %v1106
    %v1261 = vadd.f32 %v988, %v1111
    %v1262 = vadd.f32 %v989, %v1116
    %v1263 = vadd.f32 %v990, %v1121
    %v1264 = vadd.f32 %v991, %v1126
    %v1265 = vadd.f32 %v992, %v1131
    %v1266 = vadd.f32 %v993, %v1136
    %v1267 = vadd.f32 %v994, %v1141
    %v1268 = vadd.f32 %v995, %v1146
    %v1269 = vadd.f32 %v996, %v1151
    %v1270 = vadd.f32 %v997, %v1156
    %v1271 = vadd.f32 %v998, %v1161
    %v1272 = vadd.f32 %v999, %v1166
    %v1273 = vadd.f32 %v1000, %v1171
    %v1274 = vadd.f32 %v1001, %v1176
    %v1275 = vadd.f32 %v1002, %v1181
    %v1276 = vadd.f32 %v1003, %v1186
    %v1277 = vadd.f32 %v1004, %v1191
    %v1278 = vadd.f32 %v1005, %v1196
    %v1279 = vadd.f32 %v1006, %v1201
    %v1280 = vadd.f32 %v1007, %v1206
    %v1281 = vadd.f32 %v1008, %v1211
    %v1282 = vadd.f32 %v1009, %v1216
    %v1283 = vadd.f32 %v1010, %v1221
    %v1284 = vadd.f32 %v1011, %v1226
    %v1285 = vadd.f32 %v1012, %v1231
    %v1286 = vadd.f32 %v1013, %v1236
    %v1287 = vadd.f32 %v1014, %v1241
    %v1288 = vadd.f32 %v1015, %v1246
    %v1289 = vadd.f32 %v1016, %v1251
    %v1290 = vadd.f32 %v1017, %v1256
    %v1291 = vld [vmem:[#allocation8] sm:$0xff]
    %v1292 = vld [vmem:[#allocation8 + $0x8] sm:$0xff]
    %v1293 = vld [vmem:[#allocation8 + $0x10] sm:$0xff]
    %v1294 = vld [vmem:[#allocation8 + $0x18] sm:$0xff]
    %v1295 = vld [vmem:[#allocation8 + $0x20] sm:$0xff]
    %v1296 = vld [vmem:[#allocation8 + $0x28] sm:$0xff]
    %v1297 = vld [vmem:[#allocation8 + $0x30] sm:$0xff]
    %v1298 = vld [vmem:[#allocation8 + $0x38] sm:$0xff]
    %v1299 = vld [vmem:[#allocation8 + $0x40] sm:$0xff]
    %v1300 = vld [vmem:[#allocation8 + $0x48] sm:$0xff]
    %v1301 = vld [vmem:[#allocation8 + $0x50] sm:$0xff]
    %v1302 = vld [vmem:[#allocation8 + $0x58] sm:$0xff]
    %v1303 = vld [vmem:[#allocation8 + $0x60] sm:$0xff]
    %v1304 = vld [vmem:[#allocation8 + $0x68] sm:$0xff]
    %v1305 = vld [vmem:[#allocation8 + $0x70] sm:$0xff]
    %v1306 = vld [vmem:[#allocation8 + $0x78] sm:$0xff]
    %v1307 = vld [vmem:[#allocation8 + $0x80] sm:$0xff]
    %v1308 = vld [vmem:[#allocation8 + $0x88] sm:$0xff]
    %v1309 = vld [vmem:[#allocation8 + $0x90] sm:$0xff]
    %v1310 = vld [vmem:[#allocation8 + $0x98] sm:$0xff]
    %v1311 = vld [vmem:[#allocation8 + $0xa0] sm:$0xff]
    %v1312 = vld [vmem:[#allocation8 + $0xa8] sm:$0xff]
    %v1313 = vld [vmem:[#allocation8 + $0xb0] sm:$0xff]
    %v1314 = vld [vmem:[#allocation8 + $0xb8] sm:$0xff]
    %v1315 = vld [vmem:[#allocation8 + $0xc0] sm:$0xff]
    %v1316 = vld [vmem:[#allocation8 + $0xc8] sm:$0xff]
    %v1317 = vld [vmem:[#allocation8 + $0xd0] sm:$0xff]
    %v1318 = vld [vmem:[#allocation8 + $0xd8] sm:$0xff]
    %v1319 = vld [vmem:[#allocation8 + $0xe0] sm:$0xff]
    %v1320 = vld [vmem:[#allocation8 + $0xe8] sm:$0xff]
    %v1321 = vld [vmem:[#allocation8 + $0xf0] sm:$0xff]
    %v1322 = vld [vmem:[#allocation8 + $0xf8] sm:$0xff]
    %v1323 = vld [vmem:[#allocation4] sm:$0xf]
    %v1324 = vld [vmem:[#allocation4 + $0x4] sm:$0xf]
    %v1325 = vld [vmem:[#allocation4 + $0x8] sm:$0xf]
    %v1326 = vld [vmem:[#allocation4 + $0xc] sm:$0xf]
    %v1327 = vld [vmem:[#allocation4 + $0x10] sm:$0xf]
    %v1328 = vld [vmem:[#allocation4 + $0x14] sm:$0xf]
    %v1329 = vld [vmem:[#allocation4 + $0x18] sm:$0xf]
    %v1330 = vld [vmem:[#allocation4 + $0x1c] sm:$0xf]
    %v1331 = vld [vmem:[#allocation4 + $0x20] sm:$0xf]
    %v1332 = vld [vmem:[#allocation4 + $0x24] sm:$0xf]
    %v1333 = vld [vmem:[#allocation4 + $0x28] sm:$0xf]
    %v1334 = vld [vmem:[#allocation4 + $0x2c] sm:$0xf]
    %v1335 = vld [vmem:[#allocation4 + $0x30] sm:$0xf]
    %v1336 = vld [vmem:[#allocation4 + $0x34] sm:$0xf]
    %v1337 = vld [vmem:[#allocation4 + $0x38] sm:$0xf]
    %v1338 = vld [vmem:[#allocation4 + $0x3c] sm:$0xf]
    %v1339 = vld [vmem:[#allocation4 + $0x40] sm:$0xf]
    %v1340 = vld [vmem:[#allocation4 + $0x44] sm:$0xf]
    %v1341 = vld [vmem:[#allocation4 + $0x48] sm:$0xf]
    %v1342 = vld [vmem:[#allocation4 + $0x4c] sm:$0xf]
    %v1343 = vld [vmem:[#allocation4 + $0x50] sm:$0xf]
    %v1344 = vld [vmem:[#allocation4 + $0x54] sm:$0xf]
    %v1345 = vld [vmem:[#allocation4 + $0x58] sm:$0xf]
    %v1346 = vld [vmem:[#allocation4 + $0x5c] sm:$0xf]
    %v1347 = vld [vmem:[#allocation4 + $0x60] sm:$0xf]
    %v1348 = vld [vmem:[#allocation4 + $0x64] sm:$0xf]
    %v1349 = vld [vmem:[#allocation4 + $0x68] sm:$0xf]
    %v1350 = vld [vmem:[#allocation4 + $0x6c] sm:$0xf]
    %v1351 = vld [vmem:[#allocation4 + $0x70] sm:$0xf]
    %v1352 = vld [vmem:[#allocation4 + $0x74] sm:$0xf]
    %v1353 = vld [vmem:[#allocation4 + $0x78] sm:$0xf]
    %v1354 = vld [vmem:[#allocation4 + $0x7c] sm:$0xf]
    %v1387 = vunpack.c.l.b16 %v1291
    %v1388 = vunpack.c.h.b16 %v1291
    %v1389 = vunpack.c.l.b16 %v1292
    %v1390 = vunpack.c.h.b16 %v1292
    %v1391 = vunpack.c.l.b16 %v1293
    %v1392 = vunpack.c.h.b16 %v1293
    %v1393 = vunpack.c.l.b16 %v1294
    %v1394 = vunpack.c.h.b16 %v1294
    %v1395 = vunpack.c.l.b16 %v1295
    %v1396 = vunpack.c.h.b16 %v1295
    %v1397 = vunpack.c.l.b16 %v1296
    %v1398 = vunpack.c.h.b16 %v1296
    %v1399 = vunpack.c.l.b16 %v1297
    %v1400 = vunpack.c.h.b16 %v1297
    %v1401 = vunpack.c.l.b16 %v1298
    %v1402 = vunpack.c.h.b16 %v1298
    %v1403 = vunpack.c.l.b16 %v1299
    %v1404 = vunpack.c.h.b16 %v1299
    %v1405 = vunpack.c.l.b16 %v1300
    %v1406 = vunpack.c.h.b16 %v1300
    %v1407 = vunpack.c.l.b16 %v1301
    %v1408 = vunpack.c.h.b16 %v1301
    %v1409 = vunpack.c.l.b16 %v1302
    %v1410 = vunpack.c.h.b16 %v1302
    %v1411 = vunpack.c.l.b16 %v1303
    %v1412 = vunpack.c.h.b16 %v1303
    %v1413 = vunpack.c.l.b16 %v1304
    %v1414 = vunpack.c.h.b16 %v1304
    %v1415 = vunpack.c.l.b16 %v1305
    %v1416 = vunpack.c.h.b16 %v1305
    %v1417 = vunpack.c.l.b16 %v1306
    %v1418 = vunpack.c.h.b16 %v1306
    %v1419 = vunpack.c.l.b16 %v1307
    %v1420 = vunpack.c.h.b16 %v1307
    %v1421 = vunpack.c.l.b16 %v1308
    %v1422 = vunpack.c.h.b16 %v1308
    %v1423 = vunpack.c.l.b16 %v1309
    %v1424 = vunpack.c.h.b16 %v1309
    %v1425 = vunpack.c.l.b16 %v1310
    %v1426 = vunpack.c.h.b16 %v1310
    %v1427 = vunpack.c.l.b16 %v1311
    %v1428 = vunpack.c.h.b16 %v1311
    %v1429 = vunpack.c.l.b16 %v1312
    %v1430 = vunpack.c.h.b16 %v1312
    %v1431 = vunpack.c.l.b16 %v1313
    %v1432 = vunpack.c.h.b16 %v1313
    %v1433 = vunpack.c.l.b16 %v1314
    %v1434 = vunpack.c.h.b16 %v1314
    %v1435 = vunpack.c.l.b16 %v1315
    %v1436 = vunpack.c.h.b16 %v1315
    %v1437 = vunpack.c.l.b16 %v1316
    %v1438 = vunpack.c.h.b16 %v1316
    %v1439 = vunpack.c.l.b16 %v1317
    %v1440 = vunpack.c.h.b16 %v1317
    %v1441 = vunpack.c.l.b16 %v1318
    %v1442 = vunpack.c.h.b16 %v1318
    %v1443 = vunpack.c.l.b16 %v1319
    %v1444 = vunpack.c.h.b16 %v1319
    %v1445 = vunpack.c.l.b16 %v1320
    %v1446 = vunpack.c.h.b16 %v1320
    %v1447 = vunpack.c.l.b16 %v1321
    %v1448 = vunpack.c.h.b16 %v1321
    %v1449 = vunpack.c.l.b16 %v1322
    %v1450 = vunpack.c.h.b16 %v1322
    %v1451 = vpack.c.b16 %v1389, %v1387
    %v1452 = vpack.c.b16 %v1390, %v1388
    %v1453 = vpack.c.b16 %v1393, %v1391
    %v1454 = vpack.c.b16 %v1394, %v1392
    %v1455 = vpack.c.b16 %v1397, %v1395
    %v1456 = vpack.c.b16 %v1398, %v1396
    %v1457 = vpack.c.b16 %v1401, %v1399
    %v1458 = vpack.c.b16 %v1402, %v1400
    %v1459 = vpack.c.b16 %v1405, %v1403
    %v1460 = vpack.c.b16 %v1406, %v1404
    %v1461 = vpack.c.b16 %v1409, %v1407
    %v1462 = vpack.c.b16 %v1410, %v1408
    %v1463 = vpack.c.b16 %v1413, %v1411
    %v1464 = vpack.c.b16 %v1414, %v1412
    %v1465 = vpack.c.b16 %v1417, %v1415
    %v1466 = vpack.c.b16 %v1418, %v1416
    %v1467 = vpack.c.b16 %v1421, %v1419
    %v1468 = vpack.c.b16 %v1422, %v1420
    %v1469 = vpack.c.b16 %v1425, %v1423
    %v1470 = vpack.c.b16 %v1426, %v1424
    %v1471 = vpack.c.b16 %v1429, %v1427
    %v1472 = vpack.c.b16 %v1430, %v1428
    %v1473 = vpack.c.b16 %v1433, %v1431
    %v1474 = vpack.c.b16 %v1434, %v1432
    %v1475 = vpack.c.b16 %v1437, %v1435
    %v1476 = vpack.c.b16 %v1438, %v1436
    %v1477 = vpack.c.b16 %v1441, %v1439
    %v1478 = vpack.c.b16 %v1442, %v1440
    %v1479 = vpack.c.b16 %v1445, %v1443
    %v1480 = vpack.c.b16 %v1446, %v1444
    %v1481 = vpack.c.b16 %v1449, %v1447
    %v1482 = vpack.c.b16 %v1450, %v1448
    %v1547 = vunpack.c.l.b16 %v1323
    %v1548 = vunpack.c.l.b16 %v1324
    %v1549 = vunpack.c.l.b16 %v1325
    %v1550 = vunpack.c.l.b16 %v1326
    %v1551 = vunpack.c.l.b16 %v1327
    %v1552 = vunpack.c.l.b16 %v1328
    %v1553 = vunpack.c.l.b16 %v1329
    %v1554 = vunpack.c.l.b16 %v1330
    %v1555 = vunpack.c.l.b16 %v1331
    %v1556 = vunpack.c.l.b16 %v1332
    %v1557 = vunpack.c.l.b16 %v1333
    %v1558 = vunpack.c.l.b16 %v1334
    %v1559 = vunpack.c.l.b16 %v1335
    %v1560 = vunpack.c.l.b16 %v1336
    %v1561 = vunpack.c.l.b16 %v1337
    %v1562 = vunpack.c.l.b16 %v1338
    %v1563 = vunpack.c.l.b16 %v1339
    %v1564 = vunpack.c.l.b16 %v1340
    %v1565 = vunpack.c.l.b16 %v1341
    %v1566 = vunpack.c.l.b16 %v1342
    %v1567 = vunpack.c.l.b16 %v1343
    %v1568 = vunpack.c.l.b16 %v1344
    %v1569 = vunpack.c.l.b16 %v1345
    %v1570 = vunpack.c.l.b16 %v1346
    %v1571 = vunpack.c.l.b16 %v1347
    %v1572 = vunpack.c.l.b16 %v1348
    %v1573 = vunpack.c.l.b16 %v1349
    %v1574 = vunpack.c.l.b16 %v1350
    %v1575 = vunpack.c.l.b16 %v1351
    %v1576 = vunpack.c.l.b16 %v1352
    %v1577 = vunpack.c.l.b16 %v1353
    %v1578 = vunpack.c.l.b16 %v1354
    %v1579 = vpack.c.b16 %v1548, %v1547
    %v1580 = vpack.c.b16 %v1550, %v1549
    %v1581 = vpack.c.b16 %v1552, %v1551
    %v1582 = vpack.c.b16 %v1554, %v1553
    %v1583 = vpack.c.b16 %v1556, %v1555
    %v1584 = vpack.c.b16 %v1558, %v1557
    %v1585 = vpack.c.b16 %v1560, %v1559
    %v1586 = vpack.c.b16 %v1562, %v1561
    %v1587 = vpack.c.b16 %v1564, %v1563
    %v1588 = vpack.c.b16 %v1566, %v1565
    %v1589 = vpack.c.b16 %v1568, %v1567
    %v1590 = vpack.c.b16 %v1570, %v1569
    %v1591 = vpack.c.b16 %v1572, %v1571
    %v1592 = vpack.c.b16 %v1574, %v1573
    %v1593 = vpack.c.b16 %v1576, %v1575
    %v1594 = vpack.c.b16 %v1578, %v1577
    %1611 = vmatprep.subr.bf16.mxu0 0
    %1612 = vmatpush1.bf16.msra.mxu0 %v1586
    %1613 = vmatprep.subr.bf16.mxu0 0
    %1614 = vmatpush1.bf16.msra.mxu0 %v1585
    %1615 = vmatprep.subr.bf16.mxu0 0
    %1616 = vmatpush1.bf16.msra.mxu0 %v1584
    %1617 = vmatprep.subr.bf16.mxu0 0
    %1618 = vmatpush1.bf16.msra.mxu0 %v1583
    %1619 = vmatprep.subr.bf16.mxu0 0
    %1620 = vmatpush1.bf16.msra.mxu0 %v1582
    %1621 = vmatprep.subr.bf16.mxu0 0
    %1622 = vmatpush1.bf16.msra.mxu0 %v1581
    %1623 = vmatprep.subr.bf16.mxu0 0
    %1624 = vmatpush1.bf16.msra.mxu0 %v1580
    %1625 = vmatprep.subr.bf16.mxu0 0
    %1626 = vmatpush1.bf16.msra.mxu0 %v1579
    %1627 = vmatprep.subr.bf16.mxu0 0
    %1628 = vmatpush2.bf16.msra.mxu0 %v1594
    %1629 = vmatprep.subr.bf16.mxu0 0
    %1630 = vmatpush2.bf16.msra.mxu0 %v1593
    %1631 = vmatprep.subr.bf16.mxu0 0
    %1632 = vmatpush2.bf16.msra.mxu0 %v1592
    %1633 = vmatprep.subr.bf16.mxu0 0
    %1634 = vmatpush2.bf16.msra.mxu0 %v1591
    %1635 = vmatprep.subr.bf16.mxu0 0
    %1636 = vmatpush2.bf16.msra.mxu0 %v1590
    %1637 = vmatprep.subr.bf16.mxu0 0
    %1638 = vmatpush2.bf16.msra.mxu0 %v1589
    %1639 = vmatprep.subr.bf16.mxu0 0
    %1640 = vmatpush2.bf16.msra.mxu0 %v1588
    %1641 = vmatprep.subr.bf16.mxu0 0
    %1642 = vmatpush2.bf16.msra.mxu0 %v1587
    %1643 = vmatprep.mubr.bf16.mxu0 %v1452
    %1644 = vmatmul.mubr.bf16.gmra.mxu0 %v1451
    %v1645 = vpop.f32.mrf.mxu0
    %v1646 = vadd.f32 %v1259, %v1645
    %v1647 = vpop.f32.mrf.mxu0
    %v1648 = vpop.f32.mrf.mxu0
    %v1649 = vadd.f32 %v1260, %v1648
    %v1650 = vpop.f32.mrf.mxu0
    %1651 = vmatprep.mubr.bf16.mxu0 %v1454
    %1652 = vmatmul.mubr.bf16.gmra.mxu0 %v1453
    %v1653 = vpop.f32.mrf.mxu0
    %v1654 = vadd.f32 %v1261, %v1653
    %v1655 = vpop.f32.mrf.mxu0
    %v1656 = vpop.f32.mrf.mxu0
    %v1657 = vadd.f32 %v1262, %v1656
    %v1658 = vpop.f32.mrf.mxu0
    %1659 = vmatprep.mubr.bf16.mxu0 %v1456
    %1660 = vmatmul.mubr.bf16.gmra.mxu0 %v1455
    %v1661 = vpop.f32.mrf.mxu0
    %v1662 = vadd.f32 %v1263, %v1661
    %v1663 = vpop.f32.mrf.mxu0
    %v1664 = vpop.f32.mrf.mxu0
    %v1665 = vadd.f32 %v1264, %v1664
    %v1666 = vpop.f32.mrf.mxu0
    %1667 = vmatprep.mubr.bf16.mxu0 %v1458
    %1668 = vmatmul.mubr.bf16.gmra.mxu0 %v1457
    %v1669 = vpop.f32.mrf.mxu0
    %v1670 = vadd.f32 %v1265, %v1669
    %v1671 = vpop.f32.mrf.mxu0
    %v1672 = vpop.f32.mrf.mxu0
    %v1673 = vadd.f32 %v1266, %v1672
    %v1674 = vpop.f32.mrf.mxu0
    %1675 = vmatprep.mubr.bf16.mxu0 %v1460
    %1676 = vmatmul.mubr.bf16.gmra.mxu0 %v1459
    %v1677 = vpop.f32.mrf.mxu0
    %v1678 = vadd.f32 %v1267, %v1677
    %v1679 = vpop.f32.mrf.mxu0
    %v1680 = vpop.f32.mrf.mxu0
    %v1681 = vadd.f32 %v1268, %v1680
    %v1682 = vpop.f32.mrf.mxu0
    %1683 = vmatprep.mubr.bf16.mxu0 %v1462
    %1684 = vmatmul.mubr.bf16.gmra.mxu0 %v1461
    %v1685 = vpop.f32.mrf.mxu0
    %v1686 = vadd.f32 %v1269, %v1685
    %v1687 = vpop.f32.mrf.mxu0
    %v1688 = vpop.f32.mrf.mxu0
    %v1689 = vadd.f32 %v1270, %v1688
    %v1690 = vpop.f32.mrf.mxu0
    %1691 = vmatprep.mubr.bf16.mxu0 %v1464
    %1692 = vmatmul.mubr.bf16.gmra.mxu0 %v1463
    %v1693 = vpop.f32.mrf.mxu0
    %v1694 = vadd.f32 %v1271, %v1693
    %v1695 = vpop.f32.mrf.mxu0
    %v1696 = vpop.f32.mrf.mxu0
    %v1697 = vadd.f32 %v1272, %v1696
    %v1698 = vpop.f32.mrf.mxu0
    %1699 = vmatprep.mubr.bf16.mxu0 %v1466
    %1700 = vmatmul.mubr.bf16.gmra.mxu0 %v1465
    %v1701 = vpop.f32.mrf.mxu0
    %v1702 = vadd.f32 %v1273, %v1701
    %v1703 = vpop.f32.mrf.mxu0
    %v1704 = vpop.f32.mrf.mxu0
    %v1705 = vadd.f32 %v1274, %v1704
    %v1706 = vpop.f32.mrf.mxu0
    %1707 = vmatprep.mubr.bf16.mxu0 %v1468
    %1708 = vmatmul.mubr.bf16.gmra.mxu0 %v1467
    %v1709 = vpop.f32.mrf.mxu0
    %v1710 = vadd.f32 %v1275, %v1709
    %v1711 = vpop.f32.mrf.mxu0
    %v1712 = vpop.f32.mrf.mxu0
    %v1713 = vadd.f32 %v1276, %v1712
    %v1714 = vpop.f32.mrf.mxu0
    %1715 = vmatprep.mubr.bf16.mxu0 %v1470
    %1716 = vmatmul.mubr.bf16.gmra.mxu0 %v1469
    %v1717 = vpop.f32.mrf.mxu0
    %v1718 = vadd.f32 %v1277, %v1717
    %v1719 = vpop.f32.mrf.mxu0
    %v1720 = vpop.f32.mrf.mxu0
    %v1721 = vadd.f32 %v1278, %v1720
    %v1722 = vpop.f32.mrf.mxu0
    %1723 = vmatprep.mubr.bf16.mxu0 %v1472
    %1724 = vmatmul.mubr.bf16.gmra.mxu0 %v1471
    %v1725 = vpop.f32.mrf.mxu0
    %v1726 = vadd.f32 %v1279, %v1725
    %v1727 = vpop.f32.mrf.mxu0
    %v1728 = vpop.f32.mrf.mxu0
    %v1729 = vadd.f32 %v1280, %v1728
    %v1730 = vpop.f32.mrf.mxu0
    %1731 = vmatprep.mubr.bf16.mxu0 %v1474
    %1732 = vmatmul.mubr.bf16.gmra.mxu0 %v1473
    %v1733 = vpop.f32.mrf.mxu0
    %v1734 = vadd.f32 %v1281, %v1733
    %v1735 = vpop.f32.mrf.mxu0
    %v1736 = vpop.f32.mrf.mxu0
    %v1737 = vadd.f32 %v1282, %v1736
    %v1738 = vpop.f32.mrf.mxu0
    %1739 = vmatprep.mubr.bf16.mxu0 %v1476
    %1740 = vmatmul.mubr.bf16.gmra.mxu0 %v1475
    %v1741 = vpop.f32.mrf.mxu0
    %v1742 = vadd.f32 %v1283, %v1741
    %v1743 = vpop.f32.mrf.mxu0
    %v1744 = vpop.f32.mrf.mxu0
    %v1745 = vadd.f32 %v1284, %v1744
    %v1746 = vpop.f32.mrf.mxu0
    %1747 = vmatprep.mubr.bf16.mxu0 %v1478
    %1748 = vmatmul.mubr.bf16.gmra.mxu0 %v1477
    %v1749 = vpop.f32.mrf.mxu0
    %v1750 = vadd.f32 %v1285, %v1749
    %v1751 = vpop.f32.mrf.mxu0
    %v1752 = vpop.f32.mrf.mxu0
    %v1753 = vadd.f32 %v1286, %v1752
    %v1754 = vpop.f32.mrf.mxu0
    %1755 = vmatprep.mubr.bf16.mxu0 %v1480
    %1756 = vmatmul.mubr.bf16.gmra.mxu0 %v1479
    %v1757 = vpop.f32.mrf.mxu0
    %v1758 = vadd.f32 %v1287, %v1757
    %v1759 = vpop.f32.mrf.mxu0
    %v1760 = vpop.f32.mrf.mxu0
    %v1761 = vadd.f32 %v1288, %v1760
    %v1762 = vpop.f32.mrf.mxu0
    %1763 = vmatprep.mubr.bf16.mxu0 %v1482
    %1764 = vmatmul.mubr.bf16.gmra.mxu0 %v1481
    %v1765 = vpop.f32.mrf.mxu0
    %v1766 = vadd.f32 %v1289, %v1765
    %v1767 = vpop.f32.mrf.mxu0
    %v1768 = vpop.f32.mrf.mxu0
    %v1769 = vadd.f32 %v1290, %v1768
    %v1770 = vpop.f32.mrf.mxu0
    %1771 = vdwg.mxu0
    %v1772 = vmul.f32 %v1646, 0.999995
    %v1773 = vmul.f32 %v1649, 0.999995
    %v1774 = vmul.f32 %v1654, 0.999995
    %v1775 = vmul.f32 %v1657, 0.999995
    %v1776 = vmul.f32 %v1662, 0.999995
    %v1777 = vmul.f32 %v1665, 0.999995
    %v1778 = vmul.f32 %v1670, 0.999995
    %v1779 = vmul.f32 %v1673, 0.999995
    %v1780 = vmul.f32 %v1678, 0.999995
    %v1781 = vmul.f32 %v1681, 0.999995
    %v1782 = vmul.f32 %v1686, 0.999995
    %v1783 = vmul.f32 %v1689, 0.999995
    %v1784 = vmul.f32 %v1694, 0.999995
    %v1785 = vmul.f32 %v1697, 0.999995
    %v1786 = vmul.f32 %v1702, 0.999995
    %v1787 = vmul.f32 %v1705, 0.999995
    %v1788 = vmul.f32 %v1710, 0.999995
    %v1789 = vmul.f32 %v1713, 0.999995
    %v1790 = vmul.f32 %v1718, 0.999995
    %v1791 = vmul.f32 %v1721, 0.999995
    %v1792 = vmul.f32 %v1726, 0.999995
    %v1793 = vmul.f32 %v1729, 0.999995
    %v1794 = vmul.f32 %v1734, 0.999995
    %v1795 = vmul.f32 %v1737, 0.999995
    %v1796 = vmul.f32 %v1742, 0.999995
    %v1797 = vmul.f32 %v1745, 0.999995
    %v1798 = vmul.f32 %v1750, 0.999995
    %v1799 = vmul.f32 %v1753, 0.999995
    %v1800 = vmul.f32 %v1758, 0.999995
    %v1801 = vmul.f32 %v1761, 0.999995
    %v1802 = vmul.f32 %v1766, 0.999995
    %v1803 = vmul.f32 %v1769, 0.999995
    %v1804 = vmax.f32 %v1772, 0.0
    %v1805 = vmax.f32 %v1773, 0.0
    %v1806 = vmax.f32 %v1774, 0.0
    %v1807 = vmax.f32 %v1775, 0.0
    %v1808 = vmax.f32 %v1776, 0.0
    %v1809 = vmax.f32 %v1777, 0.0
    %v1810 = vmax.f32 %v1778, 0.0
    %v1811 = vmax.f32 %v1779, 0.0
    %v1812 = vmax.f32 %v1780, 0.0
    %v1813 = vmax.f32 %v1781, 0.0
    %v1814 = vmax.f32 %v1782, 0.0
    %v1815 = vmax.f32 %v1783, 0.0
    %v1816 = vmax.f32 %v1784, 0.0
    %v1817 = vmax.f32 %v1785, 0.0
    %v1818 = vmax.f32 %v1786, 0.0
    %v1819 = vmax.f32 %v1787, 0.0
    %v1820 = vmax.f32 %v1788, 0.0
    %v1821 = vmax.f32 %v1789, 0.0
    %v1822 = vmax.f32 %v1790, 0.0
    %v1823 = vmax.f32 %v1791, 0.0
    %v1824 = vmax.f32 %v1792, 0.0
    %v1825 = vmax.f32 %v1793, 0.0
    %v1826 = vmax.f32 %v1794, 0.0
    %v1827 = vmax.f32 %v1795, 0.0
    %v1828 = vmax.f32 %v1796, 0.0
    %v1829 = vmax.f32 %v1797, 0.0
    %v1830 = vmax.f32 %v1798, 0.0
    %v1831 = vmax.f32 %v1799, 0.0
    %v1832 = vmax.f32 %v1800, 0.0
    %v1833 = vmax.f32 %v1801, 0.0
    %v1834 = vmax.f32 %v1802, 0.0
    %v1835 = vmax.f32 %v1803, 0.0
    %v1836 = vadd.f32 %v1804, %v489
    %v1837 = vadd.f32 %v1805, %v490
    %v1838 = vadd.f32 %v1806, %v491
    %v1839 = vadd.f32 %v1807, %v492
    %v1840 = vadd.f32 %v1808, %v493
    %v1841 = vadd.f32 %v1809, %v494
    %v1842 = vadd.f32 %v1810, %v495
    %v1843 = vadd.f32 %v1811, %v496
    %v1844 = vadd.f32 %v1812, %v497
    %v1845 = vadd.f32 %v1813, %v498
    %v1846 = vadd.f32 %v1814, %v499
    %v1847 = vadd.f32 %v1815, %v500
    %v1848 = vadd.f32 %v1816, %v501
    %v1849 = vadd.f32 %v1817, %v502
    %v1850 = vadd.f32 %v1818, %v503
    %v1851 = vadd.f32 %v1819, %v504
    %v1852 = vadd.f32 %v1820, %v505
    %v1853 = vadd.f32 %v1821, %v506
    %v1854 = vadd.f32 %v1822, %v507
    %v1855 = vadd.f32 %v1823, %v508
    %v1856 = vadd.f32 %v1824, %v509
    %v1857 = vadd.f32 %v1825, %v510
    %v1858 = vadd.f32 %v1826, %v511
    %v1859 = vadd.f32 %v1827, %v512
    %v1860 = vadd.f32 %v1828, %v513
    %v1861 = vadd.f32 %v1829, %v514
    %v1862 = vadd.f32 %v1830, %v515
    %v1863 = vadd.f32 %v1831, %v516
    %v1864 = vadd.f32 %v1832, %v517
    %v1865 = vadd.f32 %v1833, %v518
    %v1866 = vadd.f32 %v1834, %v519
    %v1867 = vadd.f32 %v1835, %v520
    %1868 = vst [vmem:[#allocation2] sm:$0xff] %v1836
    %1869 = vst [vmem:[#allocation2 + $0x8] sm:$0xff] %v1837
    %1870 = vst [vmem:[#allocation2 + $0x10] sm:$0xff] %v1838
    %1871 = vst [vmem:[#allocation2 + $0x18] sm:$0xff] %v1839
    %1872 = vst [vmem:[#allocation2 + $0x20] sm:$0xff] %v1840
    %1873 = vst [vmem:[#allocation2 + $0x28] sm:$0xff] %v1841
    %1874 = vst [vmem:[#allocation2 + $0x30] sm:$0xff] %v1842
    %1875 = vst [vmem:[#allocation2 + $0x38] sm:$0xff] %v1843
    %1876 = vst [vmem:[#allocation2 + $0x40] sm:$0xff] %v1844
    %1877 = vst [vmem:[#allocation2 + $0x48] sm:$0xff] %v1845
    %1878 = vst [vmem:[#allocation2 + $0x50] sm:$0xff] %v1846
    %1879 = vst [vmem:[#allocation2 + $0x58] sm:$0xff] %v1847
    %1880 = vst [vmem:[#allocation2 + $0x60] sm:$0xff] %v1848
    %1881 = vst [vmem:[#allocation2 + $0x68] sm:$0xff] %v1849
    %1882 = vst [vmem:[#allocation2 + $0x70] sm:$0xff] %v1850
    %1883 = vst [vmem:[#allocation2 + $0x78] sm:$0xff] %v1851
    %1884 = vst [vmem:[#allocation2 + $0x80] sm:$0xff] %v1852
    %1885 = vst [vmem:[#allocation2 + $0x88] sm:$0xff] %v1853
    %1886 = vst [vmem:[#allocation2 + $0x90] sm:$0xff] %v1854
    %1887 = vst [vmem:[#allocation2 + $0x98] sm:$0xff] %v1855
    %1888 = vst [vmem:[#allocation2 + $0xa0] sm:$0xff] %v1856
    %1889 = vst [vmem:[#allocation2 + $0xa8] sm:$0xff] %v1857
    %1890 = vst [vmem:[#allocation2 + $0xb0] sm:$0xff] %v1858
    %1891 = vst [vmem:[#allocation2 + $0xb8] sm:$0xff] %v1859
    %1892 = vst [vmem:[#allocation2 + $0xc0] sm:$0xff] %v1860
    %1893 = vst [vmem:[#allocation2 + $0xc8] sm:$0xff] %v1861
    %1894 = vst [vmem:[#allocation2 + $0xd0] sm:$0xff] %v1862
    %1895 = vst [vmem:[#allocation2 + $0xd8] sm:$0xff] %v1863
    %1896 = vst [vmem:[#allocation2 + $0xe0] sm:$0xff] %v1864
    %1897 = vst [vmem:[#allocation2 + $0xe8] sm:$0xff] %v1865
    %1898 = vst [vmem:[#allocation2 + $0xf0] sm:$0xff] %v1866
    %1899 = vst [vmem:[#allocation2 + $0xf8] sm:$0xff] %v1867
    %v1900 = vld [vmem:[#allocation2] sm:$0xff]
    %v1901 = vld [vmem:[#allocation2 + $0x8] sm:$0xff]
    %v1902 = vld [vmem:[#allocation2 + $0x10] sm:$0xff]
    %v1903 = vld [vmem:[#allocation2 + $0x18] sm:$0xff]
    %v1904 = vld [vmem:[#allocation2 + $0x20] sm:$0xff]
    %v1905 = vld [vmem:[#allocation2 + $0x28] sm:$0xff]
    %v1906 = vld [vmem:[#allocation2 + $0x30] sm:$0xff]
    %v1907 = vld [vmem:[#allocation2 + $0x38] sm:$0xff]
    %v1908 = vld [vmem:[#allocation2 + $0x40] sm:$0xff]
    %v1909 = vld [vmem:[#allocation2 + $0x48] sm:$0xff]
    %v1910 = vld [vmem:[#allocation2 + $0x50] sm:$0xff]
    %v1911 = vld [vmem:[#allocation2 + $0x58] sm:$0xff]
    %v1912 = vld [vmem:[#allocation2 + $0x60] sm:$0xff]
    %v1913 = vld [vmem:[#allocation2 + $0x68] sm:$0xff]
    %v1914 = vld [vmem:[#allocation2 + $0x70] sm:$0xff]
    %v1915 = vld [vmem:[#allocation2 + $0x78] sm:$0xff]
    %v1916 = vld [vmem:[#allocation2 + $0x80] sm:$0xff]
    %v1917 = vld [vmem:[#allocation2 + $0x88] sm:$0xff]
    %v1918 = vld [vmem:[#allocation2 + $0x90] sm:$0xff]
    %v1919 = vld [vmem:[#allocation2 + $0x98] sm:$0xff]
    %v1920 = vld [vmem:[#allocation2 + $0xa0] sm:$0xff]
    %v1921 = vld [vmem:[#allocation2 + $0xa8] sm:$0xff]
    %v1922 = vld [vmem:[#allocation2 + $0xb0] sm:$0xff]
    %v1923 = vld [vmem:[#allocation2 + $0xb8] sm:$0xff]
    %v1924 = vld [vmem:[#allocation2 + $0xc0] sm:$0xff]
    %v1925 = vld [vmem:[#allocation2 + $0xc8] sm:$0xff]
    %v1926 = vld [vmem:[#allocation2 + $0xd0] sm:$0xff]
    %v1927 = vld [vmem:[#allocation2 + $0xd8] sm:$0xff]
    %v1928 = vld [vmem:[#allocation2 + $0xe0] sm:$0xff]
    %v1929 = vld [vmem:[#allocation2 + $0xe8] sm:$0xff]
    %v1930 = vld [vmem:[#allocation2 + $0xf0] sm:$0xff]
    %v1931 = vld [vmem:[#allocation2 + $0xf8] sm:$0xff]
    %s1932 = scalar_lea.vmem [#allocation11], 128
    %v1933 = vld [vmem:[%s1932] sm:$0xff]
    %v1934 = vld [vmem:[%s1932 + $0x8] sm:$0xff]
    %v1935 = vld [vmem:[%s1932 + $0x10] sm:$0xff]
    %v1936 = vld [vmem:[%s1932 + $0x18] sm:$0xff]
    %v1937 = vld [vmem:[%s1932 + $0x20] sm:$0xff]
    %v1938 = vld [vmem:[%s1932 + $0x28] sm:$0xff]
    %v1939 = vld [vmem:[%s1932 + $0x30] sm:$0xff]
    %v1940 = vld [vmem:[%s1932 + $0x38] sm:$0xff]
    %v1941 = vld [vmem:[%s1932 + $0x40] sm:$0xff]
    %v1942 = vld [vmem:[%s1932 + $0x48] sm:$0xff]
    %v1943 = vld [vmem:[%s1932 + $0x50] sm:$0xff]
    %v1944 = vld [vmem:[%s1932 + $0x58] sm:$0xff]
    %v1945 = vld [vmem:[%s1932 + $0x60] sm:$0xff]
    %v1946 = vld [vmem:[%s1932 + $0x68] sm:$0xff]
    %v1947 = vld [vmem:[%s1932 + $0x70] sm:$0xff]
    %v1948 = vld [vmem:[%s1932 + $0x78] sm:$0xff]
    %1949 = vmatprep.subr.mxu0 0.0
    %1950 = vmatpush1.msra.mxu0 %v1948
    %1951 = vmatprep.subr.mxu0 0.0
    %1952 = vmatpush1.msra.mxu0 %v1947
    %1953 = vmatprep.subr.mxu0 0.0
    %1954 = vmatpush1.msra.mxu0 %v1946
    %1955 = vmatprep.subr.mxu0 0.0
    %1956 = vmatpush1.msra.mxu0 %v1945
    %1957 = vmatprep.subr.mxu0 0.0
    %1958 = vmatpush1.msra.mxu0 %v1944
    %1959 = vmatprep.subr.mxu0 0.0
    %1960 = vmatpush1.msra.mxu0 %v1943
    %1961 = vmatprep.subr.mxu0 0.0
    %1962 = vmatpush1.msra.mxu0 %v1942
    %1963 = vmatprep.subr.mxu0 0.0
    %1964 = vmatpush1.msra.mxu0 %v1941
    %1965 = vmatprep.subr.mxu0 0.0
    %1966 = vmatpush1.msra.mxu0 %v1940
    %1967 = vmatprep.subr.mxu0 0.0
    %1968 = vmatpush1.msra.mxu0 %v1939
    %1969 = vmatprep.subr.mxu0 0.0
    %1970 = vmatpush1.msra.mxu0 %v1938
    %1971 = vmatprep.subr.mxu0 0.0
    %1972 = vmatpush1.msra.mxu0 %v1937
    %1973 = vmatprep.subr.mxu0 0.0
    %1974 = vmatpush1.msra.mxu0 %v1936
    %1975 = vmatprep.subr.mxu0 0.0
    %1976 = vmatpush1.msra.mxu0 %v1935
    %1977 = vmatprep.subr.mxu0 0.0
    %1978 = vmatpush1.msra.mxu0 %v1934
    %1979 = vmatprep.subr.mxu0 0.0
    %1980 = vmatpush1.msra.mxu0 %v1933
    %1981 = vmatprep.subr.mxu0 0.0
    %1982 = vmatpush2.msra.mxu0 0.0
    %1983 = vmatprep.subr.mxu0 0.0
    %1984 = vmatpush2.msra.mxu0 0.0
    %1985 = vmatprep.subr.mxu0 0.0
    %1986 = vmatpush2.msra.mxu0 0.0
    %1987 = vmatprep.subr.mxu0 0.0
    %1988 = vmatpush2.msra.mxu0 0.0
    %1989 = vmatprep.subr.mxu0 0.0
    %1990 = vmatpush2.msra.mxu0 0.0
    %1991 = vmatprep.subr.mxu0 0.0
    %1992 = vmatpush2.msra.mxu0 0.0
    %1993 = vmatprep.subr.mxu0 0.0
    %1994 = vmatpush2.msra.mxu0 0.0
    %1995 = vmatprep.subr.mxu0 0.0
    %1996 = vmatpush2.msra.mxu0 0.0
    %1997 = vmatprep.subr.mxu0 0.0
    %1998 = vmatpush2.msra.mxu0 0.0
    %1999 = vmatprep.subr.mxu0 0.0
    %2000 = vmatpush2.msra.mxu0 0.0
    %2001 = vmatprep.subr.mxu0 0.0
    %2002 = vmatpush2.msra.mxu0 0.0
    %2003 = vmatprep.subr.mxu0 0.0
    %2004 = vmatpush2.msra.mxu0 0.0
    %2005 = vmatprep.subr.mxu0 0.0
    %2006 = vmatpush2.msra.mxu0 0.0
    %2007 = vmatprep.subr.mxu0 0.0
    %2008 = vmatpush2.msra.mxu0 0.0
    %2009 = vmatprep.subr.mxu0 0.0
    %2010 = vmatpush2.msra.mxu0 0.0
    %2011 = vmatprep.subr.mxu0 0.0
    %2012 = vmatpush2.msra.mxu0 0.0
    %2013 = vmatprep.mubr.f32.mxu0 0.0
    %2014 = vmatmul.mubr.f32.gmra.mxu0 %v1900
    %v2015 = vpop.f32.mrf.mxu0
    %v2016 = vadd.f32 0.0, %v2015
    %v2017 = vpop.f32.mrf.mxu0
    %2018 = vmatprep.mubr.f32.mxu0 0.0
    %2019 = vmatmul.mubr.f32.gmra.mxu0 %v1901
    %v2020 = vpop.f32.mrf.mxu0
    %v2021 = vadd.f32 0.0, %v2020
    %v2022 = vpop.f32.mrf.mxu0
    %2023 = vmatprep.mubr.f32.mxu0 0.0
    %2024 = vmatmul.mubr.f32.gmra.mxu0 %v1902
    %v2025 = vpop.f32.mrf.mxu0
    %v2026 = vadd.f32 0.0, %v2025
    %v2027 = vpop.f32.mrf.mxu0
    %2028 = vmatprep.mubr.f32.mxu0 0.0
    %2029 = vmatmul.mubr.f32.gmra.mxu0 %v1903
    %v2030 = vpop.f32.mrf.mxu0
    %v2031 = vadd.f32 0.0, %v2030
    %v2032 = vpop.f32.mrf.mxu0
    %2033 = vmatprep.mubr.f32.mxu0 0.0
    %2034 = vmatmul.mubr.f32.gmra.mxu0 %v1904
    %v2035 = vpop.f32.mrf.mxu0
    %v2036 = vadd.f32 0.0, %v2035
    %v2037 = vpop.f32.mrf.mxu0
    %2038 = vmatprep.mubr.f32.mxu0 0.0
    %2039 = vmatmul.mubr.f32.gmra.mxu0 %v1905
    %v2040 = vpop.f32.mrf.mxu0
    %v2041 = vadd.f32 0.0, %v2040
    %v2042 = vpop.f32.mrf.mxu0
    %2043 = vmatprep.mubr.f32.mxu0 0.0
    %2044 = vmatmul.mubr.f32.gmra.mxu0 %v1906
    %v2045 = vpop.f32.mrf.mxu0
    %v2046 = vadd.f32 0.0, %v2045
    %v2047 = vpop.f32.mrf.mxu0
    %2048 = vmatprep.mubr.f32.mxu0 0.0
    %2049 = vmatmul.mubr.f32.gmra.mxu0 %v1907
    %v2050 = vpop.f32.mrf.mxu0
    %v2051 = vadd.f32 0.0, %v2050
    %v2052 = vpop.f32.mrf.mxu0
    %2053 = vmatprep.mubr.f32.mxu0 0.0
    %2054 = vmatmul.mubr.f32.gmra.mxu0 %v1908
    %v2055 = vpop.f32.mrf.mxu0
    %v2056 = vadd.f32 0.0, %v2055
    %v2057 = vpop.f32.mrf.mxu0
    %2058 = vmatprep.mubr.f32.mxu0 0.0
    %2059 = vmatmul.mubr.f32.gmra.mxu0 %v1909
    %v2060 = vpop.f32.mrf.mxu0
    %v2061 = vadd.f32 0.0, %v2060
    %v2062 = vpop.f32.mrf.mxu0
    %2063 = vmatprep.mubr.f32.mxu0 0.0
    %2064 = vmatmul.mubr.f32.gmra.mxu0 %v1910
    %v2065 = vpop.f32.mrf.mxu0
    %v2066 = vadd.f32 0.0, %v2065
    %v2067 = vpop.f32.mrf.mxu0
    %2068 = vmatprep.mubr.f32.mxu0 0.0
    %2069 = vmatmul.mubr.f32.gmra.mxu0 %v1911
    %v2070 = vpop.f32.mrf.mxu0
    %v2071 = vadd.f32 0.0, %v2070
    %v2072 = vpop.f32.mrf.mxu0
    %2073 = vmatprep.mubr.f32.mxu0 0.0
    %2074 = vmatmul.mubr.f32.gmra.mxu0 %v1912
    %v2075 = vpop.f32.mrf.mxu0
    %v2076 = vadd.f32 0.0, %v2075
    %v2077 = vpop.f32.mrf.mxu0
    %2078 = vmatprep.mubr.f32.mxu0 0.0
    %2079 = vmatmul.mubr.f32.gmra.mxu0 %v1913
    %v2080 = vpop.f32.mrf.mxu0
    %v2081 = vadd.f32 0.0, %v2080
    %v2082 = vpop.f32.mrf.mxu0
    %2083 = vmatprep.mubr.f32.mxu0 0.0
    %2084 = vmatmul.mubr.f32.gmra.mxu0 %v1914
    %v2085 = vpop.f32.mrf.mxu0
    %v2086 = vadd.f32 0.0, %v2085
    %v2087 = vpop.f32.mrf.mxu0
    %2088 = vmatprep.mubr.f32.mxu0 0.0
    %2089 = vmatmul.mubr.f32.gmra.mxu0 %v1915
    %v2090 = vpop.f32.mrf.mxu0
    %v2091 = vadd.f32 0.0, %v2090
    %v2092 = vpop.f32.mrf.mxu0
    %2093 = vmatprep.mubr.f32.mxu0 0.0
    %2094 = vmatmul.mubr.f32.gmra.mxu0 %v1916
    %v2095 = vpop.f32.mrf.mxu0
    %v2096 = vadd.f32 0.0, %v2095
    %v2097 = vpop.f32.mrf.mxu0
    %2098 = vmatprep.mubr.f32.mxu0 0.0
    %2099 = vmatmul.mubr.f32.gmra.mxu0 %v1917
    %v2100 = vpop.f32.mrf.mxu0
    %v2101 = vadd.f32 0.0, %v2100
    %v2102 = vpop.f32.mrf.mxu0
    %2103 = vmatprep.mubr.f32.mxu0 0.0
    %2104 = vmatmul.mubr.f32.gmra.mxu0 %v1918
    %v2105 = vpop.f32.mrf.mxu0
    %v2106 = vadd.f32 0.0, %v2105
    %v2107 = vpop.f32.mrf.mxu0
    %2108 = vmatprep.mubr.f32.mxu0 0.0
    %2109 = vmatmul.mubr.f32.gmra.mxu0 %v1919
    %v2110 = vpop.f32.mrf.mxu0
    %v2111 = vadd.f32 0.0, %v2110
    %v2112 = vpop.f32.mrf.mxu0
    %2113 = vmatprep.mubr.f32.mxu0 0.0
    %2114 = vmatmul.mubr.f32.gmra.mxu0 %v1920
    %v2115 = vpop.f32.mrf.mxu0
    %v2116 = vadd.f32 0.0, %v2115
    %v2117 = vpop.f32.mrf.mxu0
    %2118 = vmatprep.mubr.f32.mxu0 0.0
    %2119 = vmatmul.mubr.f32.gmra.mxu0 %v1921
    %v2120 = vpop.f32.mrf.mxu0
    %v2121 = vadd.f32 0.0, %v2120
    %v2122 = vpop.f32.mrf.mxu0
    %2123 = vmatprep.mubr.f32.mxu0 0.0
    %2124 = vmatmul.mubr.f32.gmra.mxu0 %v1922
    %v2125 = vpop.f32.mrf.mxu0
    %v2126 = vadd.f32 0.0, %v2125
    %v2127 = vpop.f32.mrf.mxu0
    %2128 = vmatprep.mubr.f32.mxu0 0.0
    %2129 = vmatmul.mubr.f32.gmra.mxu0 %v1923
    %v2130 = vpop.f32.mrf.mxu0
    %v2131 = vadd.f32 0.0, %v2130
    %v2132 = vpop.f32.mrf.mxu0
    %2133 = vmatprep.mubr.f32.mxu0 0.0
    %2134 = vmatmul.mubr.f32.gmra.mxu0 %v1924
    %v2135 = vpop.f32.mrf.mxu0
    %v2136 = vadd.f32 0.0, %v2135
    %v2137 = vpop.f32.mrf.mxu0
    %2138 = vmatprep.mubr.f32.mxu0 0.0
    %2139 = vmatmul.mubr.f32.gmra.mxu0 %v1925
    %v2140 = vpop.f32.mrf.mxu0
    %v2141 = vadd.f32 0.0, %v2140
    %v2142 = vpop.f32.mrf.mxu0
    %2143 = vmatprep.mubr.f32.mxu0 0.0
    %2144 = vmatmul.mubr.f32.gmra.mxu0 %v1926
    %v2145 = vpop.f32.mrf.mxu0
    %v2146 = vadd.f32 0.0, %v2145
    %v2147 = vpop.f32.mrf.mxu0
    %2148 = vmatprep.mubr.f32.mxu0 0.0
    %2149 = vmatmul.mubr.f32.gmra.mxu0 %v1927
    %v2150 = vpop.f32.mrf.mxu0
    %v2151 = vadd.f32 0.0, %v2150
    %v2152 = vpop.f32.mrf.mxu0
    %2153 = vmatprep.mubr.f32.mxu0 0.0
    %2154 = vmatmul.mubr.f32.gmra.mxu0 %v1928
    %v2155 = vpop.f32.mrf.mxu0
    %v2156 = vadd.f32 0.0, %v2155
    %v2157 = vpop.f32.mrf.mxu0
    %2158 = vmatprep.mubr.f32.mxu0 0.0
    %2159 = vmatmul.mubr.f32.gmra.mxu0 %v1929
    %v2160 = vpop.f32.mrf.mxu0
    %v2161 = vadd.f32 0.0, %v2160
    %v2162 = vpop.f32.mrf.mxu0
    %2163 = vmatprep.mubr.f32.mxu0 0.0
    %2164 = vmatmul.mubr.f32.gmra.mxu0 %v1930
    %v2165 = vpop.f32.mrf.mxu0
    %v2166 = vadd.f32 0.0, %v2165
    %v2167 = vpop.f32.mrf.mxu0
    %2168 = vmatprep.mubr.f32.mxu0 0.0
    %2169 = vmatmul.mubr.f32.gmra.mxu0 %v1931
    %v2170 = vpop.f32.mrf.mxu0
    %v2171 = vadd.f32 0.0, %v2170
    %v2172 = vpop.f32.mrf.mxu0
    %2173 = vdwg.mxu0
    %v2174 = vadd.f32 %v1900, %v2016
    %v2175 = vadd.f32 %v1901, %v2021
    %v2176 = vadd.f32 %v1902, %v2026
    %v2177 = vadd.f32 %v1903, %v2031
    %v2178 = vadd.f32 %v1904, %v2036
    %v2179 = vadd.f32 %v1905, %v2041
    %v2180 = vadd.f32 %v1906, %v2046
    %v2181 = vadd.f32 %v1907, %v2051
    %v2182 = vadd.f32 %v1908, %v2056
    %v2183 = vadd.f32 %v1909, %v2061
    %v2184 = vadd.f32 %v1910, %v2066
    %v2185 = vadd.f32 %v1911, %v2071
    %v2186 = vadd.f32 %v1912, %v2076
    %v2187 = vadd.f32 %v1913, %v2081
    %v2188 = vadd.f32 %v1914, %v2086
    %v2189 = vadd.f32 %v1915, %v2091
    %v2190 = vadd.f32 %v1916, %v2096
    %v2191 = vadd.f32 %v1917, %v2101
    %v2192 = vadd.f32 %v1918, %v2106
    %v2193 = vadd.f32 %v1919, %v2111
    %v2194 = vadd.f32 %v1920, %v2116
    %v2195 = vadd.f32 %v1921, %v2121
    %v2196 = vadd.f32 %v1922, %v2126
    %v2197 = vadd.f32 %v1923, %v2131
    %v2198 = vadd.f32 %v1924, %v2136
    %v2199 = vadd.f32 %v1925, %v2141
    %v2200 = vadd.f32 %v1926, %v2146
    %v2201 = vadd.f32 %v1927, %v2151
    %v2202 = vadd.f32 %v1928, %v2156
    %v2203 = vadd.f32 %v1929, %v2161
    %v2204 = vadd.f32 %v1930, %v2166
    %v2205 = vadd.f32 %v1931, %v2171
    %v2206 = vpack.c.bf16 %v2175, %v2174
    %v2207 = vpack.c.bf16 %v2177, %v2176
    %v2208 = vpack.c.bf16 %v2179, %v2178
    %v2209 = vpack.c.bf16 %v2181, %v2180
    %v2210 = vpack.c.bf16 %v2183, %v2182
    %v2211 = vpack.c.bf16 %v2185, %v2184
    %v2212 = vpack.c.bf16 %v2187, %v2186
    %v2213 = vpack.c.bf16 %v2189, %v2188
    %v2214 = vpack.c.bf16 %v2191, %v2190
    %v2215 = vpack.c.bf16 %v2193, %v2192
    %v2216 = vpack.c.bf16 %v2195, %v2194
    %v2217 = vpack.c.bf16 %v2197, %v2196
    %v2218 = vpack.c.bf16 %v2199, %v2198
    %v2219 = vpack.c.bf16 %v2201, %v2200
    %v2220 = vpack.c.bf16 %v2203, %v2202
    %v2221 = vpack.c.bf16 %v2205, %v2204
    %v2238 = vunpack.c.l.b16 %v2206
    %v2239 = vunpack.c.h.b16 %v2206
    %v2240 = vunpack.c.l.b16 %v2207
    %v2241 = vunpack.c.h.b16 %v2207
    %v2242 = vunpack.c.l.b16 %v2208
    %v2243 = vunpack.c.h.b16 %v2208
    %v2244 = vunpack.c.l.b16 %v2209
    %v2245 = vunpack.c.h.b16 %v2209
    %v2246 = vunpack.c.l.b16 %v2210
    %v2247 = vunpack.c.h.b16 %v2210
    %v2248 = vunpack.c.l.b16 %v2211
    %v2249 = vunpack.c.h.b16 %v2211
    %v2250 = vunpack.c.l.b16 %v2212
    %v2251 = vunpack.c.h.b16 %v2212
    %v2252 = vunpack.c.l.b16 %v2213
    %v2253 = vunpack.c.h.b16 %v2213
    %v2254 = vunpack.c.l.b16 %v2214
    %v2255 = vunpack.c.h.b16 %v2214
    %v2256 = vunpack.c.l.b16 %v2215
    %v2257 = vunpack.c.h.b16 %v2215
    %v2258 = vunpack.c.l.b16 %v2216
    %v2259 = vunpack.c.h.b16 %v2216
    %v2260 = vunpack.c.l.b16 %v2217
    %v2261 = vunpack.c.h.b16 %v2217
    %v2262 = vunpack.c.l.b16 %v2218
    %v2263 = vunpack.c.h.b16 %v2218
    %v2264 = vunpack.c.l.b16 %v2219
    %v2265 = vunpack.c.h.b16 %v2219
    %v2266 = vunpack.c.l.b16 %v2220
    %v2267 = vunpack.c.h.b16 %v2220
    %v2268 = vunpack.c.l.b16 %v2221
    %v2269 = vunpack.c.h.b16 %v2221
    %v2270 = vpack.c.b16 %v2238, %v2238
    %v2271 = vpack.c.b16 %v2239, %v2239
    %v2272 = vpack.c.b16 %v2240, %v2240
    %v2273 = vpack.c.b16 %v2241, %v2241
    %v2274 = vpack.c.b16 %v2242, %v2242
    %v2275 = vpack.c.b16 %v2243, %v2243
    %v2276 = vpack.c.b16 %v2244, %v2244
    %v2277 = vpack.c.b16 %v2245, %v2245
    %v2278 = vpack.c.b16 %v2246, %v2246
    %v2279 = vpack.c.b16 %v2247, %v2247
    %v2280 = vpack.c.b16 %v2248, %v2248
    %v2281 = vpack.c.b16 %v2249, %v2249
    %v2282 = vpack.c.b16 %v2250, %v2250
    %v2283 = vpack.c.b16 %v2251, %v2251
    %v2284 = vpack.c.b16 %v2252, %v2252
    %v2285 = vpack.c.b16 %v2253, %v2253
    %v2286 = vpack.c.b16 %v2254, %v2254
    %v2287 = vpack.c.b16 %v2255, %v2255
    %v2288 = vpack.c.b16 %v2256, %v2256
    %v2289 = vpack.c.b16 %v2257, %v2257
    %v2290 = vpack.c.b16 %v2258, %v2258
    %v2291 = vpack.c.b16 %v2259, %v2259
    %v2292 = vpack.c.b16 %v2260, %v2260
    %v2293 = vpack.c.b16 %v2261, %v2261
    %v2294 = vpack.c.b16 %v2262, %v2262
    %v2295 = vpack.c.b16 %v2263, %v2263
    %v2296 = vpack.c.b16 %v2264, %v2264
    %v2297 = vpack.c.b16 %v2265, %v2265
    %v2298 = vpack.c.b16 %v2266, %v2266
    %v2299 = vpack.c.b16 %v2267, %v2267
    %v2300 = vpack.c.b16 %v2268, %v2268
    %v2301 = vpack.c.b16 %v2269, %v2269
    %2334 = vst [vmem:[#allocation4] sm:$0xf] %v2270
    %2335 = vst [vmem:[#allocation4 + $0x4] sm:$0xf] %v2271
    %2336 = vst [vmem:[#allocation4 + $0x8] sm:$0xf] %v2272
    %2337 = vst [vmem:[#allocation4 + $0xc] sm:$0xf] %v2273
    %2338 = vst [vmem:[#allocation4 + $0x10] sm:$0xf] %v2274
    %2339 = vst [vmem:[#allocation4 + $0x14] sm:$0xf] %v2275
    %2340 = vst [vmem:[#allocation4 + $0x18] sm:$0xf] %v2276
    %2341 = vst [vmem:[#allocation4 + $0x1c] sm:$0xf] %v2277
    %2342 = vst [vmem:[#allocation4 + $0x20] sm:$0xf] %v2278
    %2343 = vst [vmem:[#allocation4 + $0x24] sm:$0xf] %v2279
    %2344 = vst [vmem:[#allocation4 + $0x28] sm:$0xf] %v2280
    %2345 = vst [vmem:[#allocation4 + $0x2c] sm:$0xf] %v2281
    %2346 = vst [vmem:[#allocation4 + $0x30] sm:$0xf] %v2282
    %2347 = vst [vmem:[#allocation4 + $0x34] sm:$0xf] %v2283
    %2348 = vst [vmem:[#allocation4 + $0x38] sm:$0xf] %v2284
    %2349 = vst [vmem:[#allocation4 + $0x3c] sm:$0xf] %v2285
    %2350 = vst [vmem:[#allocation4 + $0x40] sm:$0xf] %v2286
    %2351 = vst [vmem:[#allocation4 + $0x44] sm:$0xf] %v2287
    %2352 = vst [vmem:[#allocation4 + $0x48] sm:$0xf] %v2288
    %2353 = vst [vmem:[#allocation4 + $0x4c] sm:$0xf] %v2289
    %2354 = vst [vmem:[#allocation4 + $0x50] sm:$0xf] %v2290
    %2355 = vst [vmem:[#allocation4 + $0x54] sm:$0xf] %v2291
    %2356 = vst [vmem:[#allocation4 + $0x58] sm:$0xf] %v2292
    %2357 = vst [vmem:[#allocation4 + $0x5c] sm:$0xf] %v2293
    %2358 = vst [vmem:[#allocation4 + $0x60] sm:$0xf] %v2294
    %2359 = vst [vmem:[#allocation4 + $0x64] sm:$0xf] %v2295
    %2360 = vst [vmem:[#allocation4 + $0x68] sm:$0xf] %v2296
    %2361 = vst [vmem:[#allocation4 + $0x6c] sm:$0xf] %v2297
    %2362 = vst [vmem:[#allocation4 + $0x70] sm:$0xf] %v2298
    %2363 = vst [vmem:[#allocation4 + $0x74] sm:$0xf] %v2299
    %2364 = vst [vmem:[#allocation4 + $0x78] sm:$0xf] %v2300
    %2365 = vst [vmem:[#allocation4 + $0x7c] sm:$0xf] %v2301
    %v2366 = vld [vmem:[#allocation3] sm:$0xff]
    %v2367 = vld [vmem:[#allocation3 + $0x8] sm:$0xff]
    %v2368 = vld [vmem:[#allocation3 + $0x10] sm:$0xff]
    %v2369 = vld [vmem:[#allocation3 + $0x18] sm:$0xff]
    %v2370 = vld [vmem:[#allocation3 + $0x20] sm:$0xff]
    %v2371 = vld [vmem:[#allocation3 + $0x28] sm:$0xff]
    %v2372 = vld [vmem:[#allocation3 + $0x30] sm:$0xff]
    %v2373 = vld [vmem:[#allocation3 + $0x38] sm:$0xff]
    %v2374 = vld [vmem:[#allocation3 + $0x40] sm:$0xff]
    %v2375 = vld [vmem:[#allocation3 + $0x48] sm:$0xff]
    %v2376 = vld [vmem:[#allocation3 + $0x50] sm:$0xff]
    %v2377 = vld [vmem:[#allocation3 + $0x58] sm:$0xff]
    %v2378 = vld [vmem:[#allocation3 + $0x60] sm:$0xff]
    %v2379 = vld [vmem:[#allocation3 + $0x68] sm:$0xff]
    %v2380 = vld [vmem:[#allocation3 + $0x70] sm:$0xff]
    %v2381 = vld [vmem:[#allocation3 + $0x78] sm:$0xff]
    %v2382 = vld [vmem:[#allocation3 + $0x80] sm:$0xff]
    %v2383 = vld [vmem:[#allocation3 + $0x88] sm:$0xff]
    %v2384 = vld [vmem:[#allocation3 + $0x90] sm:$0xff]
    %v2385 = vld [vmem:[#allocation3 + $0x98] sm:$0xff]
    %v2386 = vld [vmem:[#allocation3 + $0xa0] sm:$0xff]
    %v2387 = vld [vmem:[#allocation3 + $0xa8] sm:$0xff]
    %v2388 = vld [vmem:[#allocation3 + $0xb0] sm:$0xff]
    %v2389 = vld [vmem:[#allocation3 + $0xb8] sm:$0xff]
    %v2390 = vld [vmem:[#allocation3 + $0xc0] sm:$0xff]
    %v2391 = vld [vmem:[#allocation3 + $0xc8] sm:$0xff]
    %v2392 = vld [vmem:[#allocation3 + $0xd0] sm:$0xff]
    %v2393 = vld [vmem:[#allocation3 + $0xd8] sm:$0xff]
    %v2394 = vld [vmem:[#allocation3 + $0xe0] sm:$0xff]
    %v2395 = vld [vmem:[#allocation3 + $0xe8] sm:$0xff]
    %v2396 = vld [vmem:[#allocation3 + $0xf0] sm:$0xff]
    %v2397 = vld [vmem:[#allocation3 + $0xf8] sm:$0xff]
    %v2398 = vmul.f32 %v2366, 0.1
    %v2399 = vmul.f32 %v2367, 0.1
    %v2400 = vmul.f32 %v2368, 0.1
    %v2401 = vmul.f32 %v2369, 0.1
    %v2402 = vmul.f32 %v2370, 0.1
    %v2403 = vmul.f32 %v2371, 0.1
    %v2404 = vmul.f32 %v2372, 0.1
    %v2405 = vmul.f32 %v2373, 0.1
    %v2406 = vmul.f32 %v2374, 0.1
    %v2407 = vmul.f32 %v2375, 0.1
    %v2408 = vmul.f32 %v2376, 0.1
    %v2409 = vmul.f32 %v2377, 0.1
    %v2410 = vmul.f32 %v2378, 0.1
    %v2411 = vmul.f32 %v2379, 0.1
    %v2412 = vmul.f32 %v2380, 0.1
    %v2413 = vmul.f32 %v2381, 0.1
    %v2414 = vmul.f32 %v2382, 0.1
    %v2415 = vmul.f32 %v2383, 0.1
    %v2416 = vmul.f32 %v2384, 0.1
    %v2417 = vmul.f32 %v2385, 0.1
    %v2418 = vmul.f32 %v2386, 0.1
    %v2419 = vmul.f32 %v2387, 0.1
    %v2420 = vmul.f32 %v2388, 0.1
    %v2421 = vmul.f32 %v2389, 0.1
    %v2422 = vmul.f32 %v2390, 0.1
    %v2423 = vmul.f32 %v2391, 0.1
    %v2424 = vmul.f32 %v2392, 0.1
    %v2425 = vmul.f32 %v2393, 0.1
    %v2426 = vmul.f32 %v2394, 0.1
    %v2427 = vmul.f32 %v2395, 0.1
    %v2428 = vmul.f32 %v2396, 0.1
    %v2429 = vmul.f32 %v2397, 0.1
    %s2430 = scalar_lea.vmem [#allocation13], 128
    %v2431 = vld [vmem:[%s2430] sm:$0xff]
    %v2432 = vld [vmem:[%s2430 + $0x8] sm:$0xff]
    %v2433 = vld [vmem:[%s2430 + $0x10] sm:$0xff]
    %v2434 = vld [vmem:[%s2430 + $0x18] sm:$0xff]
    %v2435 = vld [vmem:[%s2430 + $0x20] sm:$0xff]
    %v2436 = vld [vmem:[%s2430 + $0x28] sm:$0xff]
    %v2437 = vld [vmem:[%s2430 + $0x30] sm:$0xff]
    %v2438 = vld [vmem:[%s2430 + $0x38] sm:$0xff]
    %v2439 = vld [vmem:[%s2430 + $0x40] sm:$0xff]
    %v2440 = vld [vmem:[%s2430 + $0x48] sm:$0xff]
    %v2441 = vld [vmem:[%s2430 + $0x50] sm:$0xff]
    %v2442 = vld [vmem:[%s2430 + $0x58] sm:$0xff]
    %v2443 = vld [vmem:[%s2430 + $0x60] sm:$0xff]
    %v2444 = vld [vmem:[%s2430 + $0x68] sm:$0xff]
    %v2445 = vld [vmem:[%s2430 + $0x70] sm:$0xff]
    %v2446 = vld [vmem:[%s2430 + $0x78] sm:$0xff]
    %2447 = vmatprep.subr.mxu0 0.0
    %2448 = vmatpush1.msra.mxu0 %v2446
    %2449 = vmatprep.subr.mxu0 0.0
    %2450 = vmatpush1.msra.mxu0 %v2445
    %2451 = vmatprep.subr.mxu0 0.0
    %2452 = vmatpush1.msra.mxu0 %v2444
    %2453 = vmatprep.subr.mxu0 0.0
    %2454 = vmatpush1.msra.mxu0 %v2443
    %2455 = vmatprep.subr.mxu0 0.0
    %2456 = vmatpush1.msra.mxu0 %v2442
    %2457 = vmatprep.subr.mxu0 0.0
    %2458 = vmatpush1.msra.mxu0 %v2441
    %2459 = vmatprep.subr.mxu0 0.0
    %2460 = vmatpush1.msra.mxu0 %v2440
    %2461 = vmatprep.subr.mxu0 0.0
    %2462 = vmatpush1.msra.mxu0 %v2439
    %2463 = vmatprep.subr.mxu0 0.0
    %2464 = vmatpush1.msra.mxu0 %v2438
    %2465 = vmatprep.subr.mxu0 0.0
    %2466 = vmatpush1.msra.mxu0 %v2437
    %2467 = vmatprep.subr.mxu0 0.0
    %2468 = vmatpush1.msra.mxu0 %v2436
    %2469 = vmatprep.subr.mxu0 0.0
    %2470 = vmatpush1.msra.mxu0 %v2435
    %2471 = vmatprep.subr.mxu0 0.0
    %2472 = vmatpush1.msra.mxu0 %v2434
    %2473 = vmatprep.subr.mxu0 0.0
    %2474 = vmatpush1.msra.mxu0 %v2433
    %2475 = vmatprep.subr.mxu0 0.0
    %2476 = vmatpush1.msra.mxu0 %v2432
    %2477 = vmatprep.subr.mxu0 0.0
    %2478 = vmatpush1.msra.mxu0 %v2431
    %2479 = vmatprep.subr.mxu0 0.0
    %2480 = vmatpush2.msra.mxu0 0.0
    %2481 = vmatprep.subr.mxu0 0.0
    %2482 = vmatpush2.msra.mxu0 0.0
    %2483 = vmatprep.subr.mxu0 0.0
    %2484 = vmatpush2.msra.mxu0 0.0
    %2485 = vmatprep.subr.mxu0 0.0
    %2486 = vmatpush2.msra.mxu0 0.0
    %2487 = vmatprep.subr.mxu0 0.0
    %2488 = vmatpush2.msra.mxu0 0.0
    %2489 = vmatprep.subr.mxu0 0.0
    %2490 = vmatpush2.msra.mxu0 0.0
    %2491 = vmatprep.subr.mxu0 0.0
    %2492 = vmatpush2.msra.mxu0 0.0
    %2493 = vmatprep.subr.mxu0 0.0
    %2494 = vmatpush2.msra.mxu0 0.0
    %2495 = vmatprep.subr.mxu0 0.0
    %2496 = vmatpush2.msra.mxu0 0.0
    %2497 = vmatprep.subr.mxu0 0.0
    %2498 = vmatpush2.msra.mxu0 0.0
    %2499 = vmatprep.subr.mxu0 0.0
    %2500 = vmatpush2.msra.mxu0 0.0
    %2501 = vmatprep.subr.mxu0 0.0
    %2502 = vmatpush2.msra.mxu0 0.0
    %2503 = vmatprep.subr.mxu0 0.0
    %2504 = vmatpush2.msra.mxu0 0.0
    %2505 = vmatprep.subr.mxu0 0.0
    %2506 = vmatpush2.msra.mxu0 0.0
    %2507 = vmatprep.subr.mxu0 0.0
    %2508 = vmatpush2.msra.mxu0 0.0
    %2509 = vmatprep.subr.mxu0 0.0
    %2510 = vmatpush2.msra.mxu0 0.0
    %2511 = vmatprep.mubr.f32.mxu0 0.0
    %2512 = vmatmul.mubr.f32.gmra.mxu0 %v2366
    %v2513 = vpop.f32.mrf.mxu0
    %v2514 = vadd.f32 0.0, %v2513
    %v2515 = vpop.f32.mrf.mxu0
    %2516 = vmatprep.mubr.f32.mxu0 0.0
    %2517 = vmatmul.mubr.f32.gmra.mxu0 %v2367
    %v2518 = vpop.f32.mrf.mxu0
    %v2519 = vadd.f32 0.0, %v2518
    %v2520 = vpop.f32.mrf.mxu0
    %2521 = vmatprep.mubr.f32.mxu0 0.0
    %2522 = vmatmul.mubr.f32.gmra.mxu0 %v2368
    %v2523 = vpop.f32.mrf.mxu0
    %v2524 = vadd.f32 0.0, %v2523
    %v2525 = vpop.f32.mrf.mxu0
    %2526 = vmatprep.mubr.f32.mxu0 0.0
    %2527 = vmatmul.mubr.f32.gmra.mxu0 %v2369
    %v2528 = vpop.f32.mrf.mxu0
    %v2529 = vadd.f32 0.0, %v2528
    %v2530 = vpop.f32.mrf.mxu0
    %2531 = vmatprep.mubr.f32.mxu0 0.0
    %2532 = vmatmul.mubr.f32.gmra.mxu0 %v2370
    %v2533 = vpop.f32.mrf.mxu0
    %v2534 = vadd.f32 0.0, %v2533
    %v2535 = vpop.f32.mrf.mxu0
    %2536 = vmatprep.mubr.f32.mxu0 0.0
    %2537 = vmatmul.mubr.f32.gmra.mxu0 %v2371
    %v2538 = vpop.f32.mrf.mxu0
    %v2539 = vadd.f32 0.0, %v2538
    %v2540 = vpop.f32.mrf.mxu0
    %2541 = vmatprep.mubr.f32.mxu0 0.0
    %2542 = vmatmul.mubr.f32.gmra.mxu0 %v2372
    %v2543 = vpop.f32.mrf.mxu0
    %v2544 = vadd.f32 0.0, %v2543
    %v2545 = vpop.f32.mrf.mxu0
    %2546 = vmatprep.mubr.f32.mxu0 0.0
    %2547 = vmatmul.mubr.f32.gmra.mxu0 %v2373
    %v2548 = vpop.f32.mrf.mxu0
    %v2549 = vadd.f32 0.0, %v2548
    %v2550 = vpop.f32.mrf.mxu0
    %2551 = vmatprep.mubr.f32.mxu0 0.0
    %2552 = vmatmul.mubr.f32.gmra.mxu0 %v2374
    %v2553 = vpop.f32.mrf.mxu0
    %v2554 = vadd.f32 0.0, %v2553
    %v2555 = vpop.f32.mrf.mxu0
    %2556 = vmatprep.mubr.f32.mxu0 0.0
    %2557 = vmatmul.mubr.f32.gmra.mxu0 %v2375
    %v2558 = vpop.f32.mrf.mxu0
    %v2559 = vadd.f32 0.0, %v2558
    %v2560 = vpop.f32.mrf.mxu0
    %2561 = vmatprep.mubr.f32.mxu0 0.0
    %2562 = vmatmul.mubr.f32.gmra.mxu0 %v2376
    %v2563 = vpop.f32.mrf.mxu0
    %v2564 = vadd.f32 0.0, %v2563
    %v2565 = vpop.f32.mrf.mxu0
    %2566 = vmatprep.mubr.f32.mxu0 0.0
    %2567 = vmatmul.mubr.f32.gmra.mxu0 %v2377
    %v2568 = vpop.f32.mrf.mxu0
    %v2569 = vadd.f32 0.0, %v2568
    %v2570 = vpop.f32.mrf.mxu0
    %2571 = vmatprep.mubr.f32.mxu0 0.0
    %2572 = vmatmul.mubr.f32.gmra.mxu0 %v2378
    %v2573 = vpop.f32.mrf.mxu0
    %v2574 = vadd.f32 0.0, %v2573
    %v2575 = vpop.f32.mrf.mxu0
    %2576 = vmatprep.mubr.f32.mxu0 0.0
    %2577 = vmatmul.mubr.f32.gmra.mxu0 %v2379
    %v2578 = vpop.f32.mrf.mxu0
    %v2579 = vadd.f32 0.0, %v2578
    %v2580 = vpop.f32.mrf.mxu0
    %2581 = vmatprep.mubr.f32.mxu0 0.0
    %2582 = vmatmul.mubr.f32.gmra.mxu0 %v2380
    %v2583 = vpop.f32.mrf.mxu0
    %v2584 = vadd.f32 0.0, %v2583
    %v2585 = vpop.f32.mrf.mxu0
    %2586 = vmatprep.mubr.f32.mxu0 0.0
    %2587 = vmatmul.mubr.f32.gmra.mxu0 %v2381
    %v2588 = vpop.f32.mrf.mxu0
    %v2589 = vadd.f32 0.0, %v2588
    %v2590 = vpop.f32.mrf.mxu0
    %2591 = vmatprep.mubr.f32.mxu0 0.0
    %2592 = vmatmul.mubr.f32.gmra.mxu0 %v2382
    %v2593 = vpop.f32.mrf.mxu0
    %v2594 = vadd.f32 0.0, %v2593
    %v2595 = vpop.f32.mrf.mxu0
    %2596 = vmatprep.mubr.f32.mxu0 0.0
    %2597 = vmatmul.mubr.f32.gmra.mxu0 %v2383
    %v2598 = vpop.f32.mrf.mxu0
    %v2599 = vadd.f32 0.0, %v2598
    %v2600 = vpop.f32.mrf.mxu0
    %2601 = vmatprep.mubr.f32.mxu0 0.0
    %2602 = vmatmul.mubr.f32.gmra.mxu0 %v2384
    %v2603 = vpop.f32.mrf.mxu0
    %v2604 = vadd.f32 0.0, %v2603
    %v2605 = vpop.f32.mrf.mxu0
    %2606 = vmatprep.mubr.f32.mxu0 0.0
    %2607 = vmatmul.mubr.f32.gmra.mxu0 %v2385
    %v2608 = vpop.f32.mrf.mxu0
    %v2609 = vadd.f32 0.0, %v2608
    %v2610 = vpop.f32.mrf.mxu0
    %2611 = vmatprep.mubr.f32.mxu0 0.0
    %2612 = vmatmul.mubr.f32.gmra.mxu0 %v2386
    %v2613 = vpop.f32.mrf.mxu0
    %v2614 = vadd.f32 0.0, %v2613
    %v2615 = vpop.f32.mrf.mxu0
    %2616 = vmatprep.mubr.f32.mxu0 0.0
    %2617 = vmatmul.mubr.f32.gmra.mxu0 %v2387
    %v2618 = vpop.f32.mrf.mxu0
    %v2619 = vadd.f32 0.0, %v2618
    %v2620 = vpop.f32.mrf.mxu0
    %2621 = vmatprep.mubr.f32.mxu0 0.0
    %2622 = vmatmul.mubr.f32.gmra.mxu0 %v2388
    %v2623 = vpop.f32.mrf.mxu0
    %v2624 = vadd.f32 0.0, %v2623
    %v2625 = vpop.f32.mrf.mxu0
    %2626 = vmatprep.mubr.f32.mxu0 0.0
    %2627 = vmatmul.mubr.f32.gmra.mxu0 %v2389
    %v2628 = vpop.f32.mrf.mxu0
    %v2629 = vadd.f32 0.0, %v2628
    %v2630 = vpop.f32.mrf.mxu0
    %2631 = vmatprep.mubr.f32.mxu0 0.0
    %2632 = vmatmul.mubr.f32.gmra.mxu0 %v2390
    %v2633 = vpop.f32.mrf.mxu0
    %v2634 = vadd.f32 0.0, %v2633
    %v2635 = vpop.f32.mrf.mxu0
    %2636 = vmatprep.mubr.f32.mxu0 0.0
    %2637 = vmatmul.mubr.f32.gmra.mxu0 %v2391
    %v2638 = vpop.f32.mrf.mxu0
    %v2639 = vadd.f32 0.0, %v2638
    %v2640 = vpop.f32.mrf.mxu0
    %2641 = vmatprep.mubr.f32.mxu0 0.0
    %2642 = vmatmul.mubr.f32.gmra.mxu0 %v2392
    %v2643 = vpop.f32.mrf.mxu0
    %v2644 = vadd.f32 0.0, %v2643
    %v2645 = vpop.f32.mrf.mxu0
    %2646 = vmatprep.mubr.f32.mxu0 0.0
    %2647 = vmatmul.mubr.f32.gmra.mxu0 %v2393
    %v2648 = vpop.f32.mrf.mxu0
    %v2649 = vadd.f32 0.0, %v2648
    %v2650 = vpop.f32.mrf.mxu0
    %2651 = vmatprep.mubr.f32.mxu0 0.0
    %2652 = vmatmul.mubr.f32.gmra.mxu0 %v2394
    %v2653 = vpop.f32.mrf.mxu0
    %v2654 = vadd.f32 0.0, %v2653
    %v2655 = vpop.f32.mrf.mxu0
    %2656 = vmatprep.mubr.f32.mxu0 0.0
    %2657 = vmatmul.mubr.f32.gmra.mxu0 %v2395
    %v2658 = vpop.f32.mrf.mxu0
    %v2659 = vadd.f32 0.0, %v2658
    %v2660 = vpop.f32.mrf.mxu0
    %2661 = vmatprep.mubr.f32.mxu0 0.0
    %2662 = vmatmul.mubr.f32.gmra.mxu0 %v2396
    %v2663 = vpop.f32.mrf.mxu0
    %v2664 = vadd.f32 0.0, %v2663
    %v2665 = vpop.f32.mrf.mxu0
    %2666 = vmatprep.mubr.f32.mxu0 0.0
    %2667 = vmatmul.mubr.f32.gmra.mxu0 %v2397
    %v2668 = vpop.f32.mrf.mxu0
    %v2669 = vadd.f32 0.0, %v2668
    %v2670 = vpop.f32.mrf.mxu0
    %2671 = vdwg.mxu0
    %v2672 = vadd.f32 %v2398, %v2514
    %v2673 = vadd.f32 %v2399, %v2519
    %v2674 = vadd.f32 %v2400, %v2524
    %v2675 = vadd.f32 %v2401, %v2529
    %v2676 = vadd.f32 %v2402, %v2534
    %v2677 = vadd.f32 %v2403, %v2539
    %v2678 = vadd.f32 %v2404, %v2544
    %v2679 = vadd.f32 %v2405, %v2549
    %v2680 = vadd.f32 %v2406, %v2554
    %v2681 = vadd.f32 %v2407, %v2559
    %v2682 = vadd.f32 %v2408, %v2564
    %v2683 = vadd.f32 %v2409, %v2569
    %v2684 = vadd.f32 %v2410, %v2574
    %v2685 = vadd.f32 %v2411, %v2579
    %v2686 = vadd.f32 %v2412, %v2584
    %v2687 = vadd.f32 %v2413, %v2589
    %v2688 = vadd.f32 %v2414, %v2594
    %v2689 = vadd.f32 %v2415, %v2599
    %v2690 = vadd.f32 %v2416, %v2604
    %v2691 = vadd.f32 %v2417, %v2609
    %v2692 = vadd.f32 %v2418, %v2614
    %v2693 = vadd.f32 %v2419, %v2619
    %v2694 = vadd.f32 %v2420, %v2624
    %v2695 = vadd.f32 %v2421, %v2629
    %v2696 = vadd.f32 %v2422, %v2634
    %v2697 = vadd.f32 %v2423, %v2639
    %v2698 = vadd.f32 %v2424, %v2644
    %v2699 = vadd.f32 %v2425, %v2649
    %v2700 = vadd.f32 %v2426, %v2654
    %v2701 = vadd.f32 %v2427, %v2659
    %v2702 = vadd.f32 %v2428, %v2664
    %v2703 = vadd.f32 %v2429, %v2669
    %v2704 = vld [vmem:[#allocation8] sm:$0xff]
    %v2705 = vld [vmem:[#allocation8 + $0x8] sm:$0xff]
    %v2706 = vld [vmem:[#allocation8 + $0x10] sm:$0xff]
    %v2707 = vld [vmem:[#allocation8 + $0x18] sm:$0xff]
    %v2708 = vld [vmem:[#allocation8 + $0x20] sm:$0xff]
    %v2709 = vld [vmem:[#allocation8 + $0x28] sm:$0xff]
    %v2710 = vld [vmem:[#allocation8 + $0x30] sm:$0xff]
    %v2711 = vld [vmem:[#allocation8 + $0x38] sm:$0xff]
    %v2712 = vld [vmem:[#allocation8 + $0x40] sm:$0xff]
    %v2713 = vld [vmem:[#allocation8 + $0x48] sm:$0xff]
    %v2714 = vld [vmem:[#allocation8 + $0x50] sm:$0xff]
    %v2715 = vld [vmem:[#allocation8 + $0x58] sm:$0xff]
    %v2716 = vld [vmem:[#allocation8 + $0x60] sm:$0xff]
    %v2717 = vld [vmem:[#allocation8 + $0x68] sm:$0xff]
    %v2718 = vld [vmem:[#allocation8 + $0x70] sm:$0xff]
    %v2719 = vld [vmem:[#allocation8 + $0x78] sm:$0xff]
    %v2720 = vld [vmem:[#allocation8 + $0x80] sm:$0xff]
    %v2721 = vld [vmem:[#allocation8 + $0x88] sm:$0xff]
    %v2722 = vld [vmem:[#allocation8 + $0x90] sm:$0xff]
    %v2723 = vld [vmem:[#allocation8 + $0x98] sm:$0xff]
    %v2724 = vld [vmem:[#allocation8 + $0xa0] sm:$0xff]
    %v2725 = vld [vmem:[#allocation8 + $0xa8] sm:$0xff]
    %v2726 = vld [vmem:[#allocation8 + $0xb0] sm:$0xff]
    %v2727 = vld [vmem:[#allocation8 + $0xb8] sm:$0xff]
    %v2728 = vld [vmem:[#allocation8 + $0xc0] sm:$0xff]
    %v2729 = vld [vmem:[#allocation8 + $0xc8] sm:$0xff]
    %v2730 = vld [vmem:[#allocation8 + $0xd0] sm:$0xff]
    %v2731 = vld [vmem:[#allocation8 + $0xd8] sm:$0xff]
    %v2732 = vld [vmem:[#allocation8 + $0xe0] sm:$0xff]
    %v2733 = vld [vmem:[#allocation8 + $0xe8] sm:$0xff]
    %v2734 = vld [vmem:[#allocation8 + $0xf0] sm:$0xff]
    %v2735 = vld [vmem:[#allocation8 + $0xf8] sm:$0xff]
    %v2736 = vld [vmem:[#allocation4] sm:$0xf]
    %v2737 = vld [vmem:[#allocation4 + $0x4] sm:$0xf]
    %v2738 = vld [vmem:[#allocation4 + $0x8] sm:$0xf]
    %v2739 = vld [vmem:[#allocation4 + $0xc] sm:$0xf]
    %v2740 = vld [vmem:[#allocation4 + $0x10] sm:$0xf]
    %v2741 = vld [vmem:[#allocation4 + $0x14] sm:$0xf]
    %v2742 = vld [vmem:[#allocation4 + $0x18] sm:$0xf]
    %v2743 = vld [vmem:[#allocation4 + $0x1c] sm:$0xf]
    %v2744 = vld [vmem:[#allocation4 + $0x20] sm:$0xf]
    %v2745 = vld [vmem:[#allocation4 + $0x24] sm:$0xf]
    %v2746 = vld [vmem:[#allocation4 + $0x28] sm:$0xf]
    %v2747 = vld [vmem:[#allocation4 + $0x2c] sm:$0xf]
    %v2748 = vld [vmem:[#allocation4 + $0x30] sm:$0xf]
    %v2749 = vld [vmem:[#allocation4 + $0x34] sm:$0xf]
    %v2750 = vld [vmem:[#allocation4 + $0x38] sm:$0xf]
    %v2751 = vld [vmem:[#allocation4 + $0x3c] sm:$0xf]
    %v2752 = vld [vmem:[#allocation4 + $0x40] sm:$0xf]
    %v2753 = vld [vmem:[#allocation4 + $0x44] sm:$0xf]
    %v2754 = vld [vmem:[#allocation4 + $0x48] sm:$0xf]
    %v2755 = vld [vmem:[#allocation4 + $0x4c] sm:$0xf]
    %v2756 = vld [vmem:[#allocation4 + $0x50] sm:$0xf]
    %v2757 = vld [vmem:[#allocation4 + $0x54] sm:$0xf]
    %v2758 = vld [vmem:[#allocation4 + $0x58] sm:$0xf]
    %v2759 = vld [vmem:[#allocation4 + $0x5c] sm:$0xf]
    %v2760 = vld [vmem:[#allocation4 + $0x60] sm:$0xf]
    %v2761 = vld [vmem:[#allocation4 + $0x64] sm:$0xf]
    %v2762 = vld [vmem:[#allocation4 + $0x68] sm:$0xf]
    %v2763 = vld [vmem:[#allocation4 + $0x6c] sm:$0xf]
    %v2764 = vld [vmem:[#allocation4 + $0x70] sm:$0xf]
    %v2765 = vld [vmem:[#allocation4 + $0x74] sm:$0xf]
    %v2766 = vld [vmem:[#allocation4 + $0x78] sm:$0xf]
    %v2767 = vld [vmem:[#allocation4 + $0x7c] sm:$0xf]
    %v2800 = vunpack.c.l.b16 %v2704
    %v2801 = vunpack.c.h.b16 %v2704
    %v2802 = vunpack.c.l.b16 %v2705
    %v2803 = vunpack.c.h.b16 %v2705
    %v2804 = vunpack.c.l.b16 %v2706
    %v2805 = vunpack.c.h.b16 %v2706
    %v2806 = vunpack.c.l.b16 %v2707
    %v2807 = vunpack.c.h.b16 %v2707
    %v2808 = vunpack.c.l.b16 %v2708
    %v2809 = vunpack.c.h.b16 %v2708
    %v2810 = vunpack.c.l.b16 %v2709
    %v2811 = vunpack.c.h.b16 %v2709
    %v2812 = vunpack.c.l.b16 %v2710
    %v2813 = vunpack.c.h.b16 %v2710
    %v2814 = vunpack.c.l.b16 %v2711
    %v2815 = vunpack.c.h.b16 %v2711
    %v2816 = vunpack.c.l.b16 %v2712
    %v2817 = vunpack.c.h.b16 %v2712
    %v2818 = vunpack.c.l.b16 %v2713
    %v2819 = vunpack.c.h.b16 %v2713
    %v2820 = vunpack.c.l.b16 %v2714
    %v2821 = vunpack.c.h.b16 %v2714
    %v2822 = vunpack.c.l.b16 %v2715
    %v2823 = vunpack.c.h.b16 %v2715
    %v2824 = vunpack.c.l.b16 %v2716
    %v2825 = vunpack.c.h.b16 %v2716
    %v2826 = vunpack.c.l.b16 %v2717
    %v2827 = vunpack.c.h.b16 %v2717
    %v2828 = vunpack.c.l.b16 %v2718
    %v2829 = vunpack.c.h.b16 %v2718
    %v2830 = vunpack.c.l.b16 %v2719
    %v2831 = vunpack.c.h.b16 %v2719
    %v2832 = vunpack.c.l.b16 %v2720
    %v2833 = vunpack.c.h.b16 %v2720
    %v2834 = vunpack.c.l.b16 %v2721
    %v2835 = vunpack.c.h.b16 %v2721
    %v2836 = vunpack.c.l.b16 %v2722
    %v2837 = vunpack.c.h.b16 %v2722
    %v2838 = vunpack.c.l.b16 %v2723
    %v2839 = vunpack.c.h.b16 %v2723
    %v2840 = vunpack.c.l.b16 %v2724
    %v2841 = vunpack.c.h.b16 %v2724
    %v2842 = vunpack.c.l.b16 %v2725
    %v2843 = vunpack.c.h.b16 %v2725
    %v2844 = vunpack.c.l.b16 %v2726
    %v2845 = vunpack.c.h.b16 %v2726
    %v2846 = vunpack.c.l.b16 %v2727
    %v2847 = vunpack.c.h.b16 %v2727
    %v2848 = vunpack.c.l.b16 %v2728
    %v2849 = vunpack.c.h.b16 %v2728
    %v2850 = vunpack.c.l.b16 %v2729
    %v2851 = vunpack.c.h.b16 %v2729
    %v2852 = vunpack.c.l.b16 %v2730
    %v2853 = vunpack.c.h.b16 %v2730
    %v2854 = vunpack.c.l.b16 %v2731
    %v2855 = vunpack.c.h.b16 %v2731
    %v2856 = vunpack.c.l.b16 %v2732
    %v2857 = vunpack.c.h.b16 %v2732
    %v2858 = vunpack.c.l.b16 %v2733
    %v2859 = vunpack.c.h.b16 %v2733
    %v2860 = vunpack.c.l.b16 %v2734
    %v2861 = vunpack.c.h.b16 %v2734
    %v2862 = vunpack.c.l.b16 %v2735
    %v2863 = vunpack.c.h.b16 %v2735
    %v2864 = vpack.c.b16 %v2802, %v2800
    %v2865 = vpack.c.b16 %v2803, %v2801
    %v2866 = vpack.c.b16 %v2806, %v2804
    %v2867 = vpack.c.b16 %v2807, %v2805
    %v2868 = vpack.c.b16 %v2810, %v2808
    %v2869 = vpack.c.b16 %v2811, %v2809
    %v2870 = vpack.c.b16 %v2814, %v2812
    %v2871 = vpack.c.b16 %v2815, %v2813
    %v2872 = vpack.c.b16 %v2818, %v2816
    %v2873 = vpack.c.b16 %v2819, %v2817
    %v2874 = vpack.c.b16 %v2822, %v2820
    %v2875 = vpack.c.b16 %v2823, %v2821
    %v2876 = vpack.c.b16 %v2826, %v2824
    %v2877 = vpack.c.b16 %v2827, %v2825
    %v2878 = vpack.c.b16 %v2830, %v2828
    %v2879 = vpack.c.b16 %v2831, %v2829
    %v2880 = vpack.c.b16 %v2834, %v2832
    %v2881 = vpack.c.b16 %v2835, %v2833
    %v2882 = vpack.c.b16 %v2838, %v2836
    %v2883 = vpack.c.b16 %v2839, %v2837
    %v2884 = vpack.c.b16 %v2842, %v2840
    %v2885 = vpack.c.b16 %v2843, %v2841
    %v2886 = vpack.c.b16 %v2846, %v2844
    %v2887 = vpack.c.b16 %v2847, %v2845
    %v2888 = vpack.c.b16 %v2850, %v2848
    %v2889 = vpack.c.b16 %v2851, %v2849
    %v2890 = vpack.c.b16 %v2854, %v2852
    %v2891 = vpack.c.b16 %v2855, %v2853
    %v2892 = vpack.c.b16 %v2858, %v2856
    %v2893 = vpack.c.b16 %v2859, %v2857
    %v2894 = vpack.c.b16 %v2862, %v2860
    %v2895 = vpack.c.b16 %v2863, %v2861
    %v2960 = vunpack.c.l.b16 %v2736
    %v2961 = vunpack.c.l.b16 %v2737
    %v2962 = vunpack.c.l.b16 %v2738
    %v2963 = vunpack.c.l.b16 %v2739
    %v2964 = vunpack.c.l.b16 %v2740
    %v2965 = vunpack.c.l.b16 %v2741
    %v2966 = vunpack.c.l.b16 %v2742
    %v2967 = vunpack.c.l.b16 %v2743
    %v2968 = vunpack.c.l.b16 %v2744
    %v2969 = vunpack.c.l.b16 %v2745
    %v2970 = vunpack.c.l.b16 %v2746
    %v2971 = vunpack.c.l.b16 %v2747
    %v2972 = vunpack.c.l.b16 %v2748
    %v2973 = vunpack.c.l.b16 %v2749
    %v2974 = vunpack.c.l.b16 %v2750
    %v2975 = vunpack.c.l.b16 %v2751
    %v2976 = vunpack.c.l.b16 %v2752
    %v2977 = vunpack.c.l.b16 %v2753
    %v2978 = vunpack.c.l.b16 %v2754
    %v2979 = vunpack.c.l.b16 %v2755
    %v2980 = vunpack.c.l.b16 %v2756
    %v2981 = vunpack.c.l.b16 %v2757
    %v2982 = vunpack.c.l.b16 %v2758
    %v2983 = vunpack.c.l.b16 %v2759
    %v2984 = vunpack.c.l.b16 %v2760
    %v2985 = vunpack.c.l.b16 %v2761
    %v2986 = vunpack.c.l.b16 %v2762
    %v2987 = vunpack.c.l.b16 %v2763
    %v2988 = vunpack.c.l.b16 %v2764
    %v2989 = vunpack.c.l.b16 %v2765
    %v2990 = vunpack.c.l.b16 %v2766
    %v2991 = vunpack.c.l.b16 %v2767
    %v2992 = vpack.c.b16 %v2961, %v2960
    %v2993 = vpack.c.b16 %v2963, %v2962
    %v2994 = vpack.c.b16 %v2965, %v2964
    %v2995 = vpack.c.b16 %v2967, %v2966
    %v2996 = vpack.c.b16 %v2969, %v2968
    %v2997 = vpack.c.b16 %v2971, %v2970
    %v2998 = vpack.c.b16 %v2973, %v2972
    %v2999 = vpack.c.b16 %v2975, %v2974
    %v3000 = vpack.c.b16 %v2977, %v2976
    %v3001 = vpack.c.b16 %v2979, %v2978
    %v3002 = vpack.c.b16 %v2981, %v2980
    %v3003 = vpack.c.b16 %v2983, %v2982
    %v3004 = vpack.c.b16 %v2985, %v2984
    %v3005 = vpack.c.b16 %v2987, %v2986
    %v3006 = vpack.c.b16 %v2989, %v2988
    %v3007 = vpack.c.b16 %v2991, %v2990
    %3024 = vmatprep.subr.bf16.mxu0 0
    %3025 = vmatpush1.bf16.msra.mxu0 %v2999
    %3026 = vmatprep.subr.bf16.mxu0 0
    %3027 = vmatpush1.bf16.msra.mxu0 %v2998
    %3028 = vmatprep.subr.bf16.mxu0 0
    %3029 = vmatpush1.bf16.msra.mxu0 %v2997
    %3030 = vmatprep.subr.bf16.mxu0 0
    %3031 = vmatpush1.bf16.msra.mxu0 %v2996
    %3032 = vmatprep.subr.bf16.mxu0 0
    %3033 = vmatpush1.bf16.msra.mxu0 %v2995
    %3034 = vmatprep.subr.bf16.mxu0 0
    %3035 = vmatpush1.bf16.msra.mxu0 %v2994
    %3036 = vmatprep.subr.bf16.mxu0 0
    %3037 = vmatpush1.bf16.msra.mxu0 %v2993
    %3038 = vmatprep.subr.bf16.mxu0 0
    %3039 = vmatpush1.bf16.msra.mxu0 %v2992
    %3040 = vmatprep.subr.bf16.mxu0 0
    %3041 = vmatpush2.bf16.msra.mxu0 %v3007
    %3042 = vmatprep.subr.bf16.mxu0 0
    %3043 = vmatpush2.bf16.msra.mxu0 %v3006
    %3044 = vmatprep.subr.bf16.mxu0 0
    %3045 = vmatpush2.bf16.msra.mxu0 %v3005
    %3046 = vmatprep.subr.bf16.mxu0 0
    %3047 = vmatpush2.bf16.msra.mxu0 %v3004
    %3048 = vmatprep.subr.bf16.mxu0 0
    %3049 = vmatpush2.bf16.msra.mxu0 %v3003
    %3050 = vmatprep.subr.bf16.mxu0 0
    %3051 = vmatpush2.bf16.msra.mxu0 %v3002
    %3052 = vmatprep.subr.bf16.mxu0 0
    %3053 = vmatpush2.bf16.msra.mxu0 %v3001
    %3054 = vmatprep.subr.bf16.mxu0 0
    %3055 = vmatpush2.bf16.msra.mxu0 %v3000
    %3056 = vmatprep.mubr.bf16.mxu0 %v2865
    %3057 = vmatmul.mubr.bf16.gmra.mxu0 %v2864
    %v3058 = vpop.f32.mrf.mxu0
    %v3059 = vadd.f32 %v2672, %v3058
    %v3060 = vpop.f32.mrf.mxu0
    %v3061 = vpop.f32.mrf.mxu0
    %v3062 = vadd.f32 %v2673, %v3061
    %v3063 = vpop.f32.mrf.mxu0
    %3064 = vmatprep.mubr.bf16.mxu0 %v2867
    %3065 = vmatmul.mubr.bf16.gmra.mxu0 %v2866
    %v3066 = vpop.f32.mrf.mxu0
    %v3067 = vadd.f32 %v2674, %v3066
    %v3068 = vpop.f32.mrf.mxu0
    %v3069 = vpop.f32.mrf.mxu0
    %v3070 = vadd.f32 %v2675, %v3069
    %v3071 = vpop.f32.mrf.mxu0
    %3072 = vmatprep.mubr.bf16.mxu0 %v2869
    %3073 = vmatmul.mubr.bf16.gmra.mxu0 %v2868
    %v3074 = vpop.f32.mrf.mxu0
    %v3075 = vadd.f32 %v2676, %v3074
    %v3076 = vpop.f32.mrf.mxu0
    %v3077 = vpop.f32.mrf.mxu0
    %v3078 = vadd.f32 %v2677, %v3077
    %v3079 = vpop.f32.mrf.mxu0
    %3080 = vmatprep.mubr.bf16.mxu0 %v2871
    %3081 = vmatmul.mubr.bf16.gmra.mxu0 %v2870
    %v3082 = vpop.f32.mrf.mxu0
    %v3083 = vadd.f32 %v2678, %v3082
    %v3084 = vpop.f32.mrf.mxu0
    %v3085 = vpop.f32.mrf.mxu0
    %v3086 = vadd.f32 %v2679, %v3085
    %v3087 = vpop.f32.mrf.mxu0
    %3088 = vmatprep.mubr.bf16.mxu0 %v2873
    %3089 = vmatmul.mubr.bf16.gmra.mxu0 %v2872
    %v3090 = vpop.f32.mrf.mxu0
    %v3091 = vadd.f32 %v2680, %v3090
    %v3092 = vpop.f32.mrf.mxu0
    %v3093 = vpop.f32.mrf.mxu0
    %v3094 = vadd.f32 %v2681, %v3093
    %v3095 = vpop.f32.mrf.mxu0
    %3096 = vmatprep.mubr.bf16.mxu0 %v2875
    %3097 = vmatmul.mubr.bf16.gmra.mxu0 %v2874
    %v3098 = vpop.f32.mrf.mxu0
    %v3099 = vadd.f32 %v2682, %v3098
    %v3100 = vpop.f32.mrf.mxu0
    %v3101 = vpop.f32.mrf.mxu0
    %v3102 = vadd.f32 %v2683, %v3101
    %v3103 = vpop.f32.mrf.mxu0
    %3104 = vmatprep.mubr.bf16.mxu0 %v2877
    %3105 = vmatmul.mubr.bf16.gmra.mxu0 %v2876
    %v3106 = vpop.f32.mrf.mxu0
    %v3107 = vadd.f32 %v2684, %v3106
    %v3108 = vpop.f32.mrf.mxu0
    %v3109 = vpop.f32.mrf.mxu0
    %v3110 = vadd.f32 %v2685, %v3109
    %v3111 = vpop.f32.mrf.mxu0
    %3112 = vmatprep.mubr.bf16.mxu0 %v2879
    %3113 = vmatmul.mubr.bf16.gmra.mxu0 %v2878
    %v3114 = vpop.f32.mrf.mxu0
    %v3115 = vadd.f32 %v2686, %v3114
    %v3116 = vpop.f32.mrf.mxu0
    %v3117 = vpop.f32.mrf.mxu0
    %v3118 = vadd.f32 %v2687, %v3117
    %v3119 = vpop.f32.mrf.mxu0
    %3120 = vmatprep.mubr.bf16.mxu0 %v2881
    %3121 = vmatmul.mubr.bf16.gmra.mxu0 %v2880
    %v3122 = vpop.f32.mrf.mxu0
    %v3123 = vadd.f32 %v2688, %v3122
    %v3124 = vpop.f32.mrf.mxu0
    %v3125 = vpop.f32.mrf.mxu0
    %v3126 = vadd.f32 %v2689, %v3125
    %v3127 = vpop.f32.mrf.mxu0
    %3128 = vmatprep.mubr.bf16.mxu0 %v2883
    %3129 = vmatmul.mubr.bf16.gmra.mxu0 %v2882
    %v3130 = vpop.f32.mrf.mxu0
    %v3131 = vadd.f32 %v2690, %v3130
    %v3132 = vpop.f32.mrf.mxu0
    %v3133 = vpop.f32.mrf.mxu0
    %v3134 = vadd.f32 %v2691, %v3133
    %v3135 = vpop.f32.mrf.mxu0
    %3136 = vmatprep.mubr.bf16.mxu0 %v2885
    %3137 = vmatmul.mubr.bf16.gmra.mxu0 %v2884
    %v3138 = vpop.f32.mrf.mxu0
    %v3139 = vadd.f32 %v2692, %v3138
    %v3140 = vpop.f32.mrf.mxu0
    %v3141 = vpop.f32.mrf.mxu0
    %v3142 = vadd.f32 %v2693, %v3141
    %v3143 = vpop.f32.mrf.mxu0
    %3144 = vmatprep.mubr.bf16.mxu0 %v2887
    %3145 = vmatmul.mubr.bf16.gmra.mxu0 %v2886
    %v3146 = vpop.f32.mrf.mxu0
    %v3147 = vadd.f32 %v2694, %v3146
    %v3148 = vpop.f32.mrf.mxu0
    %v3149 = vpop.f32.mrf.mxu0
    %v3150 = vadd.f32 %v2695, %v3149
    %v3151 = vpop.f32.mrf.mxu0
    %3152 = vmatprep.mubr.bf16.mxu0 %v2889
    %3153 = vmatmul.mubr.bf16.gmra.mxu0 %v2888
    %v3154 = vpop.f32.mrf.mxu0
    %v3155 = vadd.f32 %v2696, %v3154
    %v3156 = vpop.f32.mrf.mxu0
    %v3157 = vpop.f32.mrf.mxu0
    %v3158 = vadd.f32 %v2697, %v3157
    %v3159 = vpop.f32.mrf.mxu0
    %3160 = vmatprep.mubr.bf16.mxu0 %v2891
    %3161 = vmatmul.mubr.bf16.gmra.mxu0 %v2890
    %v3162 = vpop.f32.mrf.mxu0
    %v3163 = vadd.f32 %v2698, %v3162
    %v3164 = vpop.f32.mrf.mxu0
    %v3165 = vpop.f32.mrf.mxu0
    %v3166 = vadd.f32 %v2699, %v3165
    %v3167 = vpop.f32.mrf.mxu0
    %3168 = vmatprep.mubr.bf16.mxu0 %v2893
    %3169 = vmatmul.mubr.bf16.gmra.mxu0 %v2892
    %v3170 = vpop.f32.mrf.mxu0
    %v3171 = vadd.f32 %v2700, %v3170
    %v3172 = vpop.f32.mrf.mxu0
    %v3173 = vpop.f32.mrf.mxu0
    %v3174 = vadd.f32 %v2701, %v3173
    %v3175 = vpop.f32.mrf.mxu0
    %3176 = vmatprep.mubr.bf16.mxu0 %v2895
    %3177 = vmatmul.mubr.bf16.gmra.mxu0 %v2894
    %v3178 = vpop.f32.mrf.mxu0
    %v3179 = vadd.f32 %v2702, %v3178
    %v3180 = vpop.f32.mrf.mxu0
    %v3181 = vpop.f32.mrf.mxu0
    %v3182 = vadd.f32 %v2703, %v3181
    %v3183 = vpop.f32.mrf.mxu0
    %3184 = vdwg.mxu0
    %v3185 = vmul.f32 %v3059, 0.999995
    %v3186 = vmul.f32 %v3062, 0.999995
    %v3187 = vmul.f32 %v3067, 0.999995
    %v3188 = vmul.f32 %v3070, 0.999995
    %v3189 = vmul.f32 %v3075, 0.999995
    %v3190 = vmul.f32 %v3078, 0.999995
    %v3191 = vmul.f32 %v3083, 0.999995
    %v3192 = vmul.f32 %v3086, 0.999995
    %v3193 = vmul.f32 %v3091, 0.999995
    %v3194 = vmul.f32 %v3094, 0.999995
    %v3195 = vmul.f32 %v3099, 0.999995
    %v3196 = vmul.f32 %v3102, 0.999995
    %v3197 = vmul.f32 %v3107, 0.999995
    %v3198 = vmul.f32 %v3110, 0.999995
    %v3199 = vmul.f32 %v3115, 0.999995
    %v3200 = vmul.f32 %v3118, 0.999995
    %v3201 = vmul.f32 %v3123, 0.999995
    %v3202 = vmul.f32 %v3126, 0.999995
    %v3203 = vmul.f32 %v3131, 0.999995
    %v3204 = vmul.f32 %v3134, 0.999995
    %v3205 = vmul.f32 %v3139, 0.999995
    %v3206 = vmul.f32 %v3142, 0.999995
    %v3207 = vmul.f32 %v3147, 0.999995
    %v3208 = vmul.f32 %v3150, 0.999995
    %v3209 = vmul.f32 %v3155, 0.999995
    %v3210 = vmul.f32 %v3158, 0.999995
    %v3211 = vmul.f32 %v3163, 0.999995
    %v3212 = vmul.f32 %v3166, 0.999995
    %v3213 = vmul.f32 %v3171, 0.999995
    %v3214 = vmul.f32 %v3174, 0.999995
    %v3215 = vmul.f32 %v3179, 0.999995
    %v3216 = vmul.f32 %v3182, 0.999995
    %v3217 = vmax.f32 %v3185, 0.0
    %v3218 = vmax.f32 %v3186, 0.0
    %v3219 = vmax.f32 %v3187, 0.0
    %v3220 = vmax.f32 %v3188, 0.0
    %v3221 = vmax.f32 %v3189, 0.0
    %v3222 = vmax.f32 %v3190, 0.0
    %v3223 = vmax.f32 %v3191, 0.0
    %v3224 = vmax.f32 %v3192, 0.0
    %v3225 = vmax.f32 %v3193, 0.0
    %v3226 = vmax.f32 %v3194, 0.0
    %v3227 = vmax.f32 %v3195, 0.0
    %v3228 = vmax.f32 %v3196, 0.0
    %v3229 = vmax.f32 %v3197, 0.0
    %v3230 = vmax.f32 %v3198, 0.0
    %v3231 = vmax.f32 %v3199, 0.0
    %v3232 = vmax.f32 %v3200, 0.0
    %v3233 = vmax.f32 %v3201, 0.0
    %v3234 = vmax.f32 %v3202, 0.0
    %v3235 = vmax.f32 %v3203, 0.0
    %v3236 = vmax.f32 %v3204, 0.0
    %v3237 = vmax.f32 %v3205, 0.0
    %v3238 = vmax.f32 %v3206, 0.0
    %v3239 = vmax.f32 %v3207, 0.0
    %v3240 = vmax.f32 %v3208, 0.0
    %v3241 = vmax.f32 %v3209, 0.0
    %v3242 = vmax.f32 %v3210, 0.0
    %v3243 = vmax.f32 %v3211, 0.0
    %v3244 = vmax.f32 %v3212, 0.0
    %v3245 = vmax.f32 %v3213, 0.0
    %v3246 = vmax.f32 %v3214, 0.0
    %v3247 = vmax.f32 %v3215, 0.0
    %v3248 = vmax.f32 %v3216, 0.0
    %v3249 = vadd.f32 %v3217, %v1900
    %v3250 = vadd.f32 %v3218, %v1901
    %v3251 = vadd.f32 %v3219, %v1902
    %v3252 = vadd.f32 %v3220, %v1903
    %v3253 = vadd.f32 %v3221, %v1904
    %v3254 = vadd.f32 %v3222, %v1905
    %v3255 = vadd.f32 %v3223, %v1906
    %v3256 = vadd.f32 %v3224, %v1907
    %v3257 = vadd.f32 %v3225, %v1908
    %v3258 = vadd.f32 %v3226, %v1909
    %v3259 = vadd.f32 %v3227, %v1910
    %v3260 = vadd.f32 %v3228, %v1911
    %v3261 = vadd.f32 %v3229, %v1912
    %v3262 = vadd.f32 %v3230, %v1913
    %v3263 = vadd.f32 %v3231, %v1914
    %v3264 = vadd.f32 %v3232, %v1915
    %v3265 = vadd.f32 %v3233, %v1916
    %v3266 = vadd.f32 %v3234, %v1917
    %v3267 = vadd.f32 %v3235, %v1918
    %v3268 = vadd.f32 %v3236, %v1919
    %v3269 = vadd.f32 %v3237, %v1920
    %v3270 = vadd.f32 %v3238, %v1921
    %v3271 = vadd.f32 %v3239, %v1922
    %v3272 = vadd.f32 %v3240, %v1923
    %v3273 = vadd.f32 %v3241, %v1924
    %v3274 = vadd.f32 %v3242, %v1925
    %v3275 = vadd.f32 %v3243, %v1926
    %v3276 = vadd.f32 %v3244, %v1927
    %v3277 = vadd.f32 %v3245, %v1928
    %v3278 = vadd.f32 %v3246, %v1929
    %v3279 = vadd.f32 %v3247, %v1930
    %v3280 = vadd.f32 %v3248, %v1931
    %3281 = vst [vmem:[#allocation2] sm:$0xff] %v3249
    %3282 = vst [vmem:[#allocation2 + $0x8] sm:$0xff] %v3250
    %3283 = vst [vmem:[#allocation2 + $0x10] sm:$0xff] %v3251
    %3284 = vst [vmem:[#allocation2 + $0x18] sm:$0xff] %v3252
    %3285 = vst [vmem:[#allocation2 + $0x20] sm:$0xff] %v3253
    %3286 = vst [vmem:[#allocation2 + $0x28] sm:$0xff] %v3254
    %3287 = vst [vmem:[#allocation2 + $0x30] sm:$0xff] %v3255
    %3288 = vst [vmem:[#allocation2 + $0x38] sm:$0xff] %v3256
    %3289 = vst [vmem:[#allocation2 + $0x40] sm:$0xff] %v3257
    %3290 = vst [vmem:[#allocation2 + $0x48] sm:$0xff] %v3258
    %3291 = vst [vmem:[#allocation2 + $0x50] sm:$0xff] %v3259
    %3292 = vst [vmem:[#allocation2 + $0x58] sm:$0xff] %v3260
    %3293 = vst [vmem:[#allocation2 + $0x60] sm:$0xff] %v3261
    %3294 = vst [vmem:[#allocation2 + $0x68] sm:$0xff] %v3262
    %3295 = vst [vmem:[#allocation2 + $0x70] sm:$0xff] %v3263
    %3296 = vst [vmem:[#allocation2 + $0x78] sm:$0xff] %v3264
    %3297 = vst [vmem:[#allocation2 + $0x80] sm:$0xff] %v3265
    %3298 = vst [vmem:[#allocation2 + $0x88] sm:$0xff] %v3266
    %3299 = vst [vmem:[#allocation2 + $0x90] sm:$0xff] %v3267
    %3300 = vst [vmem:[#allocation2 + $0x98] sm:$0xff] %v3268
    %3301 = vst [vmem:[#allocation2 + $0xa0] sm:$0xff] %v3269
    %3302 = vst [vmem:[#allocation2 + $0xa8] sm:$0xff] %v3270
    %3303 = vst [vmem:[#allocation2 + $0xb0] sm:$0xff] %v3271
    %3304 = vst [vmem:[#allocation2 + $0xb8] sm:$0xff] %v3272
    %3305 = vst [vmem:[#allocation2 + $0xc0] sm:$0xff] %v3273
    %3306 = vst [vmem:[#allocation2 + $0xc8] sm:$0xff] %v3274
    %3307 = vst [vmem:[#allocation2 + $0xd0] sm:$0xff] %v3275
    %3308 = vst [vmem:[#allocation2 + $0xd8] sm:$0xff] %v3276
    %3309 = vst [vmem:[#allocation2 + $0xe0] sm:$0xff] %v3277
    %3310 = vst [vmem:[#allocation2 + $0xe8] sm:$0xff] %v3278
    %3311 = vst [vmem:[#allocation2 + $0xf0] sm:$0xff] %v3279
    %3312 = vst [vmem:[#allocation2 + $0xf8] sm:$0xff] %v3280
    %v3313 = vld [vmem:[#allocation2] sm:$0xff]
    %v3314 = vld [vmem:[#allocation2 + $0x8] sm:$0xff]
    %v3315 = vld [vmem:[#allocation2 + $0x10] sm:$0xff]
    %v3316 = vld [vmem:[#allocation2 + $0x18] sm:$0xff]
    %v3317 = vld [vmem:[#allocation2 + $0x20] sm:$0xff]
    %v3318 = vld [vmem:[#allocation2 + $0x28] sm:$0xff]
    %v3319 = vld [vmem:[#allocation2 + $0x30] sm:$0xff]
    %v3320 = vld [vmem:[#allocation2 + $0x38] sm:$0xff]
    %v3321 = vld [vmem:[#allocation2 + $0x40] sm:$0xff]
    %v3322 = vld [vmem:[#allocation2 + $0x48] sm:$0xff]
    %v3323 = vld [vmem:[#allocation2 + $0x50] sm:$0xff]
    %v3324 = vld [vmem:[#allocation2 + $0x58] sm:$0xff]
    %v3325 = vld [vmem:[#allocation2 + $0x60] sm:$0xff]
    %v3326 = vld [vmem:[#allocation2 + $0x68] sm:$0xff]
    %v3327 = vld [vmem:[#allocation2 + $0x70] sm:$0xff]
    %v3328 = vld [vmem:[#allocation2 + $0x78] sm:$0xff]
    %v3329 = vld [vmem:[#allocation2 + $0x80] sm:$0xff]
    %v3330 = vld [vmem:[#allocation2 + $0x88] sm:$0xff]
    %v3331 = vld [vmem:[#allocation2 + $0x90] sm:$0xff]
    %v3332 = vld [vmem:[#allocation2 + $0x98] sm:$0xff]
    %v3333 = vld [vmem:[#allocation2 + $0xa0] sm:$0xff]
    %v3334 = vld [vmem:[#allocation2 + $0xa8] sm:$0xff]
    %v3335 = vld [vmem:[#allocation2 + $0xb0] sm:$0xff]
    %v3336 = vld [vmem:[#allocation2 + $0xb8] sm:$0xff]
    %v3337 = vld [vmem:[#allocation2 + $0xc0] sm:$0xff]
    %v3338 = vld [vmem:[#allocation2 + $0xc8] sm:$0xff]
    %v3339 = vld [vmem:[#allocation2 + $0xd0] sm:$0xff]
    %v3340 = vld [vmem:[#allocation2 + $0xd8] sm:$0xff]
    %v3341 = vld [vmem:[#allocation2 + $0xe0] sm:$0xff]
    %v3342 = vld [vmem:[#allocation2 + $0xe8] sm:$0xff]
    %v3343 = vld [vmem:[#allocation2 + $0xf0] sm:$0xff]
    %v3344 = vld [vmem:[#allocation2 + $0xf8] sm:$0xff]
    %v3345 = vld [vmem:[#allocation14] sm:$0xff]
    %v3346 = vld [vmem:[#allocation14 + $0x8] sm:$0xff]
    %v3347 = vld [vmem:[#allocation14 + $0x10] sm:$0xff]
    %v3348 = vld [vmem:[#allocation14 + $0x18] sm:$0xff]
    %v3349 = vld [vmem:[#allocation14 + $0x20] sm:$0xff]
    %v3350 = vld [vmem:[#allocation14 + $0x28] sm:$0xff]
    %v3351 = vld [vmem:[#allocation14 + $0x30] sm:$0xff]
    %v3352 = vld [vmem:[#allocation14 + $0x38] sm:$0xff]
    %v3353 = vld [vmem:[#allocation14 + $0x40] sm:$0xff]
    %v3354 = vld [vmem:[#allocation14 + $0x48] sm:$0xff]
    %v3355 = vld [vmem:[#allocation14 + $0x50] sm:$0xff]
    %v3356 = vld [vmem:[#allocation14 + $0x58] sm:$0xff]
    %v3357 = vld [vmem:[#allocation14 + $0x60] sm:$0xff]
    %v3358 = vld [vmem:[#allocation14 + $0x68] sm:$0xff]
    %v3359 = vld [vmem:[#allocation14 + $0x70] sm:$0xff]
    %v3360 = vld [vmem:[#allocation14 + $0x78] sm:$0xff]
    %v3361 = vld [vmem:[%s7] sm:$0x1]
    %v3363 = vlaneseq
    %v3364 = vshrl.u32 %v3363, 7
    %v3365 = vsub.s32 0, %v3364
    %v3366 = vrot.slane %v3361, %v3365
    %3368 = vmatprep.subr.mxu0 0.0
    %3369 = vmatpush1.msra.mxu0 %v3360
    %3370 = vmatprep.subr.mxu0 0.0
    %3371 = vmatpush1.msra.mxu0 %v3359
    %3372 = vmatprep.subr.mxu0 0.0
    %3373 = vmatpush1.msra.mxu0 %v3358
    %3374 = vmatprep.subr.mxu0 0.0
    %3375 = vmatpush1.msra.mxu0 %v3357
    %3376 = vmatprep.subr.mxu0 0.0
    %3377 = vmatpush1.msra.mxu0 %v3356
    %3378 = vmatprep.subr.mxu0 0.0
    %3379 = vmatpush1.msra.mxu0 %v3355
    %3380 = vmatprep.subr.mxu0 0.0
    %3381 = vmatpush1.msra.mxu0 %v3354
    %3382 = vmatprep.subr.mxu0 0.0
    %3383 = vmatpush1.msra.mxu0 %v3353
    %3384 = vmatprep.subr.mxu0 0.0
    %3385 = vmatpush1.msra.mxu0 %v3352
    %3386 = vmatprep.subr.mxu0 0.0
    %3387 = vmatpush1.msra.mxu0 %v3351
    %3388 = vmatprep.subr.mxu0 0.0
    %3389 = vmatpush1.msra.mxu0 %v3350
    %3390 = vmatprep.subr.mxu0 0.0
    %3391 = vmatpush1.msra.mxu0 %v3349
    %3392 = vmatprep.subr.mxu0 0.0
    %3393 = vmatpush1.msra.mxu0 %v3348
    %3394 = vmatprep.subr.mxu0 0.0
    %3395 = vmatpush1.msra.mxu0 %v3347
    %3396 = vmatprep.subr.mxu0 0.0
    %3397 = vmatpush1.msra.mxu0 %v3346
    %3398 = vmatprep.subr.mxu0 0.0
    %3399 = vmatpush1.msra.mxu0 %v3345
    %3400 = vmatprep.subr.mxu0 0.0
    %3401 = vmatpush2.msra.mxu0 0.0
    %3402 = vmatprep.subr.mxu0 0.0
    %3403 = vmatpush2.msra.mxu0 0.0
    %3404 = vmatprep.subr.mxu0 0.0
    %3405 = vmatpush2.msra.mxu0 0.0
    %3406 = vmatprep.subr.mxu0 0.0
    %3407 = vmatpush2.msra.mxu0 0.0
    %3408 = vmatprep.subr.mxu0 0.0
    %3409 = vmatpush2.msra.mxu0 0.0
    %3410 = vmatprep.subr.mxu0 0.0
    %3411 = vmatpush2.msra.mxu0 0.0
    %3412 = vmatprep.subr.mxu0 0.0
    %3413 = vmatpush2.msra.mxu0 0.0
    %3414 = vmatprep.subr.mxu0 0.0
    %3415 = vmatpush2.msra.mxu0 0.0
    %3416 = vmatprep.subr.mxu0 0.0
    %3417 = vmatpush2.msra.mxu0 0.0
    %3418 = vmatprep.subr.mxu0 0.0
    %3419 = vmatpush2.msra.mxu0 0.0
    %3420 = vmatprep.subr.mxu0 0.0
    %3421 = vmatpush2.msra.mxu0 0.0
    %3422 = vmatprep.subr.mxu0 0.0
    %3423 = vmatpush2.msra.mxu0 0.0
    %3424 = vmatprep.subr.mxu0 0.0
    %3425 = vmatpush2.msra.mxu0 0.0
    %3426 = vmatprep.subr.mxu0 0.0
    %3427 = vmatpush2.msra.mxu0 0.0
    %3428 = vmatprep.subr.mxu0 0.0
    %3429 = vmatpush2.msra.mxu0 0.0
    %3430 = vmatprep.subr.mxu0 0.0
    %3431 = vmatpush2.msra.mxu0 0.0
    %3432 = vmatprep.mubr.f32.mxu0 0.0
    %3433 = vmatmul.mubr.f32.gmra.mxu0 %v3313
    %v3434 = vpop.f32.mrf.mxu0
    %v3435 = vadd.f32 %v3366, %v3434
    %v3436 = vpop.f32.mrf.mxu0
    %3437 = vmatprep.mubr.f32.mxu0 0.0
    %3438 = vmatmul.mubr.f32.gmra.mxu0 %v3314
    %v3439 = vpop.f32.mrf.mxu0
    %v3440 = vadd.f32 %v3366, %v3439
    %v3441 = vpop.f32.mrf.mxu0
    %3442 = vmatprep.mubr.f32.mxu0 0.0
    %3443 = vmatmul.mubr.f32.gmra.mxu0 %v3315
    %v3444 = vpop.f32.mrf.mxu0
    %v3445 = vadd.f32 %v3366, %v3444
    %v3446 = vpop.f32.mrf.mxu0
    %3447 = vmatprep.mubr.f32.mxu0 0.0
    %3448 = vmatmul.mubr.f32.gmra.mxu0 %v3316
    %v3449 = vpop.f32.mrf.mxu0
    %v3450 = vadd.f32 %v3366, %v3449
    %v3451 = vpop.f32.mrf.mxu0
    %3452 = vmatprep.mubr.f32.mxu0 0.0
    %3453 = vmatmul.mubr.f32.gmra.mxu0 %v3317
    %v3454 = vpop.f32.mrf.mxu0
    %v3455 = vadd.f32 %v3366, %v3454
    %v3456 = vpop.f32.mrf.mxu0
    %3457 = vmatprep.mubr.f32.mxu0 0.0
    %3458 = vmatmul.mubr.f32.gmra.mxu0 %v3318
    %v3459 = vpop.f32.mrf.mxu0
    %v3460 = vadd.f32 %v3366, %v3459
    %v3461 = vpop.f32.mrf.mxu0
    %3462 = vmatprep.mubr.f32.mxu0 0.0
    %3463 = vmatmul.mubr.f32.gmra.mxu0 %v3319
    %v3464 = vpop.f32.mrf.mxu0
    %v3465 = vadd.f32 %v3366, %v3464
    %v3466 = vpop.f32.mrf.mxu0
    %3467 = vmatprep.mubr.f32.mxu0 0.0
    %3468 = vmatmul.mubr.f32.gmra.mxu0 %v3320
    %v3469 = vpop.f32.mrf.mxu0
    %v3470 = vadd.f32 %v3366, %v3469
    %v3471 = vpop.f32.mrf.mxu0
    %3472 = vmatprep.mubr.f32.mxu0 0.0
    %3473 = vmatmul.mubr.f32.gmra.mxu0 %v3321
    %v3474 = vpop.f32.mrf.mxu0
    %v3475 = vadd.f32 %v3366, %v3474
    %v3476 = vpop.f32.mrf.mxu0
    %3477 = vmatprep.mubr.f32.mxu0 0.0
    %3478 = vmatmul.mubr.f32.gmra.mxu0 %v3322
    %v3479 = vpop.f32.mrf.mxu0
    %v3480 = vadd.f32 %v3366, %v3479
    %v3481 = vpop.f32.mrf.mxu0
    %3482 = vmatprep.mubr.f32.mxu0 0.0
    %3483 = vmatmul.mubr.f32.gmra.mxu0 %v3323
    %v3484 = vpop.f32.mrf.mxu0
    %v3485 = vadd.f32 %v3366, %v3484
    %v3486 = vpop.f32.mrf.mxu0
    %3487 = vmatprep.mubr.f32.mxu0 0.0
    %3488 = vmatmul.mubr.f32.gmra.mxu0 %v3324
    %v3489 = vpop.f32.mrf.mxu0
    %v3490 = vadd.f32 %v3366, %v3489
    %v3491 = vpop.f32.mrf.mxu0
    %3492 = vmatprep.mubr.f32.mxu0 0.0
    %3493 = vmatmul.mubr.f32.gmra.mxu0 %v3325
    %v3494 = vpop.f32.mrf.mxu0
    %v3495 = vadd.f32 %v3366, %v3494
    %v3496 = vpop.f32.mrf.mxu0
    %3497 = vmatprep.mubr.f32.mxu0 0.0
    %3498 = vmatmul.mubr.f32.gmra.mxu0 %v3326
    %v3499 = vpop.f32.mrf.mxu0
    %v3500 = vadd.f32 %v3366, %v3499
    %v3501 = vpop.f32.mrf.mxu0
    %3502 = vmatprep.mubr.f32.mxu0 0.0
    %3503 = vmatmul.mubr.f32.gmra.mxu0 %v3327
    %v3504 = vpop.f32.mrf.mxu0
    %v3505 = vadd.f32 %v3366, %v3504
    %v3506 = vpop.f32.mrf.mxu0
    %3507 = vmatprep.mubr.f32.mxu0 0.0
    %3508 = vmatmul.mubr.f32.gmra.mxu0 %v3328
    %v3509 = vpop.f32.mrf.mxu0
    %v3510 = vadd.f32 %v3366, %v3509
    %v3511 = vpop.f32.mrf.mxu0
    %3512 = vmatprep.mubr.f32.mxu0 0.0
    %3513 = vmatmul.mubr.f32.gmra.mxu0 %v3329
    %v3514 = vpop.f32.mrf.mxu0
    %v3515 = vadd.f32 %v3366, %v3514
    %v3516 = vpop.f32.mrf.mxu0
    %3517 = vmatprep.mubr.f32.mxu0 0.0
    %3518 = vmatmul.mubr.f32.gmra.mxu0 %v3330
    %v3519 = vpop.f32.mrf.mxu0
    %v3520 = vadd.f32 %v3366, %v3519
    %v3521 = vpop.f32.mrf.mxu0
    %3522 = vmatprep.mubr.f32.mxu0 0.0
    %3523 = vmatmul.mubr.f32.gmra.mxu0 %v3331
    %v3524 = vpop.f32.mrf.mxu0
    %v3525 = vadd.f32 %v3366, %v3524
    %v3526 = vpop.f32.mrf.mxu0
    %3527 = vmatprep.mubr.f32.mxu0 0.0
    %3528 = vmatmul.mubr.f32.gmra.mxu0 %v3332
    %v3529 = vpop.f32.mrf.mxu0
    %v3530 = vadd.f32 %v3366, %v3529
    %v3531 = vpop.f32.mrf.mxu0
    %3532 = vmatprep.mubr.f32.mxu0 0.0
    %3533 = vmatmul.mubr.f32.gmra.mxu0 %v3333
    %v3534 = vpop.f32.mrf.mxu0
    %v3535 = vadd.f32 %v3366, %v3534
    %v3536 = vpop.f32.mrf.mxu0
    %3537 = vmatprep.mubr.f32.mxu0 0.0
    %3538 = vmatmul.mubr.f32.gmra.mxu0 %v3334
    %v3539 = vpop.f32.mrf.mxu0
    %v3540 = vadd.f32 %v3366, %v3539
    %v3541 = vpop.f32.mrf.mxu0
    %3542 = vmatprep.mubr.f32.mxu0 0.0
    %3543 = vmatmul.mubr.f32.gmra.mxu0 %v3335
    %v3544 = vpop.f32.mrf.mxu0
    %v3545 = vadd.f32 %v3366, %v3544
    %v3546 = vpop.f32.mrf.mxu0
    %3547 = vmatprep.mubr.f32.mxu0 0.0
    %3548 = vmatmul.mubr.f32.gmra.mxu0 %v3336
    %v3549 = vpop.f32.mrf.mxu0
    %v3550 = vadd.f32 %v3366, %v3549
    %v3551 = vpop.f32.mrf.mxu0
    %3552 = vmatprep.mubr.f32.mxu0 0.0
    %3553 = vmatmul.mubr.f32.gmra.mxu0 %v3337
    %v3554 = vpop.f32.mrf.mxu0
    %v3555 = vadd.f32 %v3366, %v3554
    %v3556 = vpop.f32.mrf.mxu0
    %3557 = vmatprep.mubr.f32.mxu0 0.0
    %3558 = vmatmul.mubr.f32.gmra.mxu0 %v3338
    %v3559 = vpop.f32.mrf.mxu0
    %v3560 = vadd.f32 %v3366, %v3559
    %v3561 = vpop.f32.mrf.mxu0
    %3562 = vmatprep.mubr.f32.mxu0 0.0
    %3563 = vmatmul.mubr.f32.gmra.mxu0 %v3339
    %v3564 = vpop.f32.mrf.mxu0
    %v3565 = vadd.f32 %v3366, %v3564
    %v3566 = vpop.f32.mrf.mxu0
    %3567 = vmatprep.mubr.f32.mxu0 0.0
    %3568 = vmatmul.mubr.f32.gmra.mxu0 %v3340
    %v3569 = vpop.f32.mrf.mxu0
    %v3570 = vadd.f32 %v3366, %v3569
    %v3571 = vpop.f32.mrf.mxu0
    %3572 = vmatprep.mubr.f32.mxu0 0.0
    %3573 = vmatmul.mubr.f32.gmra.mxu0 %v3341
    %v3574 = vpop.f32.mrf.mxu0
    %v3575 = vadd.f32 %v3366, %v3574
    %v3576 = vpop.f32.mrf.mxu0
    %3577 = vmatprep.mubr.f32.mxu0 0.0
    %3578 = vmatmul.mubr.f32.gmra.mxu0 %v3342
    %v3579 = vpop.f32.mrf.mxu0
    %v3580 = vadd.f32 %v3366, %v3579
    %v3581 = vpop.f32.mrf.mxu0
    %3582 = vmatprep.mubr.f32.mxu0 0.0
    %3583 = vmatmul.mubr.f32.gmra.mxu0 %v3343
    %v3584 = vpop.f32.mrf.mxu0
    %v3585 = vadd.f32 %v3366, %v3584
    %v3586 = vpop.f32.mrf.mxu0
    %3587 = vmatprep.mubr.f32.mxu0 0.0
    %3588 = vmatmul.mubr.f32.gmra.mxu0 %v3344
    %v3589 = vpop.f32.mrf.mxu0
    %v3590 = vadd.f32 %v3366, %v3589
    %v3591 = vpop.f32.mrf.mxu0
    %3592 = vdwg.mxu0
    %v3593 = vlaneseq
    %v3594 = vand.u32 %v3593, 127
    %vm3595 = vcmp.lt.s32.totalorder %v3594, 16
    %v3596 = vsel %vm3595, %v3435, -1e+30
    %v3597 = vsel %vm3595, %v3440, -1e+30
    %v3598 = vsel %vm3595, %v3445, -1e+30
    %v3599 = vsel %vm3595, %v3450, -1e+30
    %v3600 = vsel %vm3595, %v3455, -1e+30
    %v3601 = vsel %vm3595, %v3460, -1e+30
    %v3602 = vsel %vm3595, %v3465, -1e+30
    %v3603 = vsel %vm3595, %v3470, -1e+30
    %v3604 = vsel %vm3595, %v3475, -1e+30
    %v3605 = vsel %vm3595, %v3480, -1e+30
    %v3606 = vsel %vm3595, %v3485, -1e+30
    %v3607 = vsel %vm3595, %v3490, -1e+30
    %v3608 = vsel %vm3595, %v3495, -1e+30
    %v3609 = vsel %vm3595, %v3500, -1e+30
    %v3610 = vsel %vm3595, %v3505, -1e+30
    %v3611 = vsel %vm3595, %v3510, -1e+30
    %v3612 = vsel %vm3595, %v3515, -1e+30
    %v3613 = vsel %vm3595, %v3520, -1e+30
    %v3614 = vsel %vm3595, %v3525, -1e+30
    %v3615 = vsel %vm3595, %v3530, -1e+30
    %v3616 = vsel %vm3595, %v3535, -1e+30
    %v3617 = vsel %vm3595, %v3540, -1e+30
    %v3618 = vsel %vm3595, %v3545, -1e+30
    %v3619 = vsel %vm3595, %v3550, -1e+30
    %v3620 = vsel %vm3595, %v3555, -1e+30
    %v3621 = vsel %vm3595, %v3560, -1e+30
    %v3622 = vsel %vm3595, %v3565, -1e+30
    %v3623 = vsel %vm3595, %v3570, -1e+30
    %v3624 = vsel %vm3595, %v3575, -1e+30
    %v3625 = vsel %vm3595, %v3580, -1e+30
    %v3626 = vsel %vm3595, %v3585, -1e+30
    %v3627 = vsel %vm3595, %v3590, -1e+30
    %3628 = vmax.xlane.f32.xlu0 %v3596
    %v3629 = vpop.xlane.xlu0 %3628
    %3630 = vmax.xlane.f32.xlu0 %v3597
    %v3631 = vpop.xlane.xlu0 %3630
    %3632 = vmax.xlane.f32.xlu0 %v3598
    %v3633 = vpop.xlane.xlu0 %3632
    %3634 = vmax.xlane.f32.xlu0 %v3599
    %v3635 = vpop.xlane.xlu0 %3634
    %3636 = vmax.xlane.f32.xlu0 %v3600
    %v3637 = vpop.xlane.xlu0 %3636
    %3638 = vmax.xlane.f32.xlu0 %v3601
    %v3639 = vpop.xlane.xlu0 %3638
    %3640 = vmax.xlane.f32.xlu0 %v3602
    %v3641 = vpop.xlane.xlu0 %3640
    %3642 = vmax.xlane.f32.xlu0 %v3603
    %v3643 = vpop.xlane.xlu0 %3642
    %3644 = vmax.xlane.f32.xlu0 %v3604
    %v3645 = vpop.xlane.xlu0 %3644
    %3646 = vmax.xlane.f32.xlu0 %v3605
    %v3647 = vpop.xlane.xlu0 %3646
    %3648 = vmax.xlane.f32.xlu0 %v3606
    %v3649 = vpop.xlane.xlu0 %3648
    %3650 = vmax.xlane.f32.xlu0 %v3607
    %v3651 = vpop.xlane.xlu0 %3650
    %3652 = vmax.xlane.f32.xlu0 %v3608
    %v3653 = vpop.xlane.xlu0 %3652
    %3654 = vmax.xlane.f32.xlu0 %v3609
    %v3655 = vpop.xlane.xlu0 %3654
    %3656 = vmax.xlane.f32.xlu0 %v3610
    %v3657 = vpop.xlane.xlu0 %3656
    %3658 = vmax.xlane.f32.xlu0 %v3611
    %v3659 = vpop.xlane.xlu0 %3658
    %3660 = vmax.xlane.f32.xlu0 %v3612
    %v3661 = vpop.xlane.xlu0 %3660
    %3662 = vmax.xlane.f32.xlu0 %v3613
    %v3663 = vpop.xlane.xlu0 %3662
    %3664 = vmax.xlane.f32.xlu0 %v3614
    %v3665 = vpop.xlane.xlu0 %3664
    %3666 = vmax.xlane.f32.xlu0 %v3615
    %v3667 = vpop.xlane.xlu0 %3666
    %3668 = vmax.xlane.f32.xlu0 %v3616
    %v3669 = vpop.xlane.xlu0 %3668
    %3670 = vmax.xlane.f32.xlu0 %v3617
    %v3671 = vpop.xlane.xlu0 %3670
    %3672 = vmax.xlane.f32.xlu0 %v3618
    %v3673 = vpop.xlane.xlu0 %3672
    %3674 = vmax.xlane.f32.xlu0 %v3619
    %v3675 = vpop.xlane.xlu0 %3674
    %3676 = vmax.xlane.f32.xlu0 %v3620
    %v3677 = vpop.xlane.xlu0 %3676
    %3678 = vmax.xlane.f32.xlu0 %v3621
    %v3679 = vpop.xlane.xlu0 %3678
    %3680 = vmax.xlane.f32.xlu0 %v3622
    %v3681 = vpop.xlane.xlu0 %3680
    %3682 = vmax.xlane.f32.xlu0 %v3623
    %v3683 = vpop.xlane.xlu0 %3682
    %3684 = vmax.xlane.f32.xlu0 %v3624
    %v3685 = vpop.xlane.xlu0 %3684
    %3686 = vmax.xlane.f32.xlu0 %v3625
    %v3687 = vpop.xlane.xlu0 %3686
    %3688 = vmax.xlane.f32.xlu0 %v3626
    %v3689 = vpop.xlane.xlu0 %3688
    %3690 = vmax.xlane.f32.xlu0 %v3627
    %v3691 = vpop.xlane.xlu0 %3690
    %v3692 = vsub.f32 %v3596, %v3629
    %v3693 = vsub.f32 %v3597, %v3631
    %v3694 = vsub.f32 %v3598, %v3633
    %v3695 = vsub.f32 %v3599, %v3635
    %v3696 = vsub.f32 %v3600, %v3637
    %v3697 = vsub.f32 %v3601, %v3639
    %v3698 = vsub.f32 %v3602, %v3641
    %v3699 = vsub.f32 %v3603, %v3643
    %v3700 = vsub.f32 %v3604, %v3645
    %v3701 = vsub.f32 %v3605, %v3647
    %v3702 = vsub.f32 %v3606, %v3649
    %v3703 = vsub.f32 %v3607, %v3651
    %v3704 = vsub.f32 %v3608, %v3653
    %v3705 = vsub.f32 %v3609, %v3655
    %v3706 = vsub.f32 %v3610, %v3657
    %v3707 = vsub.f32 %v3611, %v3659
    %v3708 = vsub.f32 %v3612, %v3661
    %v3709 = vsub.f32 %v3613, %v3663
    %v3710 = vsub.f32 %v3614, %v3665
    %v3711 = vsub.f32 %v3615, %v3667
    %v3712 = vsub.f32 %v3616, %v3669
    %v3713 = vsub.f32 %v3617, %v3671
    %v3714 = vsub.f32 %v3618, %v3673
    %v3715 = vsub.f32 %v3619, %v3675
    %v3716 = vsub.f32 %v3620, %v3677
    %v3717 = vsub.f32 %v3621, %v3679
    %v3718 = vsub.f32 %v3622, %v3681
    %v3719 = vsub.f32 %v3623, %v3683
    %v3720 = vsub.f32 %v3624, %v3685
    %v3721 = vsub.f32 %v3625, %v3687
    %v3722 = vsub.f32 %v3626, %v3689
    %v3723 = vsub.f32 %v3627, %v3691
    %v3724 = vmul.f32 %v3692, 1.442695
    %v3725 = vpow.pop %v3724
    %v3726 = vmul.f32 %v3693, 1.442695
    %v3727 = vpow.pop %v3726
    %v3728 = vmul.f32 %v3694, 1.442695
    %v3729 = vpow.pop %v3728
    %v3730 = vmul.f32 %v3695, 1.442695
    %v3731 = vpow.pop %v3730
    %v3732 = vmul.f32 %v3696, 1.442695
    %v3733 = vpow.pop %v3732
    %v3734 = vmul.f32 %v3697, 1.442695
    %v3735 = vpow.pop %v3734
    %v3736 = vmul.f32 %v3698, 1.442695
    %v3737 = vpow.pop %v3736
    %v3738 = vmul.f32 %v3699, 1.442695
    %v3739 = vpow.pop %v3738
    %v3740 = vmul.f32 %v3700, 1.442695
    %v3741 = vpow.pop %v3740
    %v3742 = vmul.f32 %v3701, 1.442695
    %v3743 = vpow.pop %v3742
    %v3744 = vmul.f32 %v3702, 1.442695
    %v3745 = vpow.pop %v3744
    %v3746 = vmul.f32 %v3703, 1.442695
    %v3747 = vpow.pop %v3746
    %v3748 = vmul.f32 %v3704, 1.442695
    %v3749 = vpow.pop %v3748
    %v3750 = vmul.f32 %v3705, 1.442695
    %v3751 = vpow.pop %v3750
    %v3752 = vmul.f32 %v3706, 1.442695
    %v3753 = vpow.pop %v3752
    %v3754 = vmul.f32 %v3707, 1.442695
    %v3755 = vpow.pop %v3754
    %v3756 = vmul.f32 %v3708, 1.442695
    %v3757 = vpow.pop %v3756
    %v3758 = vmul.f32 %v3709, 1.442695
    %v3759 = vpow.pop %v3758
    %v3760 = vmul.f32 %v3710, 1.442695
    %v3761 = vpow.pop %v3760
    %v3762 = vmul.f32 %v3711, 1.442695
    %v3763 = vpow.pop %v3762
    %v3764 = vmul.f32 %v3712, 1.442695
    %v3765 = vpow.pop %v3764
    %v3766 = vmul.f32 %v3713, 1.442695
    %v3767 = vpow.pop %v3766
    %v3768 = vmul.f32 %v3714, 1.442695
    %v3769 = vpow.pop %v3768
    %v3770 = vmul.f32 %v3715, 1.442695
    %v3771 = vpow.pop %v3770
    %v3772 = vmul.f32 %v3716, 1.442695
    %v3773 = vpow.pop %v3772
    %v3774 = vmul.f32 %v3717, 1.442695
    %v3775 = vpow.pop %v3774
    %v3776 = vmul.f32 %v3718, 1.442695
    %v3777 = vpow.pop %v3776
    %v3778 = vmul.f32 %v3719, 1.442695
    %v3779 = vpow.pop %v3778
    %v3780 = vmul.f32 %v3720, 1.442695
    %v3781 = vpow.pop %v3780
    %v3782 = vmul.f32 %v3721, 1.442695
    %v3783 = vpow.pop %v3782
    %v3784 = vmul.f32 %v3722, 1.442695
    %v3785 = vpow.pop %v3784
    %v3786 = vmul.f32 %v3723, 1.442695
    %v3787 = vpow.pop %v3786
    %3788 = vadd.xlane.f32.xlu0 %v3725
    %v3789 = vpop.xlane.xlu0 %3788
    %3790 = vadd.xlane.f32.xlu0 %v3727
    %v3791 = vpop.xlane.xlu0 %3790
    %3792 = vadd.xlane.f32.xlu0 %v3729
    %v3793 = vpop.xlane.xlu0 %3792
    %3794 = vadd.xlane.f32.xlu0 %v3731
    %v3795 = vpop.xlane.xlu0 %3794
    %3796 = vadd.xlane.f32.xlu0 %v3733
    %v3797 = vpop.xlane.xlu0 %3796
    %3798 = vadd.xlane.f32.xlu0 %v3735
    %v3799 = vpop.xlane.xlu0 %3798
    %3800 = vadd.xlane.f32.xlu0 %v3737
    %v3801 = vpop.xlane.xlu0 %3800
    %3802 = vadd.xlane.f32.xlu0 %v3739
    %v3803 = vpop.xlane.xlu0 %3802
    %3804 = vadd.xlane.f32.xlu0 %v3741
    %v3805 = vpop.xlane.xlu0 %3804
    %3806 = vadd.xlane.f32.xlu0 %v3743
    %v3807 = vpop.xlane.xlu0 %3806
    %3808 = vadd.xlane.f32.xlu0 %v3745
    %v3809 = vpop.xlane.xlu0 %3808
    %3810 = vadd.xlane.f32.xlu0 %v3747
    %v3811 = vpop.xlane.xlu0 %3810
    %3812 = vadd.xlane.f32.xlu0 %v3749
    %v3813 = vpop.xlane.xlu0 %3812
    %3814 = vadd.xlane.f32.xlu0 %v3751
    %v3815 = vpop.xlane.xlu0 %3814
    %3816 = vadd.xlane.f32.xlu0 %v3753
    %v3817 = vpop.xlane.xlu0 %3816
    %3818 = vadd.xlane.f32.xlu0 %v3755
    %v3819 = vpop.xlane.xlu0 %3818
    %3820 = vadd.xlane.f32.xlu0 %v3757
    %v3821 = vpop.xlane.xlu0 %3820
    %3822 = vadd.xlane.f32.xlu0 %v3759
    %v3823 = vpop.xlane.xlu0 %3822
    %3824 = vadd.xlane.f32.xlu0 %v3761
    %v3825 = vpop.xlane.xlu0 %3824
    %3826 = vadd.xlane.f32.xlu0 %v3763
    %v3827 = vpop.xlane.xlu0 %3826
    %3828 = vadd.xlane.f32.xlu0 %v3765
    %v3829 = vpop.xlane.xlu0 %3828
    %3830 = vadd.xlane.f32.xlu0 %v3767
    %v3831 = vpop.xlane.xlu0 %3830
    %3832 = vadd.xlane.f32.xlu0 %v3769
    %v3833 = vpop.xlane.xlu0 %3832
    %3834 = vadd.xlane.f32.xlu0 %v3771
    %v3835 = vpop.xlane.xlu0 %3834
    %3836 = vadd.xlane.f32.xlu0 %v3773
    %v3837 = vpop.xlane.xlu0 %3836
    %3838 = vadd.xlane.f32.xlu0 %v3775
    %v3839 = vpop.xlane.xlu0 %3838
    %3840 = vadd.xlane.f32.xlu0 %v3777
    %v3841 = vpop.xlane.xlu0 %3840
    %3842 = vadd.xlane.f32.xlu0 %v3779
    %v3843 = vpop.xlane.xlu0 %3842
    %3844 = vadd.xlane.f32.xlu0 %v3781
    %v3845 = vpop.xlane.xlu0 %3844
    %3846 = vadd.xlane.f32.xlu0 %v3783
    %v3847 = vpop.xlane.xlu0 %3846
    %3848 = vadd.xlane.f32.xlu0 %v3785
    %v3849 = vpop.xlane.xlu0 %3848
    %3850 = vadd.xlane.f32.xlu0 %v3787
    %v3851 = vpop.xlane.xlu0 %3850
    %v3852 = vlog2.pop %v3789
    %v3853 = vmul.f32 %v3852, 0.6931472
    %v3854 = vlog2.pop %v3791
    %v3855 = vmul.f32 %v3854, 0.6931472
    %v3856 = vlog2.pop %v3793
    %v3857 = vmul.f32 %v3856, 0.6931472
    %v3858 = vlog2.pop %v3795
    %v3859 = vmul.f32 %v3858, 0.6931472
    %v3860 = vlog2.pop %v3797
    %v3861 = vmul.f32 %v3860, 0.6931472
    %v3862 = vlog2.pop %v3799
    %v3863 = vmul.f32 %v3862, 0.6931472
    %v3864 = vlog2.pop %v3801
    %v3865 = vmul.f32 %v3864, 0.6931472
    %v3866 = vlog2.pop %v3803
    %v3867 = vmul.f32 %v3866, 0.6931472
    %v3868 = vlog2.pop %v3805
    %v3869 = vmul.f32 %v3868, 0.6931472
    %v3870 = vlog2.pop %v3807
    %v3871 = vmul.f32 %v3870, 0.6931472
    %v3872 = vlog2.pop %v3809
    %v3873 = vmul.f32 %v3872, 0.6931472
    %v3874 = vlog2.pop %v3811
    %v3875 = vmul.f32 %v3874, 0.6931472
    %v3876 = vlog2.pop %v3813
    %v3877 = vmul.f32 %v3876, 0.6931472
    %v3878 = vlog2.pop %v3815
    %v3879 = vmul.f32 %v3878, 0.6931472
    %v3880 = vlog2.pop %v3817
    %v3881 = vmul.f32 %v3880, 0.6931472
    %v3882 = vlog2.pop %v3819
    %v3883 = vmul.f32 %v3882, 0.6931472
    %v3884 = vlog2.pop %v3821
    %v3885 = vmul.f32 %v3884, 0.6931472
    %v3886 = vlog2.pop %v3823
    %v3887 = vmul.f32 %v3886, 0.6931472
    %v3888 = vlog2.pop %v3825
    %v3889 = vmul.f32 %v3888, 0.6931472
    %v3890 = vlog2.pop %v3827
    %v3891 = vmul.f32 %v3890, 0.6931472
    %v3892 = vlog2.pop %v3829
    %v3893 = vmul.f32 %v3892, 0.6931472
    %v3894 = vlog2.pop %v3831
    %v3895 = vmul.f32 %v3894, 0.6931472
    %v3896 = vlog2.pop %v3833
    %v3897 = vmul.f32 %v3896, 0.6931472
    %v3898 = vlog2.pop %v3835
    %v3899 = vmul.f32 %v3898, 0.6931472
    %v3900 = vlog2.pop %v3837
    %v3901 = vmul.f32 %v3900, 0.6931472
    %v3902 = vlog2.pop %v3839
    %v3903 = vmul.f32 %v3902, 0.6931472
    %v3904 = vlog2.pop %v3841
    %v3905 = vmul.f32 %v3904, 0.6931472
    %v3906 = vlog2.pop %v3843
    %v3907 = vmul.f32 %v3906, 0.6931472
    %v3908 = vlog2.pop %v3845
    %v3909 = vmul.f32 %v3908, 0.6931472
    %v3910 = vlog2.pop %v3847
    %v3911 = vmul.f32 %v3910, 0.6931472
    %v3912 = vlog2.pop %v3849
    %v3913 = vmul.f32 %v3912, 0.6931472
    %v3914 = vlog2.pop %v3851
    %v3915 = vmul.f32 %v3914, 0.6931472
    %v3916 = vsub.f32 %v3692, %v3853
    %v3917 = vsub.f32 %v3693, %v3855
    %v3918 = vsub.f32 %v3694, %v3857
    %v3919 = vsub.f32 %v3695, %v3859
    %v3920 = vsub.f32 %v3696, %v3861
    %v3921 = vsub.f32 %v3697, %v3863
    %v3922 = vsub.f32 %v3698, %v3865
    %v3923 = vsub.f32 %v3699, %v3867
    %v3924 = vsub.f32 %v3700, %v3869
    %v3925 = vsub.f32 %v3701, %v3871
    %v3926 = vsub.f32 %v3702, %v3873
    %v3927 = vsub.f32 %v3703, %v3875
    %v3928 = vsub.f32 %v3704, %v3877
    %v3929 = vsub.f32 %v3705, %v3879
    %v3930 = vsub.f32 %v3706, %v3881
    %v3931 = vsub.f32 %v3707, %v3883
    %v3932 = vsub.f32 %v3708, %v3885
    %v3933 = vsub.f32 %v3709, %v3887
    %v3934 = vsub.f32 %v3710, %v3889
    %v3935 = vsub.f32 %v3711, %v3891
    %v3936 = vsub.f32 %v3712, %v3893
    %v3937 = vsub.f32 %v3713, %v3895
    %v3938 = vsub.f32 %v3714, %v3897
    %v3939 = vsub.f32 %v3715, %v3899
    %v3940 = vsub.f32 %v3716, %v3901
    %v3941 = vsub.f32 %v3717, %v3903
    %v3942 = vsub.f32 %v3718, %v3905
    %v3943 = vsub.f32 %v3719, %v3907
    %v3944 = vsub.f32 %v3720, %v3909
    %v3945 = vsub.f32 %v3721, %v3911
    %v3946 = vsub.f32 %v3722, %v3913
    %v3947 = vsub.f32 %v3723, %v3915
    %3948 = vst [vmem:[#allocation16] sm:$0xff] %v3916
    %3949 = vst [vmem:[#allocation16 + $0x8] sm:$0xff] %v3917
    %3950 = vst [vmem:[#allocation16 + $0x10] sm:$0xff] %v3918
    %3951 = vst [vmem:[#allocation16 + $0x18] sm:$0xff] %v3919
    %3952 = vst [vmem:[#allocation16 + $0x20] sm:$0xff] %v3920
    %3953 = vst [vmem:[#allocation16 + $0x28] sm:$0xff] %v3921
    %3954 = vst [vmem:[#allocation16 + $0x30] sm:$0xff] %v3922
    %3955 = vst [vmem:[#allocation16 + $0x38] sm:$0xff] %v3923
    %3956 = vst [vmem:[#allocation16 + $0x40] sm:$0xff] %v3924
    %3957 = vst [vmem:[#allocation16 + $0x48] sm:$0xff] %v3925
    %3958 = vst [vmem:[#allocation16 + $0x50] sm:$0xff] %v3926
    %3959 = vst [vmem:[#allocation16 + $0x58] sm:$0xff] %v3927
    %3960 = vst [vmem:[#allocation16 + $0x60] sm:$0xff] %v3928
    %3961 = vst [vmem:[#allocation16 + $0x68] sm:$0xff] %v3929
    %3962 = vst [vmem:[#allocation16 + $0x70] sm:$0xff] %v3930
    %3963 = vst [vmem:[#allocation16 + $0x78] sm:$0xff] %v3931
    %3964 = vst [vmem:[#allocation16 + $0x80] sm:$0xff] %v3932
    %3965 = vst [vmem:[#allocation16 + $0x88] sm:$0xff] %v3933
    %3966 = vst [vmem:[#allocation16 + $0x90] sm:$0xff] %v3934
    %3967 = vst [vmem:[#allocation16 + $0x98] sm:$0xff] %v3935
    %3968 = vst [vmem:[#allocation16 + $0xa0] sm:$0xff] %v3936
    %3969 = vst [vmem:[#allocation16 + $0xa8] sm:$0xff] %v3937
    %3970 = vst [vmem:[#allocation16 + $0xb0] sm:$0xff] %v3938
    %3971 = vst [vmem:[#allocation16 + $0xb8] sm:$0xff] %v3939
    %3972 = vst [vmem:[#allocation16 + $0xc0] sm:$0xff] %v3940
    %3973 = vst [vmem:[#allocation16 + $0xc8] sm:$0xff] %v3941
    %3974 = vst [vmem:[#allocation16 + $0xd0] sm:$0xff] %v3942
    %3975 = vst [vmem:[#allocation16 + $0xd8] sm:$0xff] %v3943
    %3976 = vst [vmem:[#allocation16 + $0xe0] sm:$0xff] %v3944
    %3977 = vst [vmem:[#allocation16 + $0xe8] sm:$0xff] %v3945
    %3978 = vst [vmem:[#allocation16 + $0xf0] sm:$0xff] %v3946
    %3979 = vst [vmem:[#allocation16 + $0xf8] sm:$0xff] %v3947
    // Predicated region
    $region58: #{tpu_custom_call.1} parent=1 // pred_check
      _
    $region59: #{tpu_custom_call.1} parent=1 // pred_check_branch
      %3981 = sbr.rel (0) target = $region61
    $region60: #{tpu_custom_call.1} parent=1 // pred_region
      %s3983 = ssub.s32 4096, 4096
      %3984 = vsyncadd [#allocation7], %s3983
      %s3985 = sshll.u32 [#allocation16], 4
      %s3986 = int_to_ptr.vmem [resolvable:$true] %s3985
      %3991 = dma.vmem_to_hbm [thread:$0]  %s3986, 4096, %s8, [#allocation7], 128, 128, 8
    $region61: #{tpu_custom_call.1} parent=1 // pred_fallthru
      _
    // Predicated region
    $region62: #{tpu_custom_call.1} parent=1 // pred_check
      _
    $region63: #{tpu_custom_call.1} parent=1 // pred_check_branch
      %3993 = sbr.rel (0) target = $region65
    $region64: #{tpu_custom_call.1} parent=1 // pred_region
      %3994 = dma.done [#allocation7], 4096
    $region65: #{tpu_custom_call.1} parent=1 // pred_fallthru
      _
    %3995 = vsyncpa [#allocation6], 1
    %3996 = vsyncpa [#allocation9], 1
    %3997 = vsyncpa [#allocation12], 1
    %3998 = vsyncpa [#allocation15], 1
    %3999 = vsyncpa [#allocation7], 1

</llo_original>
